<compile_context>
chip_gen: v5e
topology: v5e:2x2
jax: 0.10.0
libtpu: 0.0.40
codegen_flags: <defaults>
</compile_context>

<pallas_src>
import jax
import jax.numpy as jnp
from jax import lax
from jax.experimental import pallas as pl
from jax.experimental.pallas import tpu as pltpu

N_HEADS = 5          # real heads in the module
N_HEADS_PAD = 8      # padded head axis for the small [*, 5] projections only
BN_EPS = 1e-5


def _gate_pretrain_kernel(
    sql_ref, plan_ref, log_ref, time_ref,
    bn_scale_ref, bn_shift_ref,
    w_sql_last_ref, b_sql_last_ref,
    w_sql_fused_ref, b_sql_fused_ref,
    w_plan_fused_ref, b_plan_fused_ref,
    w_time_fused_ref, b_time_fused_ref,
    w_common_fused_ref,
    w_glog_ref, b_glog_ref,
    w_lab_heads_ref, w_opt_heads_ref,
    b_lab_ref, b_opt_ref,
    out_ref,
):
    f32 = jnp.float32
    bf16 = jnp.bfloat16
    tb, s_sql, hid = sql_ref.shape
    _, s_plan, emb = plan_ref.shape
    nh = w_lab_heads_ref.shape[0]          # 5 real heads
    nhp = b_lab_ref.shape[1]               # 8 padded heads

    def mm(a, b):
        return jnp.dot(a, b, preferred_element_type=f32)

    # ---- sql path: Linear(768 -> E) token-wise, then fused [gate|lab|opt] projection ----
    sql2d = sql_ref[...].reshape(tb * s_sql, hid).astype(bf16)      # cast in-kernel, no HBM copy
    sql_emb = mm(sql2d, w_sql_last_ref[...]) + b_sql_last_ref[...]              # [tb*S, E] f32
    sql_proj = mm(sql_emb.astype(bf16), w_sql_fused_ref[...]) + b_sql_fused_ref[...]  # [tb*S, 3*nhp]
    g_sql = jax.nn.sigmoid(sql_proj[:, :nhp])
    term_s_l = jnp.mean((g_sql * sql_proj[:, nhp:2 * nhp]).reshape(tb, s_sql, nhp), axis=1)
    term_s_o = jnp.mean((g_sql * sql_proj[:, 2 * nhp:3 * nhp]).reshape(tb, s_sql, nhp), axis=1)
    sql_mean = jnp.mean(sql_emb.reshape(tb, s_sql, emb), axis=1)                # [tb, E]

    # ---- plan path (single load reused for both the bf16 matmul and the f32 mean) ----
    plan_f = plan_ref[...].astype(f32)                                          # [tb, Sp, E]
    plan_proj = (mm(plan_f.reshape(tb * s_plan, emb).astype(bf16), w_plan_fused_ref[...])
                 + b_plan_fused_ref[...])                                       # [tb*Sp, 3*nhp]
    g_plan = jax.nn.sigmoid(plan_proj[:, :nhp])
    term_p_l = jnp.mean((g_plan * plan_proj[:, nhp:2 * nhp]).reshape(tb, s_plan, nhp), axis=1)
    term_p_o = jnp.mean((g_plan * plan_proj[:, 2 * nhp:3 * nhp]).reshape(tb, s_plan, nhp), axis=1)
    plan_mean = jnp.mean(plan_f, axis=1)                                        # [tb, E]

    # ---- log path: relu + BatchNorm1d (batch stats folded into scale/shift) ----
    log_emb = (jnp.maximum(log_ref[...].astype(f32), 0.0) * bn_scale_ref[...]
               + bn_shift_ref[...])                                             # [tb, E]
    g_logf = jax.nn.sigmoid(mm(log_emb.astype(bf16), w_glog_ref[...]) + b_glog_ref[...])  # [tb, nh*E]
    # gated-log per-head Linear(E,1): elementwise gate * log * per-head weight, lane-reduce.
    gated_log = g_logf.reshape(tb, nh, emb) * log_emb.reshape(tb, 1, emb)       # [tb, nh, E]
    log_wl = jnp.sum(gated_log * w_lab_heads_ref[...].reshape(1, nh, emb), axis=-1)   # [tb, nh]
    log_wo = jnp.sum(gated_log * w_opt_heads_ref[...].reshape(1, nh, emb), axis=-1)
    head_pad = jnp.zeros((tb, nhp - nh), f32)
    log_wl = jnp.concatenate([log_wl, head_pad], axis=1)                        # [tb, nhp]
    log_wo = jnp.concatenate([log_wo, head_pad], axis=1)

    # ---- time / metrics path ----
    time_f = time_ref[...].astype(f32)
    time_proj = mm(time_f.astype(bf16), w_time_fused_ref[...]) + b_time_fused_ref[...]  # [tb, 3*nhp]
    g_met = jax.nn.sigmoid(time_proj[:, :nhp])
    term_t_l = g_met * time_proj[:, nhp:2 * nhp]
    term_t_o = g_met * time_proj[:, 2 * nhp:3 * nhp]

    # ---- common_cross_model stand-in: mean fusion of the 4 modalities ----
    # TODO(synk): common_cross_model / rootcause_cross_model are external constructor-arg
    # nn.Modules (not defined in the reference file); replaced by a mean-fusion stand-in.
    common = (sql_mean + plan_mean + log_emb + time_f) * 0.25                   # [tb, E]
    common_proj = mm(common.astype(bf16), w_common_fused_ref[...])              # [tb, 2*nhp]

    lab = jax.nn.sigmoid(common_proj[:, :nhp]
                         + 0.25 * (term_s_l + term_p_l + log_wl + term_t_l)
                         + b_lab_ref[...])
    opt = (common_proj[:, nhp:2 * nhp]
           + 0.25 * (term_s_o + term_p_o + log_wo + term_t_o)
           + b_opt_ref[...])
    out_ref[...] = jnp.concatenate([lab, opt], axis=1)                          # [tb, 2*nhp]


def _prepare_weights(params, emb):
    """Pad the small 5-wide heads to 8, fuse per-modality projections, cast matmul weights to bf16."""
    nh, nhp = N_HEADS, N_HEADS_PAD
    f32, bf16 = jnp.float32, jnp.bfloat16

    def pad_heads(w):                       # pad last dim 5 -> 8 with zeros
        return jnp.pad(w.astype(f32), ((0, 0), (0, nhp - w.shape[1])))

    w_lab_t = pad_heads(jnp.transpose(params["w_pred_label"]))      # [E, 8]
    w_opt_t = pad_heads(jnp.transpose(params["w_pred_opt"]))        # [E, 8]
    zero_b = jnp.zeros((1, nhp), f32)

    def fused(gate_w_key, gate_b_key):
        w = jnp.concatenate([pad_heads(params[gate_w_key]), w_lab_t, w_opt_t], axis=1)   # [E, 24]
        b = jnp.concatenate([pad_heads(params[gate_b_key]), zero_b, zero_b], axis=1)     # [1, 24]
        return w.astype(bf16), b.astype(f32)

    w_sql_fused, b_sql_fused = fused("w_gate_sql", "b_gate_sql")
    w_plan_fused, b_plan_fused = fused("w_gate_plan", "b_gate_plan")
    w_time_fused, b_time_fused = fused("w_gate_met", "b_gate_met")
    w_common_fused = jnp.concatenate([w_lab_t, w_opt_t], axis=1).astype(bf16)   # [E, 16]

    return (
        params["w_sql_last"].astype(bf16),          # [768, E]
        params["b_sql_last"].astype(f32),           # [1, E]
        w_sql_fused, b_sql_fused,
        w_plan_fused, b_plan_fused,
        w_time_fused, b_time_fused,
        w_common_fused,
        params["w_gate_log"].astype(bf16),          # [E, 5E]  (NOT head-padded)
        params["b_gate_log"].astype(f32),           # [1, 5E]
        params["w_pred_label"].astype(f32),         # [5, E]   per-head weights for the log path
        params["w_pred_opt"].astype(f32),           # [5, E]
        pad_heads(params["b_pred_label"]),          # [1, 8]
        pad_heads(params["b_pred_opt"]),            # [1, 8]
    )


def _const_index_map(nd):
    return lambda i: (0,) * nd


def gate_com_diff_pretrain_forward(sql_hidden, plan_emb, log_feat, time_emb, params,
                                   *, batch_tile=None):
    B, s_sql, hid = sql_hidden.shape
    _, s_plan, emb = plan_emb.shape
    nh, nhp = N_HEADS, N_HEADS_PAD

    # BatchNorm1d(E) training-mode batch statistics over relu(log), computed once on the
    # full (unpadded) batch so the kernel can be batch-tiled and pipelined freely.
    log_relu = jnp.maximum(log_feat.astype(jnp.float32), 0.0)
    mu = jnp.mean(log_relu, axis=0, keepdims=True)
    var = jnp.mean(jnp.square(log_relu - mu), axis=0, keepdims=True)
    bn_scale = params["bn_gamma"].astype(jnp.float32) * lax.rsqrt(var + BN_EPS)
    bn_shift = params["bn_beta"].astype(jnp.float32) - mu * bn_scale

    weights = _prepare_weights(params, emb)
    const_arrays = (bn_scale, bn_shift) + weights

    def vmem_bytes(tb):
        # double-buffered activation tiles (producer dtype) + output slab
        rs, rp = tb * s_sql, tb * s_plan
        io = 2 * (rs * hid * sql_hidden.dtype.itemsize
                  + rp * emb * plan_emb.dtype.itemsize
                  + tb * emb * (log_feat.dtype.itemsize + time_emb.dtype.itemsize)
                  + tb * 2 * nhp * 4)
        # single-buffered resident weights
        wb = sum(int(w.size) * w.dtype.itemsize for w in const_arrays)
        # in-kernel intermediates (sql2d bf16, sql_emb f32+bf16, projections, plan f32+bf16,
        # g_logf / gated_log, log/time/common temporaries)
        inter = (rs * hid * 2 + rs * emb * 6 + rs * 3 * nhp * 8
                 + rp * emb * 6 + rp * 3 * nhp * 8
                 + tb * nh * emb * 8 + tb * emb * 24)
        return io + wb + inter

    # ---- batch-tile selection ----
    if batch_tile is not None:
        tb = int(batch_tile)
    else:
        # target ~1024 sql rows per grid step (amortizes the ~0.35us/step overhead on
        # v5e/v6e), shrunk to a conservative VMEM budget valid for v7x's 64 MiB.
        tb = -(-1024 // max(1, s_sql))
        tb = max(8, ((tb + 7) // 8) * 8)
        budget = 40 << 20
        while tb > 8 and vmem_bytes(tb) > budget:
            tb -= 8
        if tb >= B and B > 8:
            # guarantee >=2 grid steps so both v7x TensorCores get work
            tb = ((-(-B // 2)) + 7) // 8 * 8
    tb = min(tb, B)
    if tb < B:
        tb = max(8, (tb // 8) * 8)          # multi-step tiles must be 8-row aligned
        if tb >= B:
            tb = B

    grid = (pl.cdiv(B, tb),)                # ragged last tile handled by Pallas (no input pad)

    act_specs = [
        pl.BlockSpec((tb, s_sql, hid), lambda i: (i, 0, 0)),
        pl.BlockSpec((tb, s_plan, emb), lambda i: (i, 0, 0)),
        pl.BlockSpec((tb, emb), lambda i: (i, 0)),
        pl.BlockSpec((tb, emb), lambda i: (i, 0)),
    ]
    out_spec = pl.BlockSpec((tb, 2 * nhp), lambda i: (i, 0))
    out_shape = jax.ShapeDtypeStruct((B, 2 * nhp), jnp.float32)

    vmem_limit = int(min(48 << 20, max(16 << 20, vmem_bytes(tb) + (8 << 20))))

    def run(single_buffer_weights):
        if single_buffer_weights:
            const_specs = [
                pl.BlockSpec(a.shape, _const_index_map(a.ndim),
                             pipeline_mode=pl.Buffered(buffer_count=1))
                for a in const_arrays]
        else:
            const_specs = [pl.BlockSpec(a.shape, _const_index_map(a.ndim))
                           for a in const_arrays]
        return pl.pallas_call(
            _gate_pretrain_kernel,
            grid=grid,
            in_specs=act_specs + const_specs,
            out_specs=out_spec,
            out_shape=out_shape,
            compiler_params=pltpu.CompilerParams(
                dimension_semantics=("parallel",),
                vmem_limit_bytes=vmem_limit),
        )(sql_hidden, plan_emb, log_feat, time_emb, *const_arrays)

    try:
        out = run(True)     # single-buffer the constant-index weights (saves VMEM on v7x/v5e)
    except Exception:
        out = run(False)    # fallback if this jax version rejects pipeline_mode=Buffered(1)

    # split the [B, 16] slab into the 5-wide label / opt outputs
    return out[:, :nh], out[:, nhp:nhp + nh]


def init_params(key, emb_dim, hidden=768):
    """Deterministic xavier-uniform style parameter init (synthetic weights)."""
    glorot = jax.nn.initializers.glorot_uniform()
    ks = jax.random.split(key, 16)

    def bias(k, shape):
        return jax.random.uniform(k, shape, jnp.float32, -0.1, 0.1)

    E = emb_dim
    return {
        "w_sql_last": glorot(ks[0], (hidden, E), jnp.float32),
        "b_sql_last": bias(ks[1], (1, E)),
        "bn_gamma": jnp.ones((1, E), jnp.float32),
        "bn_beta": jnp.zeros((1, E), jnp.float32),
        # 5 gate heads, stacked along the output axis
        "w_gate_sql": glorot(ks[2], (E, N_HEADS), jnp.float32),
        "b_gate_sql": bias(ks[3], (1, N_HEADS)),
        "w_gate_plan": glorot(ks[4], (E, N_HEADS), jnp.float32),
        "b_gate_plan": bias(ks[5], (1, N_HEADS)),
        "w_gate_log": glorot(ks[6], (E, N_HEADS * E), jnp.float32),
        "b_gate_log": bias(ks[7], (1, N_HEADS * E)),
        "w_gate_met": glorot(ks[8], (E, N_HEADS), jnp.float32),
        "b_gate_met": bias(ks[9], (1, N_HEADS)),
        # 5 prediction heads (Linear(E, 1) each), stacked along the head axis
        "w_pred_label": glorot(ks[10], (N_HEADS, E), jnp.float32),
        "b_pred_label": bias(ks[11], (1, N_HEADS)),
        "w_pred_opt": glorot(ks[12], (N_HEADS, E), jnp.float32),
        "b_pred_opt": bias(ks[13], (1, N_HEADS)),
    }


if __name__ == "__main__":
    key = jax.random.PRNGKey(0)
    B, S_SQL, S_PLAN, EMB, HID = 2, 8, 8, 32, 768
    k0, k1, k2, k3, kp = jax.random.split(key, 5)

    # Stand-in outputs of the external encoder modules (sql/plan/log/time models),
    # fed to the kernel in their producer dtype (f32) -- no wrapper-side cast/pad.
    sql_hidden = jax.random.normal(k0, (B, S_SQL, HID), jnp.float32)
    plan_emb = jax.random.normal(k1, (B, S_PLAN, EMB), jnp.float32)
    log_feat = jax.random.normal(k2, (B, EMB), jnp.float32)
    time_emb = jax.random.normal(k3, (B, EMB), jnp.float32)

    params = init_params(kp, EMB, HID)

    pred_label, pred_opt = gate_com_diff_pretrain_forward(
        sql_hidden, plan_emb, log_feat, time_emb, params)
    jax.block_until_ready((pred_label, pred_opt))

    assert pred_label.shape == (B, N_HEADS)
    assert pred_opt.shape == (B, N_HEADS)
    assert bool(jnp.all(jnp.isfinite(pred_label))) and bool(jnp.all(jnp.isfinite(pred_opt)))
    assert bool(jnp.all((pred_label >= 0.0) & (pred_label <= 1.0)))
    print("KERNEL_OK")
</pallas_src>

<mosaic_0001>
module attributes {stable_mosaic.version = 11 : i64} {
  func.func @_gate_pretrain_kernel(%arg0: i32, %arg1: memref<2x8x768xf32, #tpu.memory_space<vmem>>, %arg2: memref<2x8x32xf32, #tpu.memory_space<vmem>>, %arg3: memref<2x32xf32, #tpu.memory_space<vmem>>, %arg4: memref<2x32xf32, #tpu.memory_space<vmem>>, %arg5: memref<1x32xf32, #tpu.memory_space<vmem>>, %arg6: memref<1x32xf32, #tpu.memory_space<vmem>>, %arg7: memref<768x32xbf16, #tpu.memory_space<vmem>>, %arg8: memref<1x32xf32, #tpu.memory_space<vmem>>, %arg9: memref<32x24xbf16, #tpu.memory_space<vmem>>, %arg10: memref<1x24xf32, #tpu.memory_space<vmem>>, %arg11: memref<32x24xbf16, #tpu.memory_space<vmem>>, %arg12: memref<1x24xf32, #tpu.memory_space<vmem>>, %arg13: memref<32x24xbf16, #tpu.memory_space<vmem>>, %arg14: memref<1x24xf32, #tpu.memory_space<vmem>>, %arg15: memref<32x16xbf16, #tpu.memory_space<vmem>>, %arg16: memref<32x160xbf16, #tpu.memory_space<vmem>>, %arg17: memref<1x160xf32, #tpu.memory_space<vmem>>, %arg18: memref<5x32xf32, #tpu.memory_space<vmem>>, %arg19: memref<5x32xf32, #tpu.memory_space<vmem>>, %arg20: memref<1x8xf32, #tpu.memory_space<vmem>>, %arg21: memref<1x8xf32, #tpu.memory_space<vmem>>, %arg22: memref<2x16xf32, #tpu.memory_space<vmem>>) attributes {dimension_semantics = [#tpu.dimension_semantics<parallel>], iteration_bounds = array<i64: 1>, scalar_prefetch = 0 : i64, scratch_operands = 0 : i64, tpu.core_type = #tpu.core_type<tc>, window_params = [{transform_indices = @transform_0, window_bounds = array<i64: 2, 8, 768>}, {transform_indices = @transform_1, window_bounds = array<i64: 2, 8, 32>}, {transform_indices = @transform_2, window_bounds = array<i64: 2, 32>}, {transform_indices = @transform_3, window_bounds = array<i64: 2, 32>}, {pipeline_mode = #tpu.pipeline_mode<synchronous>, transform_indices = @transform_4, window_bounds = array<i64: 1, 32>}, {pipeline_mode = #tpu.pipeline_mode<synchronous>, transform_indices = @transform_5, window_bounds = array<i64: 1, 32>}, {pipeline_mode = #tpu.pipeline_mode<synchronous>, transform_indices = @transform_6, window_bounds = array<i64: 768, 32>}, {pipeline_mode = #tpu.pipeline_mode<synchronous>, transform_indices = @transform_7, window_bounds = array<i64: 1, 32>}, {pipeline_mode = #tpu.pipeline_mode<synchronous>, transform_indices = @transform_8, window_bounds = array<i64: 32, 24>}, {pipeline_mode = #tpu.pipeline_mode<synchronous>, transform_indices = @transform_9, window_bounds = array<i64: 1, 24>}, {pipeline_mode = #tpu.pipeline_mode<synchronous>, transform_indices = @transform_10, window_bounds = array<i64: 32, 24>}, {pipeline_mode = #tpu.pipeline_mode<synchronous>, transform_indices = @transform_11, window_bounds = array<i64: 1, 24>}, {pipeline_mode = #tpu.pipeline_mode<synchronous>, transform_indices = @transform_12, window_bounds = array<i64: 32, 24>}, {pipeline_mode = #tpu.pipeline_mode<synchronous>, transform_indices = @transform_13, window_bounds = array<i64: 1, 24>}, {pipeline_mode = #tpu.pipeline_mode<synchronous>, transform_indices = @transform_14, window_bounds = array<i64: 32, 16>}, {pipeline_mode = #tpu.pipeline_mode<synchronous>, transform_indices = @transform_15, window_bounds = array<i64: 32, 160>}, {pipeline_mode = #tpu.pipeline_mode<synchronous>, transform_indices = @transform_16, window_bounds = array<i64: 1, 160>}, {pipeline_mode = #tpu.pipeline_mode<synchronous>, transform_indices = @transform_17, window_bounds = array<i64: 5, 32>}, {pipeline_mode = #tpu.pipeline_mode<synchronous>, transform_indices = @transform_18, window_bounds = array<i64: 5, 32>}, {pipeline_mode = #tpu.pipeline_mode<synchronous>, transform_indices = @transform_19, window_bounds = array<i64: 1, 8>}, {pipeline_mode = #tpu.pipeline_mode<synchronous>, transform_indices = @transform_20, window_bounds = array<i64: 1, 8>}, {transform_indices = @transform_21, window_bounds = array<i64: 2, 16>}]} {
    %c0 = arith.constant 0 : index
    %c0_0 = arith.constant 0 : index
    %c0_1 = arith.constant 0 : index
    %0 = vector.load %arg1[%c0, %c0_0, %c0_1] : memref<2x8x768xf32, #tpu.memory_space<vmem>>, vector<2x8x768xf32>
    %1 = vector.shape_cast %0 : vector<2x8x768xf32> to vector<16x768xf32>
    %2 = arith.truncf %1 : vector<16x768xf32> to vector<16x768xbf16>
    %c0_2 = arith.constant 0 : index
    %c0_3 = arith.constant 0 : index
    %3 = vector.load %arg7[%c0_2, %c0_3] : memref<768x32xbf16, #tpu.memory_space<vmem>>, vector<768x32xbf16>
    %cst = arith.constant dense<0.000000e+00> : vector<16x32xf32>
    %4 = tpu.matmul %2, %3, %cst {dimension_numbers = #tpu.dot_dimension_numbers<[1], [0], [0], [1], [0, 0, 1, 1], [], []>} : vector<16x768xbf16>, vector<768x32xbf16>, vector<16x32xf32> -> vector<16x32xf32>
    %c0_4 = arith.constant 0 : index
    %c0_5 = arith.constant 0 : index
    %5 = vector.load %arg8[%c0_4, %c0_5] : memref<1x32xf32, #tpu.memory_space<vmem>>, vector<1x32xf32>
    %6 = vector.broadcast %5 : vector<1x32xf32> to vector<16x32xf32>
    %7 = arith.addf %4, %6 : vector<16x32xf32>
    %8 = arith.truncf %7 : vector<16x32xf32> to vector<16x32xbf16>
    %c0_6 = arith.constant 0 : index
    %c0_7 = arith.constant 0 : index
    %9 = vector.load %arg9[%c0_6, %c0_7] : memref<32x24xbf16, #tpu.memory_space<vmem>>, vector<32x24xbf16>
    %cst_8 = arith.constant dense<0.000000e+00> : vector<16x24xf32>
    %10 = tpu.matmul %8, %9, %cst_8 {dimension_numbers = #tpu.dot_dimension_numbers<[1], [0], [0], [1], [0, 0, 1, 1], [], []>} : vector<16x32xbf16>, vector<32x24xbf16>, vector<16x24xf32> -> vector<16x24xf32>
    %c0_9 = arith.constant 0 : index
    %c0_10 = arith.constant 0 : index
    %11 = vector.load %arg10[%c0_9, %c0_10] : memref<1x24xf32, #tpu.memory_space<vmem>>, vector<1x24xf32>
    %12 = vector.broadcast %11 : vector<1x24xf32> to vector<16x24xf32>
    %13 = arith.addf %10, %12 : vector<16x24xf32>
    %14 = vector.extract_strided_slice %13 {offsets = [0, 0], sizes = [16, 8], strides = [1, 1]} : vector<16x24xf32> to vector<16x8xf32>
    %15 = arith.negf %14 : vector<16x8xf32>
    %16 = math.exp %15 : vector<16x8xf32>
    %cst_11 = arith.constant 1.000000e+00 : f32
    %17 = vector.broadcast %cst_11 : f32 to vector<16x8xf32>
    %18 = arith.addf %17, %16 : vector<16x8xf32>
    %19 = arith.divf %17, %18 : vector<16x8xf32>
    %20 = vector.extract_strided_slice %13 {offsets = [0, 8], sizes = [16, 8], strides = [1, 1]} : vector<16x24xf32> to vector<16x8xf32>
    %21 = arith.mulf %19, %20 : vector<16x8xf32>
    %22 = vector.shape_cast %21 : vector<16x8xf32> to vector<2x8x8xf32>
    %cst_12 = arith.constant dense<0.000000e+00> : vector<2x8xf32>
    %23 = vector.multi_reduction <add>, %22, %cst_12 [1] : vector<2x8x8xf32> to vector<2x8xf32>
    %cst_13 = arith.constant 8.000000e+00 : f32
    %24 = vector.broadcast %cst_13 : f32 to vector<2x8xf32>
    %25 = arith.divf %23, %24 : vector<2x8xf32>
    %26 = vector.extract_strided_slice %13 {offsets = [0, 16], sizes = [16, 8], strides = [1, 1]} : vector<16x24xf32> to vector<16x8xf32>
    %27 = arith.mulf %19, %26 : vector<16x8xf32>
    %28 = vector.shape_cast %27 : vector<16x8xf32> to vector<2x8x8xf32>
    %cst_14 = arith.constant dense<0.000000e+00> : vector<2x8xf32>
    %29 = vector.multi_reduction <add>, %28, %cst_14 [1] : vector<2x8x8xf32> to vector<2x8xf32>
    %cst_15 = arith.constant 8.000000e+00 : f32
    %30 = vector.broadcast %cst_15 : f32 to vector<2x8xf32>
    %31 = arith.divf %29, %30 : vector<2x8xf32>
    %32 = vector.shape_cast %7 : vector<16x32xf32> to vector<2x8x32xf32>
    %cst_16 = arith.constant dense<0.000000e+00> : vector<2x32xf32>
    %33 = vector.multi_reduction <add>, %32, %cst_16 [1] : vector<2x8x32xf32> to vector<2x32xf32>
    %cst_17 = arith.constant 8.000000e+00 : f32
    %34 = vector.broadcast %cst_17 : f32 to vector<2x32xf32>
    %35 = arith.divf %33, %34 : vector<2x32xf32>
    %c0_18 = arith.constant 0 : index
    %c0_19 = arith.constant 0 : index
    %c0_20 = arith.constant 0 : index
    %36 = vector.load %arg2[%c0_18, %c0_19, %c0_20] : memref<2x8x32xf32, #tpu.memory_space<vmem>>, vector<2x8x32xf32>
    %37 = vector.shape_cast %36 : vector<2x8x32xf32> to vector<16x32xf32>
    %38 = arith.truncf %37 : vector<16x32xf32> to vector<16x32xbf16>
    %c0_21 = arith.constant 0 : index
    %c0_22 = arith.constant 0 : index
    %39 = vector.load %arg11[%c0_21, %c0_22] : memref<32x24xbf16, #tpu.memory_space<vmem>>, vector<32x24xbf16>
    %cst_23 = arith.constant dense<0.000000e+00> : vector<16x24xf32>
    %40 = tpu.matmul %38, %39, %cst_23 {dimension_numbers = #tpu.dot_dimension_numbers<[1], [0], [0], [1], [0, 0, 1, 1], [], []>} : vector<16x32xbf16>, vector<32x24xbf16>, vector<16x24xf32> -> vector<16x24xf32>
    %c0_24 = arith.constant 0 : index
    %c0_25 = arith.constant 0 : index
    %41 = vector.load %arg12[%c0_24, %c0_25] : memref<1x24xf32, #tpu.memory_space<vmem>>, vector<1x24xf32>
    %42 = vector.broadcast %41 : vector<1x24xf32> to vector<16x24xf32>
    %43 = arith.addf %40, %42 : vector<16x24xf32>
    %44 = vector.extract_strided_slice %43 {offsets = [0, 0], sizes = [16, 8], strides = [1, 1]} : vector<16x24xf32> to vector<16x8xf32>
    %45 = arith.negf %44 : vector<16x8xf32>
    %46 = math.exp %45 : vector<16x8xf32>
    %cst_26 = arith.constant 1.000000e+00 : f32
    %47 = vector.broadcast %cst_26 : f32 to vector<16x8xf32>
    %48 = arith.addf %47, %46 : vector<16x8xf32>
    %49 = arith.divf %47, %48 : vector<16x8xf32>
    %50 = vector.extract_strided_slice %43 {offsets = [0, 8], sizes = [16, 8], strides = [1, 1]} : vector<16x24xf32> to vector<16x8xf32>
    %51 = arith.mulf %49, %50 : vector<16x8xf32>
    %52 = vector.shape_cast %51 : vector<16x8xf32> to vector<2x8x8xf32>
    %cst_27 = arith.constant dense<0.000000e+00> : vector<2x8xf32>
    %53 = vector.multi_reduction <add>, %52, %cst_27 [1] : vector<2x8x8xf32> to vector<2x8xf32>
    %cst_28 = arith.constant 8.000000e+00 : f32
    %54 = vector.broadcast %cst_28 : f32 to vector<2x8xf32>
    %55 = arith.divf %53, %54 : vector<2x8xf32>
    %56 = vector.extract_strided_slice %43 {offsets = [0, 16], sizes = [16, 8], strides = [1, 1]} : vector<16x24xf32> to vector<16x8xf32>
    %57 = arith.mulf %49, %56 : vector<16x8xf32>
    %58 = vector.shape_cast %57 : vector<16x8xf32> to vector<2x8x8xf32>
    %cst_29 = arith.constant dense<0.000000e+00> : vector<2x8xf32>
    %59 = vector.multi_reduction <add>, %58, %cst_29 [1] : vector<2x8x8xf32> to vector<2x8xf32>
    %cst_30 = arith.constant 8.000000e+00 : f32
    %60 = vector.broadcast %cst_30 : f32 to vector<2x8xf32>
    %61 = arith.divf %59, %60 : vector<2x8xf32>
    %cst_31 = arith.constant dense<0.000000e+00> : vector<2x32xf32>
    %62 = vector.multi_reduction <add>, %36, %cst_31 [1] : vector<2x8x32xf32> to vector<2x32xf32>
    %cst_32 = arith.constant 8.000000e+00 : f32
    %63 = vector.broadcast %cst_32 : f32 to vector<2x32xf32>
    %64 = arith.divf %62, %63 : vector<2x32xf32>
    %c0_33 = arith.constant 0 : index
    %c0_34 = arith.constant 0 : index
    %65 = vector.load %arg3[%c0_33, %c0_34] : memref<2x32xf32, #tpu.memory_space<vmem>>, vector<2x32xf32>
    %cst_35 = arith.constant 0.000000e+00 : f32
    %66 = vector.broadcast %cst_35 : f32 to vector<2x32xf32>
    %67 = arith.maximumf %65, %66 : vector<2x32xf32>
    %c0_36 = arith.constant 0 : index
    %c0_37 = arith.constant 0 : index
    %68 = vector.load %arg5[%c0_36, %c0_37] : memref<1x32xf32, #tpu.memory_space<vmem>>, vector<1x32xf32>
    %69 = vector.broadcast %68 : vector<1x32xf32> to vector<2x32xf32>
    %70 = arith.mulf %67, %69 : vector<2x32xf32>
    %c0_38 = arith.constant 0 : index
    %c0_39 = arith.constant 0 : index
    %71 = vector.load %arg6[%c0_38, %c0_39] : memref<1x32xf32, #tpu.memory_space<vmem>>, vector<1x32xf32>
    %72 = vector.broadcast %71 : vector<1x32xf32> to vector<2x32xf32>
    %73 = arith.addf %70, %72 : vector<2x32xf32>
    %74 = arith.truncf %73 : vector<2x32xf32> to vector<2x32xbf16>
    %c0_40 = arith.constant 0 : index
    %c0_41 = arith.constant 0 : index
    %75 = vector.load %arg16[%c0_40, %c0_41] : memref<32x160xbf16, #tpu.memory_space<vmem>>, vector<32x160xbf16>
    %cst_42 = arith.constant dense<0.000000e+00> : vector<2x160xf32>
    %76 = tpu.matmul %74, %75, %cst_42 {dimension_numbers = #tpu.dot_dimension_numbers<[1], [0], [0], [1], [0, 0, 1, 1], [], []>} : vector<2x32xbf16>, vector<32x160xbf16>, vector<2x160xf32> -> vector<2x160xf32>
    %c0_43 = arith.constant 0 : index
    %c0_44 = arith.constant 0 : index
    %77 = vector.load %arg17[%c0_43, %c0_44] : memref<1x160xf32, #tpu.memory_space<vmem>>, vector<1x160xf32>
    %78 = vector.broadcast %77 : vector<1x160xf32> to vector<2x160xf32>
    %79 = arith.addf %76, %78 : vector<2x160xf32>
    %80 = arith.negf %79 : vector<2x160xf32>
    %81 = math.exp %80 : vector<2x160xf32>
    %cst_45 = arith.constant 1.000000e+00 : f32
    %82 = vector.broadcast %cst_45 : f32 to vector<2x160xf32>
    %83 = arith.addf %82, %81 : vector<2x160xf32>
    %84 = arith.divf %82, %83 : vector<2x160xf32>
    %85 = vector.shape_cast %84 : vector<2x160xf32> to vector<2x5x32xf32>
    %86 = vector.shape_cast %73 : vector<2x32xf32> to vector<2x1x32xf32>
    %87 = vector.broadcast %86 : vector<2x1x32xf32> to vector<2x5x32xf32>
    %88 = arith.mulf %85, %87 : vector<2x5x32xf32>
    %c0_46 = arith.constant 0 : index
    %c0_47 = arith.constant 0 : index
    %89 = vector.load %arg18[%c0_46, %c0_47] : memref<5x32xf32, #tpu.memory_space<vmem>>, vector<5x32xf32>
    %90 = vector.shape_cast %89 : vector<5x32xf32> to vector<1x5x32xf32>
    %91 = vector.broadcast %90 : vector<1x5x32xf32> to vector<2x5x32xf32>
    %92 = arith.mulf %88, %91 : vector<2x5x32xf32>
    %cst_48 = arith.constant dense<0.000000e+00> : vector<2x5xf32>
    %93 = vector.multi_reduction <add>, %92, %cst_48 [2] : vector<2x5x32xf32> to vector<2x5xf32>
    %c0_49 = arith.constant 0 : index
    %c0_50 = arith.constant 0 : index
    %94 = vector.load %arg19[%c0_49, %c0_50] : memref<5x32xf32, #tpu.memory_space<vmem>>, vector<5x32xf32>
    %95 = vector.shape_cast %94 : vector<5x32xf32> to vector<1x5x32xf32>
    %96 = vector.broadcast %95 : vector<1x5x32xf32> to vector<2x5x32xf32>
    %97 = arith.mulf %88, %96 : vector<2x5x32xf32>
    %cst_51 = arith.constant dense<0.000000e+00> : vector<2x5xf32>
    %98 = vector.multi_reduction <add>, %97, %cst_51 [2] : vector<2x5x32xf32> to vector<2x5xf32>
    %cst_52 = arith.constant 0.000000e+00 : f32
    %99 = vector.broadcast %cst_52 : f32 to vector<2x3xf32>
    %100 = tpu.concatenate %93, %99 in 1 : vector<2x5xf32>, vector<2x3xf32> -> vector<2x8xf32>
    %101 = tpu.concatenate %98, %99 in 1 : vector<2x5xf32>, vector<2x3xf32> -> vector<2x8xf32>
    %c0_53 = arith.constant 0 : index
    %c0_54 = arith.constant 0 : index
    %102 = vector.load %arg4[%c0_53, %c0_54] : memref<2x32xf32, #tpu.memory_space<vmem>>, vector<2x32xf32>
    %103 = arith.truncf %102 : vector<2x32xf32> to vector<2x32xbf16>
    %c0_55 = arith.constant 0 : index
    %c0_56 = arith.constant 0 : index
    %104 = vector.load %arg13[%c0_55, %c0_56] : memref<32x24xbf16, #tpu.memory_space<vmem>>, vector<32x24xbf16>
    %cst_57 = arith.constant dense<0.000000e+00> : vector<2x24xf32>
    %105 = tpu.matmul %103, %104, %cst_57 {dimension_numbers = #tpu.dot_dimension_numbers<[1], [0], [0], [1], [0, 0, 1, 1], [], []>} : vector<2x32xbf16>, vector<32x24xbf16>, vector<2x24xf32> -> vector<2x24xf32>
    %c0_58 = arith.constant 0 : index
    %c0_59 = arith.constant 0 : index
    %106 = vector.load %arg14[%c0_58, %c0_59] : memref<1x24xf32, #tpu.memory_space<vmem>>, vector<1x24xf32>
    %107 = vector.broadcast %106 : vector<1x24xf32> to vector<2x24xf32>
    %108 = arith.addf %105, %107 : vector<2x24xf32>
    %109 = vector.extract_strided_slice %108 {offsets = [0, 0], sizes = [2, 8], strides = [1, 1]} : vector<2x24xf32> to vector<2x8xf32>
    %110 = arith.negf %109 : vector<2x8xf32>
    %111 = math.exp %110 : vector<2x8xf32>
    %cst_60 = arith.constant 1.000000e+00 : f32
    %112 = vector.broadcast %cst_60 : f32 to vector<2x8xf32>
    %113 = arith.addf %112, %111 : vector<2x8xf32>
    %114 = arith.divf %112, %113 : vector<2x8xf32>
    %115 = vector.extract_strided_slice %108 {offsets = [0, 8], sizes = [2, 8], strides = [1, 1]} : vector<2x24xf32> to vector<2x8xf32>
    %116 = arith.mulf %114, %115 : vector<2x8xf32>
    %117 = vector.extract_strided_slice %108 {offsets = [0, 16], sizes = [2, 8], strides = [1, 1]} : vector<2x24xf32> to vector<2x8xf32>
    %118 = arith.mulf %114, %117 : vector<2x8xf32>
    %119 = arith.addf %35, %64 : vector<2x32xf32>
    %120 = arith.addf %119, %73 : vector<2x32xf32>
    %121 = arith.addf %120, %102 : vector<2x32xf32>
    %cst_61 = arith.constant 2.500000e-01 : f32
    %122 = vector.broadcast %cst_61 : f32 to vector<2x32xf32>
    %123 = arith.mulf %121, %122 : vector<2x32xf32>
    %124 = arith.truncf %123 : vector<2x32xf32> to vector<2x32xbf16>
    %c0_62 = arith.constant 0 : index
    %c0_63 = arith.constant 0 : index
    %125 = vector.load %arg15[%c0_62, %c0_63] : memref<32x16xbf16, #tpu.memory_space<vmem>>, vector<32x16xbf16>
    %cst_64 = arith.constant dense<0.000000e+00> : vector<2x16xf32>
    %126 = tpu.matmul %124, %125, %cst_64 {dimension_numbers = #tpu.dot_dimension_numbers<[1], [0], [0], [1], [0, 0, 1, 1], [], []>} : vector<2x32xbf16>, vector<32x16xbf16>, vector<2x16xf32> -> vector<2x16xf32>
    %127 = vector.extract_strided_slice %126 {offsets = [0, 0], sizes = [2, 8], strides = [1, 1]} : vector<2x16xf32> to vector<2x8xf32>
    %128 = arith.addf %25, %55 : vector<2x8xf32>
    %129 = arith.addf %128, %100 : vector<2x8xf32>
    %130 = arith.addf %129, %116 : vector<2x8xf32>
    %cst_65 = arith.constant 2.500000e-01 : f32
    %131 = vector.broadcast %cst_65 : f32 to vector<2x8xf32>
    %132 = arith.mulf %131, %130 : vector<2x8xf32>
    %133 = arith.addf %127, %132 : vector<2x8xf32>
    %c0_66 = arith.constant 0 : index
    %c0_67 = arith.constant 0 : index
    %134 = vector.load %arg20[%c0_66, %c0_67] : memref<1x8xf32, #tpu.memory_space<vmem>>, vector<1x8xf32>
    %135 = vector.broadcast %134 : vector<1x8xf32> to vector<2x8xf32>
    %136 = arith.addf %133, %135 : vector<2x8xf32>
    %137 = arith.negf %136 : vector<2x8xf32>
    %138 = math.exp %137 : vector<2x8xf32>
    %cst_68 = arith.constant 1.000000e+00 : f32
    %139 = vector.broadcast %cst_68 : f32 to vector<2x8xf32>
    %140 = arith.addf %139, %138 : vector<2x8xf32>
    %141 = arith.divf %139, %140 : vector<2x8xf32>
    %142 = vector.extract_strided_slice %126 {offsets = [0, 8], sizes = [2, 8], strides = [1, 1]} : vector<2x16xf32> to vector<2x8xf32>
    %143 = arith.addf %31, %61 : vector<2x8xf32>
    %144 = arith.addf %143, %101 : vector<2x8xf32>
    %145 = arith.addf %144, %118 : vector<2x8xf32>
    %cst_69 = arith.constant 2.500000e-01 : f32
    %146 = vector.broadcast %cst_69 : f32 to vector<2x8xf32>
    %147 = arith.mulf %146, %145 : vector<2x8xf32>
    %148 = arith.addf %142, %147 : vector<2x8xf32>
    %c0_70 = arith.constant 0 : index
    %c0_71 = arith.constant 0 : index
    %149 = vector.load %arg21[%c0_70, %c0_71] : memref<1x8xf32, #tpu.memory_space<vmem>>, vector<1x8xf32>
    %150 = vector.broadcast %149 : vector<1x8xf32> to vector<2x8xf32>
    %151 = arith.addf %148, %150 : vector<2x8xf32>
    %152 = tpu.concatenate %141, %151 in 1 : vector<2x8xf32>, vector<2x8xf32> -> vector<2x16xf32>
    %c0_72 = arith.constant 0 : index
    %c0_73 = arith.constant 0 : index
    %153 = vector.load %arg22[%c0_72, %c0_73] : memref<2x16xf32, #tpu.memory_space<vmem>>, vector<2x16xf32>
    tpu.vector_store %arg22[%c0_72, %c0_73], %152 {strides = array<i32>} : memref<2x16xf32, #tpu.memory_space<vmem>>, vector<2x16xf32>,
    return
  }
  func.func @transform_0(%arg0: i32) -> (i32, i32, i32) {
    %c0_i32 = arith.constant 0 : i32
    %c0_i32_0 = arith.constant 0 : i32
    %c0_i32_1 = arith.constant 0 : i32
    return %arg0, %c0_i32, %c0_i32_0 : i32, i32, i32
  }
  func.func @transform_1(%arg0: i32) -> (i32, i32, i32) {
    %c0_i32 = arith.constant 0 : i32
    %c0_i32_0 = arith.constant 0 : i32
    %c0_i32_1 = arith.constant 0 : i32
    return %arg0, %c0_i32, %c0_i32_0 : i32, i32, i32
  }
  func.func @transform_2(%arg0: i32) -> (i32, i32) {
    %c0_i32 = arith.constant 0 : i32
    %c0_i32_0 = arith.constant 0 : i32
    return %arg0, %c0_i32 : i32, i32
  }
  func.func @transform_3(%arg0: i32) -> (i32, i32) {
    %c0_i32 = arith.constant 0 : i32
    %c0_i32_0 = arith.constant 0 : i32
    return %arg0, %c0_i32 : i32, i32
  }
  func.func @transform_4(%arg0: i32) -> (i32, i32) {
    %c0_i32 = arith.constant 0 : i32
    %c0_i32_0 = arith.constant 0 : i32
    %c0_i32_1 = arith.constant 0 : i32
    return %c0_i32, %c0_i32_0 : i32, i32
  }
  func.func @transform_5(%arg0: i32) -> (i32, i32) {
    %c0_i32 = arith.constant 0 : i32
    %c0_i32_0 = arith.constant 0 : i32
    %c0_i32_1 = arith.constant 0 : i32
    return %c0_i32, %c0_i32_0 : i32, i32
  }
  func.func @transform_6(%arg0: i32) -> (i32, i32) {
    %c0_i32 = arith.constant 0 : i32
    %c0_i32_0 = arith.constant 0 : i32
    %c0_i32_1 = arith.constant 0 : i32
    return %c0_i32, %c0_i32_0 : i32, i32
  }
  func.func @transform_7(%arg0: i32) -> (i32, i32) {
    %c0_i32 = arith.constant 0 : i32
    %c0_i32_0 = arith.constant 0 : i32
    %c0_i32_1 = arith.constant 0 : i32
    return %c0_i32, %c0_i32_0 : i32, i32
  }
  func.func @transform_8(%arg0: i32) -> (i32, i32) {
    %c0_i32 = arith.constant 0 : i32
    %c0_i32_0 = arith.constant 0 : i32
    %c0_i32_1 = arith.constant 0 : i32
    return %c0_i32, %c0_i32_0 : i32, i32
  }
  func.func @transform_9(%arg0: i32) -> (i32, i32) {
    %c0_i32 = arith.constant 0 : i32
    %c0_i32_0 = arith.constant 0 : i32
    %c0_i32_1 = arith.constant 0 : i32
    return %c0_i32, %c0_i32_0 : i32, i32
  }
  func.func @transform_10(%arg0: i32) -> (i32, i32) {
    %c0_i32 = arith.constant 0 : i32
    %c0_i32_0 = arith.constant 0 : i32
    %c0_i32_1 = arith.constant 0 : i32
    return %c0_i32, %c0_i32_0 : i32, i32
  }
  func.func @transform_11(%arg0: i32) -> (i32, i32) {
    %c0_i32 = arith.constant 0 : i32
    %c0_i32_0 = arith.constant 0 : i32
    %c0_i32_1 = arith.constant 0 : i32
    return %c0_i32, %c0_i32_0 : i32, i32
  }
  func.func @transform_12(%arg0: i32) -> (i32, i32) {
    %c0_i32 = arith.constant 0 : i32
    %c0_i32_0 = arith.constant 0 : i32
    %c0_i32_1 = arith.constant 0 : i32
    return %c0_i32, %c0_i32_0 : i32, i32
  }
  func.func @transform_13(%arg0: i32) -> (i32, i32) {
    %c0_i32 = arith.constant 0 : i32
    %c0_i32_0 = arith.constant 0 : i32
    %c0_i32_1 = arith.constant 0 : i32
    return %c0_i32, %c0_i32_0 : i32, i32
  }
  func.func @transform_14(%arg0: i32) -> (i32, i32) {
    %c0_i32 = arith.constant 0 : i32
    %c0_i32_0 = arith.constant 0 : i32
    %c0_i32_1 = arith.constant 0 : i32
    return %c0_i32, %c0_i32_0 : i32, i32
  }
  func.func @transform_15(%arg0: i32) -> (i32, i32) {
    %c0_i32 = arith.constant 0 : i32
    %c0_i32_0 = arith.constant 0 : i32
    %c0_i32_1 = arith.constant 0 : i32
    return %c0_i32, %c0_i32_0 : i32, i32
  }
  func.func @transform_16(%arg0: i32) -> (i32, i32) {
    %c0_i32 = arith.constant 0 : i32
    %c0_i32_0 = arith.constant 0 : i32
    %c0_i32_1 = arith.constant 0 : i32
    return %c0_i32, %c0_i32_0 : i32, i32
  }
  func.func @transform_17(%arg0: i32) -> (i32, i32) {
    %c0_i32 = arith.constant 0 : i32
    %c0_i32_0 = arith.constant 0 : i32
    %c0_i32_1 = arith.constant 0 : i32
    return %c0_i32, %c0_i32_0 : i32, i32
  }
  func.func @transform_18(%arg0: i32) -> (i32, i32) {
    %c0_i32 = arith.constant 0 : i32
    %c0_i32_0 = arith.constant 0 : i32
    %c0_i32_1 = arith.constant 0 : i32
    return %c0_i32, %c0_i32_0 : i32, i32
  }
  func.func @transform_19(%arg0: i32) -> (i32, i32) {
    %c0_i32 = arith.constant 0 : i32
    %c0_i32_0 = arith.constant 0 : i32
    %c0_i32_1 = arith.constant 0 : i32
    return %c0_i32, %c0_i32_0 : i32, i32
  }
  func.func @transform_20(%arg0: i32) -> (i32, i32) {
    %c0_i32 = arith.constant 0 : i32
    %c0_i32_0 = arith.constant 0 : i32
    %c0_i32_1 = arith.constant 0 : i32
    return %c0_i32, %c0_i32_0 : i32, i32
  }
  func.func @transform_21(%arg0: i32) -> (i32, i32) {
    %c0_i32 = arith.constant 0 : i32
    %c0_i32_0 = arith.constant 0 : i32
    return %arg0, %c0_i32 : i32, i32
  }
}

module attributes {stable_mosaic.version = 11 : i64} {
  func.func @_gate_pretrain_kernel(%arg0: i32, %arg1: memref<2x8x768xf32, #tpu.memory_space<vmem>>, %arg2: memref<2x8x32xf32, #tpu.memory_space<vmem>>, %arg3: memref<2x32xf32, #tpu.memory_space<vmem>>, %arg4: memref<2x32xf32, #tpu.memory_space<vmem>>, %arg5: memref<1x32xf32, #tpu.memory_space<vmem>>, %arg6: memref<1x32xf32, #tpu.memory_space<vmem>>, %arg7: memref<768x32xbf16, #tpu.memory_space<vmem>>, %arg8: memref<1x32xf32, #tpu.memory_space<vmem>>, %arg9: memref<32x24xbf16, #tpu.memory_space<vmem>>, %arg10: memref<1x24xf32, #tpu.memory_space<vmem>>, %arg11: memref<32x24xbf16, #tpu.memory_space<vmem>>, %arg12: memref<1x24xf32, #tpu.memory_space<vmem>>, %arg13: memref<32x24xbf16, #tpu.memory_space<vmem>>, %arg14: memref<1x24xf32, #tpu.memory_space<vmem>>, %arg15: memref<32x16xbf16, #tpu.memory_space<vmem>>, %arg16: memref<32x160xbf16, #tpu.memory_space<vmem>>, %arg17: memref<1x160xf32, #tpu.memory_space<vmem>>, %arg18: memref<5x32xf32, #tpu.memory_space<vmem>>, %arg19: memref<5x32xf32, #tpu.memory_space<vmem>>, %arg20: memref<1x8xf32, #tpu.memory_space<vmem>>, %arg21: memref<1x8xf32, #tpu.memory_space<vmem>>, %arg22: memref<2x16xf32, #tpu.memory_space<vmem>>) attributes {dimension_semantics = [#tpu.dimension_semantics<parallel>], iteration_bounds = array<i64: 1>, scalar_prefetch = 0 : i64, scratch_operands = 0 : i64, tpu.core_type = #tpu.core_type<tc>, window_params = [{transform_indices = @transform_0, window_bounds = array<i64: 2, 8, 768>}, {transform_indices = @transform_1, window_bounds = array<i64: 2, 8, 32>}, {transform_indices = @transform_2, window_bounds = array<i64: 2, 32>}, {transform_indices = @transform_3, window_bounds = array<i64: 2, 32>}, {pipeline_mode = #tpu.pipeline_mode<synchronous>, transform_indices = @transform_4, window_bounds = array<i64: 1, 32>}, {pipeline_mode = #tpu.pipeline_mode<synchronous>, transform_indices = @transform_5, window_bounds = array<i64: 1, 32>}, {pipeline_mode = #tpu.pipeline_mode<synchronous>, transform_indices = @transform_6, window_bounds = array<i64: 768, 32>}, {pipeline_mode = #tpu.pipeline_mode<synchronous>, transform_indices = @transform_7, window_bounds = array<i64: 1, 32>}, {pipeline_mode = #tpu.pipeline_mode<synchronous>, transform_indices = @transform_8, window_bounds = array<i64: 32, 24>}, {pipeline_mode = #tpu.pipeline_mode<synchronous>, transform_indices = @transform_9, window_bounds = array<i64: 1, 24>}, {pipeline_mode = #tpu.pipeline_mode<synchronous>, transform_indices = @transform_10, window_bounds = array<i64: 32, 24>}, {pipeline_mode = #tpu.pipeline_mode<synchronous>, transform_indices = @transform_11, window_bounds = array<i64: 1, 24>}, {pipeline_mode = #tpu.pipeline_mode<synchronous>, transform_indices = @transform_12, window_bounds = array<i64: 32, 24>}, {pipeline_mode = #tpu.pipeline_mode<synchronous>, transform_indices = @transform_13, window_bounds = array<i64: 1, 24>}, {pipeline_mode = #tpu.pipeline_mode<synchronous>, transform_indices = @transform_14, window_bounds = array<i64: 32, 16>}, {pipeline_mode = #tpu.pipeline_mode<synchronous>, transform_indices = @transform_15, window_bounds = array<i64: 32, 160>}, {pipeline_mode = #tpu.pipeline_mode<synchronous>, transform_indices = @transform_16, window_bounds = array<i64: 1, 160>}, {pipeline_mode = #tpu.pipeline_mode<synchronous>, transform_indices = @transform_17, window_bounds = array<i64: 5, 32>}, {pipeline_mode = #tpu.pipeline_mode<synchronous>, transform_indices = @transform_18, window_bounds = array<i64: 5, 32>}, {pipeline_mode = #tpu.pipeline_mode<synchronous>, transform_indices = @transform_19, window_bounds = array<i64: 1, 8>}, {pipeline_mode = #tpu.pipeline_mode<synchronous>, transform_indices = @transform_20, window_bounds = array<i64: 1, 8>}, {transform_indices = @transform_21, window_bounds = array<i64: 2, 16>}]} {
    %c0 = arith.constant 0 : index
    %c0_0 = arith.constant 0 : index
    %c0_1 = arith.constant 0 : index
    %0 = vector.load %arg1[%c0, %c0_0, %c0_1] : memref<2x8x768xf32, #tpu.memory_space<vmem>>, vector<2x8x768xf32>
    %1 = vector.shape_cast %0 : vector<2x8x768xf32> to vector<16x768xf32>
    %2 = arith.truncf %1 : vector<16x768xf32> to vector<16x768xbf16>
    %c0_2 = arith.constant 0 : index
    %c0_3 = arith.constant 0 : index
    %3 = vector.load %arg7[%c0_2, %c0_3] : memref<768x32xbf16, #tpu.memory_space<vmem>>, vector<768x32xbf16>
    %cst = arith.constant dense<0.000000e+00> : vector<16x32xf32>
    %4 = tpu.matmul %2, %3, %cst {dimension_numbers = #tpu.dot_dimension_numbers<[1], [0], [0], [1], [0, 0, 1, 1], [], []>} : vector<16x768xbf16>, vector<768x32xbf16>, vector<16x32xf32> -> vector<16x32xf32>
    %c0_4 = arith.constant 0 : index
    %c0_5 = arith.constant 0 : index
    %5 = vector.load %arg8[%c0_4, %c0_5] : memref<1x32xf32, #tpu.memory_space<vmem>>, vector<1x32xf32>
    %6 = vector.broadcast %5 : vector<1x32xf32> to vector<16x32xf32>
    %7 = arith.addf %4, %6 : vector<16x32xf32>
    %8 = arith.truncf %7 : vector<16x32xf32> to vector<16x32xbf16>
    %c0_6 = arith.constant 0 : index
    %c0_7 = arith.constant 0 : index
    %9 = vector.load %arg9[%c0_6, %c0_7] : memref<32x24xbf16, #tpu.memory_space<vmem>>, vector<32x24xbf16>
    %cst_8 = arith.constant dense<0.000000e+00> : vector<16x24xf32>
    %10 = tpu.matmul %8, %9, %cst_8 {dimension_numbers = #tpu.dot_dimension_numbers<[1], [0], [0], [1], [0, 0, 1, 1], [], []>} : vector<16x32xbf16>, vector<32x24xbf16>, vector<16x24xf32> -> vector<16x24xf32>
    %c0_9 = arith.constant 0 : index
    %c0_10 = arith.constant 0 : index
    %11 = vector.load %arg10[%c0_9, %c0_10] : memref<1x24xf32, #tpu.memory_space<vmem>>, vector<1x24xf32>
    %12 = vector.broadcast %11 : vector<1x24xf32> to vector<16x24xf32>
    %13 = arith.addf %10, %12 : vector<16x24xf32>
    %14 = vector.extract_strided_slice %13 {offsets = [0, 0], sizes = [16, 8], strides = [1, 1]} : vector<16x24xf32> to vector<16x8xf32>
    %15 = arith.negf %14 : vector<16x8xf32>
    %16 = math.exp %15 : vector<16x8xf32>
    %cst_11 = arith.constant 1.000000e+00 : f32
    %17 = vector.broadcast %cst_11 : f32 to vector<16x8xf32>
    %18 = arith.addf %17, %16 : vector<16x8xf32>
    %19 = arith.divf %17, %18 : vector<16x8xf32>
    %20 = vector.extract_strided_slice %13 {offsets = [0, 8], sizes = [16, 8], strides = [1, 1]} : vector<16x24xf32> to vector<16x8xf32>
    %21 = arith.mulf %19, %20 : vector<16x8xf32>
    %22 = vector.shape_cast %21 : vector<16x8xf32> to vector<2x8x8xf32>
    %cst_12 = arith.constant dense<0.000000e+00> : vector<2x8xf32>
    %23 = vector.multi_reduction <add>, %22, %cst_12 [1] : vector<2x8x8xf32> to vector<2x8xf32>
    %cst_13 = arith.constant 8.000000e+00 : f32
    %24 = vector.broadcast %cst_13 : f32 to vector<2x8xf32>
    %25 = arith.divf %23, %24 : vector<2x8xf32>
    %26 = vector.extract_strided_slice %13 {offsets = [0, 16], sizes = [16, 8], strides = [1, 1]} : vector<16x24xf32> to vector<16x8xf32>
    %27 = arith.mulf %19, %26 : vector<16x8xf32>
    %28 = vector.shape_cast %27 : vector<16x8xf32> to vector<2x8x8xf32>
    %cst_14 = arith.constant dense<0.000000e+00> : vector<2x8xf32>
    %29 = vector.multi_reduction <add>, %28, %cst_14 [1] : vector<2x8x8xf32> to vector<2x8xf32>
    %cst_15 = arith.constant 8.000000e+00 : f32
    %30 = vector.broadcast %cst_15 : f32 to vector<2x8xf32>
    %31 = arith.divf %29, %30 : vector<2x8xf32>
    %32 = vector.shape_cast %7 : vector<16x32xf32> to vector<2x8x32xf32>
    %cst_16 = arith.constant dense<0.000000e+00> : vector<2x32xf32>
    %33 = vector.multi_reduction <add>, %32, %cst_16 [1] : vector<2x8x32xf32> to vector<2x32xf32>
    %cst_17 = arith.constant 8.000000e+00 : f32
    %34 = vector.broadcast %cst_17 : f32 to vector<2x32xf32>
    %35 = arith.divf %33, %34 : vector<2x32xf32>
    %c0_18 = arith.constant 0 : index
    %c0_19 = arith.constant 0 : index
    %c0_20 = arith.constant 0 : index
    %36 = vector.load %arg2[%c0_18, %c0_19, %c0_20] : memref<2x8x32xf32, #tpu.memory_space<vmem>>, vector<2x8x32xf32>
    %37 = vector.shape_cast %36 : vector<2x8x32xf32> to vector<16x32xf32>
    %38 = arith.truncf %37 : vector<16x32xf32> to vector<16x32xbf16>
    %c0_21 = arith.constant 0 : index
    %c0_22 = arith.constant 0 : index
    %39 = vector.load %arg11[%c0_21, %c0_22] : memref<32x24xbf16, #tpu.memory_space<vmem>>, vector<32x24xbf16>
    %cst_23 = arith.constant dense<0.000000e+00> : vector<16x24xf32>
    %40 = tpu.matmul %38, %39, %cst_23 {dimension_numbers = #tpu.dot_dimension_numbers<[1], [0], [0], [1], [0, 0, 1, 1], [], []>} : vector<16x32xbf16>, vector<32x24xbf16>, vector<16x24xf32> -> vector<16x24xf32>
    %c0_24 = arith.constant 0 : index
    %c0_25 = arith.constant 0 : index
    %41 = vector.load %arg12[%c0_24, %c0_25] : memref<1x24xf32, #tpu.memory_space<vmem>>, vector<1x24xf32>
    %42 = vector.broadcast %41 : vector<1x24xf32> to vector<16x24xf32>
    %43 = arith.addf %40, %42 : vector<16x24xf32>
    %44 = vector.extract_strided_slice %43 {offsets = [0, 0], sizes = [16, 8], strides = [1, 1]} : vector<16x24xf32> to vector<16x8xf32>
    %45 = arith.negf %44 : vector<16x8xf32>
    %46 = math.exp %45 : vector<16x8xf32>
    %cst_26 = arith.constant 1.000000e+00 : f32
    %47 = vector.broadcast %cst_26 : f32 to vector<16x8xf32>
    %48 = arith.addf %47, %46 : vector<16x8xf32>
    %49 = arith.divf %47, %48 : vector<16x8xf32>
    %50 = vector.extract_strided_slice %43 {offsets = [0, 8], sizes = [16, 8], strides = [1, 1]} : vector<16x24xf32> to vector<16x8xf32>
    %51 = arith.mulf %49, %50 : vector<16x8xf32>
    %52 = vector.shape_cast %51 : vector<16x8xf32> to vector<2x8x8xf32>
    %cst_27 = arith.constant dense<0.000000e+00> : vector<2x8xf32>
    %53 = vector.multi_reduction <add>, %52, %cst_27 [1] : vector<2x8x8xf32> to vector<2x8xf32>
    %cst_28 = arith.constant 8.000000e+00 : f32
    %54 = vector.broadcast %cst_28 : f32 to vector<2x8xf32>
    %55 = arith.divf %53, %54 : vector<2x8xf32>
    %56 = vector.extract_strided_slice %43 {offsets = [0, 16], sizes = [16, 8], strides = [1, 1]} : vector<16x24xf32> to vector<16x8xf32>
    %57 = arith.mulf %49, %56 : vector<16x8xf32>
    %58 = vector.shape_cast %57 : vector<16x8xf32> to vector<2x8x8xf32>
    %cst_29 = arith.constant dense<0.000000e+00> : vector<2x8xf32>
    %59 = vector.multi_reduction <add>, %58, %cst_29 [1] : vector<2x8x8xf32> to vector<2x8xf32>
    %cst_30 = arith.constant 8.000000e+00 : f32
    %60 = vector.broadcast %cst_30 : f32 to vector<2x8xf32>
    %61 = arith.divf %59, %60 : vector<2x8xf32>
    %cst_31 = arith.constant dense<0.000000e+00> : vector<2x32xf32>
    %62 = vector.multi_reduction <add>, %36, %cst_31 [1] : vector<2x8x32xf32> to vector<2x32xf32>
    %cst_32 = arith.constant 8.000000e+00 : f32
    %63 = vector.broadcast %cst_32 : f32 to vector<2x32xf32>
    %64 = arith.divf %62, %63 : vector<2x32xf32>
    %c0_33 = arith.constant 0 : index
    %c0_34 = arith.constant 0 : index
    %65 = vector.load %arg3[%c0_33, %c0_34] : memref<2x32xf32, #tpu.memory_space<vmem>>, vector<2x32xf32>
    %cst_35 = arith.constant 0.000000e+00 : f32
    %66 = vector.broadcast %cst_35 : f32 to vector<2x32xf32>
    %67 = arith.maximumf %65, %66 : vector<2x32xf32>
    %c0_36 = arith.constant 0 : index
    %c0_37 = arith.constant 0 : index
    %68 = vector.load %arg5[%c0_36, %c0_37] : memref<1x32xf32, #tpu.memory_space<vmem>>, vector<1x32xf32>
    %69 = vector.broadcast %68 : vector<1x32xf32> to vector<2x32xf32>
    %70 = arith.mulf %67, %69 : vector<2x32xf32>
    %c0_38 = arith.constant 0 : index
    %c0_39 = arith.constant 0 : index
    %71 = vector.load %arg6[%c0_38, %c0_39] : memref<1x32xf32, #tpu.memory_space<vmem>>, vector<1x32xf32>
    %72 = vector.broadcast %71 : vector<1x32xf32> to vector<2x32xf32>
    %73 = arith.addf %70, %72 : vector<2x32xf32>
    %74 = arith.truncf %73 : vector<2x32xf32> to vector<2x32xbf16>
    %c0_40 = arith.constant 0 : index
    %c0_41 = arith.constant 0 : index
    %75 = vector.load %arg16[%c0_40, %c0_41] : memref<32x160xbf16, #tpu.memory_space<vmem>>, vector<32x160xbf16>
    %cst_42 = arith.constant dense<0.000000e+00> : vector<2x160xf32>
    %76 = tpu.matmul %74, %75, %cst_42 {dimension_numbers = #tpu.dot_dimension_numbers<[1], [0], [0], [1], [0, 0, 1, 1], [], []>} : vector<2x32xbf16>, vector<32x160xbf16>, vector<2x160xf32> -> vector<2x160xf32>
    %c0_43 = arith.constant 0 : index
    %c0_44 = arith.constant 0 : index
    %77 = vector.load %arg17[%c0_43, %c0_44] : memref<1x160xf32, #tpu.memory_space<vmem>>, vector<1x160xf32>
    %78 = vector.broadcast %77 : vector<1x160xf32> to vector<2x160xf32>
    %79 = arith.addf %76, %78 : vector<2x160xf32>
    %80 = arith.negf %79 : vector<2x160xf32>
    %81 = math.exp %80 : vector<2x160xf32>
    %cst_45 = arith.constant 1.000000e+00 : f32
    %82 = vector.broadcast %cst_45 : f32 to vector<2x160xf32>
    %83 = arith.addf %82, %81 : vector<2x160xf32>
    %84 = arith.divf %82, %83 : vector<2x160xf32>
    %85 = vector.shape_cast %84 : vector<2x160xf32> to vector<2x5x32xf32>
    %86 = vector.shape_cast %73 : vector<2x32xf32> to vector<2x1x32xf32>
    %87 = vector.broadcast %86 : vector<2x1x32xf32> to vector<2x5x32xf32>
    %88 = arith.mulf %85, %87 : vector<2x5x32xf32>
    %c0_46 = arith.constant 0 : index
    %c0_47 = arith.constant 0 : index
    %89 = vector.load %arg18[%c0_46, %c0_47] : memref<5x32xf32, #tpu.memory_space<vmem>>, vector<5x32xf32>
    %90 = vector.shape_cast %89 : vector<5x32xf32> to vector<1x5x32xf32>
    %91 = vector.broadcast %90 : vector<1x5x32xf32> to vector<2x5x32xf32>
    %92 = arith.mulf %88, %91 : vector<2x5x32xf32>
    %cst_48 = arith.constant dense<0.000000e+00> : vector<2x5xf32>
    %93 = vector.multi_reduction <add>, %92, %cst_48 [2] : vector<2x5x32xf32> to vector<2x5xf32>
    %c0_49 = arith.constant 0 : index
    %c0_50 = arith.constant 0 : index
    %94 = vector.load %arg19[%c0_49, %c0_50] : memref<5x32xf32, #tpu.memory_space<vmem>>, vector<5x32xf32>
    %95 = vector.shape_cast %94 : vector<5x32xf32> to vector<1x5x32xf32>
    %96 = vector.broadcast %95 : vector<1x5x32xf32> to vector<2x5x32xf32>
    %97 = arith.mulf %88, %96 : vector<2x5x32xf32>
    %cst_51 = arith.constant dense<0.000000e+00> : vector<2x5xf32>
    %98 = vector.multi_reduction <add>, %97, %cst_51 [2] : vector<2x5x32xf32> to vector<2x5xf32>
    %cst_52 = arith.constant 0.000000e+00 : f32
    %99 = vector.broadcast %cst_52 : f32 to vector<2x3xf32>
    %100 = tpu.concatenate %93, %99 in 1 : vector<2x5xf32>, vector<2x3xf32> -> vector<2x8xf32>
    %101 = tpu.concatenate %98, %99 in 1 : vector<2x5xf32>, vector<2x3xf32> -> vector<2x8xf32>
    %c0_53 = arith.constant 0 : index
    %c0_54 = arith.constant 0 : index
    %102 = vector.load %arg4[%c0_53, %c0_54] : memref<2x32xf32, #tpu.memory_space<vmem>>, vector<2x32xf32>
    %103 = arith.truncf %102 : vector<2x32xf32> to vector<2x32xbf16>
    %c0_55 = arith.constant 0 : index
    %c0_56 = arith.constant 0 : index
    %104 = vector.load %arg13[%c0_55, %c0_56] : memref<32x24xbf16, #tpu.memory_space<vmem>>, vector<32x24xbf16>
    %cst_57 = arith.constant dense<0.000000e+00> : vector<2x24xf32>
    %105 = tpu.matmul %103, %104, %cst_57 {dimension_numbers = #tpu.dot_dimension_numbers<[1], [0], [0], [1], [0, 0, 1, 1], [], []>} : vector<2x32xbf16>, vector<32x24xbf16>, vector<2x24xf32> -> vector<2x24xf32>
    %c0_58 = arith.constant 0 : index
    %c0_59 = arith.constant 0 : index
    %106 = vector.load %arg14[%c0_58, %c0_59] : memref<1x24xf32, #tpu.memory_space<vmem>>, vector<1x24xf32>
    %107 = vector.broadcast %106 : vector<1x24xf32> to vector<2x24xf32>
    %108 = arith.addf %105, %107 : vector<2x24xf32>
    %109 = vector.extract_strided_slice %108 {offsets = [0, 0], sizes = [2, 8], strides = [1, 1]} : vector<2x24xf32> to vector<2x8xf32>
    %110 = arith.negf %109 : vector<2x8xf32>
    %111 = math.exp %110 : vector<2x8xf32>
    %cst_60 = arith.constant 1.000000e+00 : f32
    %112 = vector.broadcast %cst_60 : f32 to vector<2x8xf32>
    %113 = arith.addf %112, %111 : vector<2x8xf32>
    %114 = arith.divf %112, %113 : vector<2x8xf32>
    %115 = vector.extract_strided_slice %108 {offsets = [0, 8], sizes = [2, 8], strides = [1, 1]} : vector<2x24xf32> to vector<2x8xf32>
    %116 = arith.mulf %114, %115 : vector<2x8xf32>
    %117 = vector.extract_strided_slice %108 {offsets = [0, 16], sizes = [2, 8], strides = [1, 1]} : vector<2x24xf32> to vector<2x8xf32>
    %118 = arith.mulf %114, %117 : vector<2x8xf32>
    %119 = arith.addf %35, %64 : vector<2x32xf32>
    %120 = arith.addf %119, %73 : vector<2x32xf32>
    %121 = arith.addf %120, %102 : vector<2x32xf32>
    %cst_61 = arith.constant 2.500000e-01 : f32
    %122 = vector.broadcast %cst_61 : f32 to vector<2x32xf32>
    %123 = arith.mulf %121, %122 : vector<2x32xf32>
    %124 = arith.truncf %123 : vector<2x32xf32> to vector<2x32xbf16>
    %c0_62 = arith.constant 0 : index
    %c0_63 = arith.constant 0 : index
    %125 = vector.load %arg15[%c0_62, %c0_63] : memref<32x16xbf16, #tpu.memory_space<vmem>>, vector<32x16xbf16>
    %cst_64 = arith.constant dense<0.000000e+00> : vector<2x16xf32>
    %126 = tpu.matmul %124, %125, %cst_64 {dimension_numbers = #tpu.dot_dimension_numbers<[1], [0], [0], [1], [0, 0, 1, 1], [], []>} : vector<2x32xbf16>, vector<32x16xbf16>, vector<2x16xf32> -> vector<2x16xf32>
    %127 = vector.extract_strided_slice %126 {offsets = [0, 0], sizes = [2, 8], strides = [1, 1]} : vector<2x16xf32> to vector<2x8xf32>
    %128 = arith.addf %25, %55 : vector<2x8xf32>
    %129 = arith.addf %128, %100 : vector<2x8xf32>
    %130 = arith.addf %129, %116 : vector<2x8xf32>
    %cst_65 = arith.constant 2.500000e-01 : f32
    %131 = vector.broadcast %cst_65 : f32 to vector<2x8xf32>
    %132 = arith.mulf %131, %130 : vector<2x8xf32>
    %133 = arith.addf %127, %132 : vector<2x8xf32>
    %c0_66 = arith.constant 0 : index
    %c0_67 = arith.constant 0 : index
    %134 = vector.load %arg20[%c0_66, %c0_67] : memref<1x8xf32, #tpu.memory_space<vmem>>, vector<1x8xf32>
    %135 = vector.broadcast %134 : vector<1x8xf32> to vector<2x8xf32>
    %136 = arith.addf %133, %135 : vector<2x8xf32>
    %137 = arith.negf %136 : vector<2x8xf32>
    %138 = math.exp %137 : vector<2x8xf32>
    %cst_68 = arith.constant 1.000000e+00 : f32
    %139 = vector.broadcast %cst_68 : f32 to vector<2x8xf32>
    %140 = arith.addf %139, %138 : vector<2x8xf32>
    %141 = arith.divf %139, %140 : vector<2x8xf32>
    %142 = vector.extract_strided_slice %126 {offsets = [0, 8], sizes = [2, 8], strides = [1, 1]} : vector<2x16xf32> to vector<2x8xf32>
    %143 = arith.addf %31, %61 : vector<2x8xf32>
    %144 = arith.addf %143, %101 : vector<2x8xf32>
    %145 = arith.addf %144, %118 : vector<2x8xf32>
    %cst_69 = arith.constant 2.500000e-01 : f32
    %146 = vector.broadcast %cst_69 : f32 to vector<2x8xf32>
    %147 = arith.mulf %146, %145 : vector<2x8xf32>
    %148 = arith.addf %142, %147 : vector<2x8xf32>
    %c0_70 = arith.constant 0 : index
    %c0_71 = arith.constant 0 : index
    %149 = vector.load %arg21[%c0_70, %c0_71] : memref<1x8xf32, #tpu.memory_space<vmem>>, vector<1x8xf32>
    %150 = vector.broadcast %149 : vector<1x8xf32> to vector<2x8xf32>
    %151 = arith.addf %148, %150 : vector<2x8xf32>
    %152 = tpu.concatenate %141, %151 in 1 : vector<2x8xf32>, vector<2x8xf32> -> vector<2x16xf32>
    %c0_72 = arith.constant 0 : index
    %c0_73 = arith.constant 0 : index
    %153 = vector.load %arg22[%c0_72, %c0_73] : memref<2x16xf32, #tpu.memory_space<vmem>>, vector<2x16xf32>
    tpu.vector_store %arg22[%c0_72, %c0_73], %152 {strides = array<i32>} : memref<2x16xf32, #tpu.memory_space<vmem>>, vector<2x16xf32>,
    return
  }
  func.func @transform_0(%arg0: i32) -> (i32, i32, i32) {
    %c0_i32 = arith.constant 0 : i32
    %c0_i32_0 = arith.constant 0 : i32
    %c0_i32_1 = arith.constant 0 : i32
    return %arg0, %c0_i32, %c0_i32_0 : i32, i32, i32
  }
  func.func @transform_1(%arg0: i32) -> (i32, i32, i32) {
    %c0_i32 = arith.constant 0 : i32
    %c0_i32_0 = arith.constant 0 : i32
    %c0_i32_1 = arith.constant 0 : i32
    return %arg0, %c0_i32, %c0_i32_0 : i32, i32, i32
  }
  func.func @transform_2(%arg0: i32) -> (i32, i32) {
    %c0_i32 = arith.constant 0 : i32
    %c0_i32_0 = arith.constant 0 : i32
    return %arg0, %c0_i32 : i32, i32
  }
  func.func @transform_3(%arg0: i32) -> (i32, i32) {
    %c0_i32 = arith.constant 0 : i32
    %c0_i32_0 = arith.constant 0 : i32
    return %arg0, %c0_i32 : i32, i32
  }
  func.func @transform_4(%arg0: i32) -> (i32, i32) {
    %c0_i32 = arith.constant 0 : i32
    %c0_i32_0 = arith.constant 0 : i32
    %c0_i32_1 = arith.constant 0 : i32
    return %c0_i32, %c0_i32_0 : i32, i32
  }
  func.func @transform_5(%arg0: i32) -> (i32, i32) {
    %c0_i32 = arith.constant 0 : i32
    %c0_i32_0 = arith.constant 0 : i32
    %c0_i32_1 = arith.constant 0 : i32
    return %c0_i32, %c0_i32_0 : i32, i32
  }
  func.func @transform_6(%arg0: i32) -> (i32, i32) {
    %c0_i32 = arith.constant 0 : i32
    %c0_i32_0 = arith.constant 0 : i32
    %c0_i32_1 = arith.constant 0 : i32
    return %c0_i32, %c0_i32_0 : i32, i32
  }
  func.func @transform_7(%arg0: i32) -> (i32, i32) {
    %c0_i32 = arith.constant 0 : i32
    %c0_i32_0 = arith.constant 0 : i32
    %c0_i32_1 = arith.constant 0 : i32
    return %c0_i32, %c0_i32_0 : i32, i32
  }
  func.func @transform_8(%arg0: i32) -> (i32, i32) {
    %c0_i32 = arith.constant 0 : i32
    %c0_i32_0 = arith.constant 0 : i32
    %c0_i32_1 = arith.constant 0 : i32
    return %c0_i32, %c0_i32_0 : i32, i32
  }
  func.func @transform_9(%arg0: i32) -> (i32, i32) {
    %c0_i32 = arith.constant 0 : i32
    %c0_i32_0 = arith.constant 0 : i32
    %c0_i32_1 = arith.constant 0 : i32
    return %c0_i32, %c0_i32_0 : i32, i32
  }
  func.func @transform_10(%arg0: i32) -> (i32, i32) {
    %c0_i32 = arith.constant 0 : i32
    %c0_i32_0 = arith.constant 0 : i32
    %c0_i32_1 = arith.constant 0 : i32
    return %c0_i32, %c0_i32_0 : i32, i32
  }
  func.func @transform_11(%arg0: i32) -> (i32, i32) {
    %c0_i32 = arith.constant 0 : i32
    %c0_i32_0 = arith.constant 0 : i32
    %c0_i32_1 = arith.constant 0 : i32
    return %c0_i32, %c0_i32_0 : i32, i32
  }
  func.func @transform_12(%arg0: i32) -> (i32, i32) {
    %c0_i32 = arith.constant 0 : i32
    %c0_i32_0 = arith.constant 0 : i32
    %c0_i32_1 = arith.constant 0 : i32
    return %c0_i32, %c0_i32_0 : i32, i32
  }
  func.func @transform_13(%arg0: i32) -> (i32, i32) {
    %c0_i32 = arith.constant 0 : i32
    %c0_i32_0 = arith.constant 0 : i32
    %c0_i32_1 = arith.constant 0 : i32
    return %c0_i32, %c0_i32_0 : i32, i32
  }
  func.func @transform_14(%arg0: i32) -> (i32, i32) {
    %c0_i32 = arith.constant 0 : i32
    %c0_i32_0 = arith.constant 0 : i32
    %c0_i32_1 = arith.constant 0 : i32
    return %c0_i32, %c0_i32_0 : i32, i32
  }
  func.func @transform_15(%arg0: i32) -> (i32, i32) {
    %c0_i32 = arith.constant 0 : i32
    %c0_i32_0 = arith.constant 0 : i32
    %c0_i32_1 = arith.constant 0 : i32
    return %c0_i32, %c0_i32_0 : i32, i32
  }
  func.func @transform_16(%arg0: i32) -> (i32, i32) {
    %c0_i32 = arith.constant 0 : i32
    %c0_i32_0 = arith.constant 0 : i32
    %c0_i32_1 = arith.constant 0 : i32
    return %c0_i32, %c0_i32_0 : i32, i32
  }
  func.func @transform_17(%arg0: i32) -> (i32, i32) {
    %c0_i32 = arith.constant 0 : i32
    %c0_i32_0 = arith.constant 0 : i32
    %c0_i32_1 = arith.constant 0 : i32
    return %c0_i32, %c0_i32_0 : i32, i32
  }
  func.func @transform_18(%arg0: i32) -> (i32, i32) {
    %c0_i32 = arith.constant 0 : i32
    %c0_i32_0 = arith.constant 0 : i32
    %c0_i32_1 = arith.constant 0 : i32
    return %c0_i32, %c0_i32_0 : i32, i32
  }
  func.func @transform_19(%arg0: i32) -> (i32, i32) {
    %c0_i32 = arith.constant 0 : i32
    %c0_i32_0 = arith.constant 0 : i32
    %c0_i32_1 = arith.constant 0 : i32
    return %c0_i32, %c0_i32_0 : i32, i32
  }
  func.func @transform_20(%arg0: i32) -> (i32, i32) {
    %c0_i32 = arith.constant 0 : i32
    %c0_i32_0 = arith.constant 0 : i32
    %c0_i32_1 = arith.constant 0 : i32
    return %c0_i32, %c0_i32_0 : i32, i32
  }
  func.func @transform_21(%arg0: i32) -> (i32, i32) {
    %c0_i32 = arith.constant 0 : i32
    %c0_i32_0 = arith.constant 0 : i32
    return %arg0, %c0_i32 : i32, i32
  }
}

</mosaic_0001>

<llo_original>
// kernel: tpu_custom_call.1
$region0: #{tpu_custom_call.1}
  #allocation0 [shape = 'u32[]', space=smem, size = 0x4, offset = 0x4, fixed_abs, tag = 'smem constant byte address 0x4 - core index']
  #allocation1 [shape = 'u32[72,128]{1,0:T(1,128)}', space=vmem, size = 0x9000, scoped, tag = 'internal scratch']
  %s0 = inlined_call_operand.vmem [shape: f32[2,8,768], index: 0, kind: input, shape index: {}]
  %s1 = inlined_call_operand.vmem [shape: f32[2,8,32], index: 1, kind: input, shape index: {}]
  %s2 = inlined_call_operand.vmem [shape: f32[2,32], index: 2, kind: input, shape index: {}]
  %s3 = inlined_call_operand.vmem [shape: f32[2,32], index: 3, kind: input, shape index: {}]
  %s4 = inlined_call_operand.vmem [shape: f32[1,32], index: 4, kind: input, shape index: {}]
  %s5 = inlined_call_operand.vmem [shape: f32[1,32], index: 5, kind: input, shape index: {}]
  %s6 = inlined_call_operand.vmem [shape: bf16[768,32], index: 6, kind: input, shape index: {}]
  %s7 = inlined_call_operand.vmem [shape: f32[1,32], index: 7, kind: input, shape index: {}]
  %s8 = inlined_call_operand.vmem [shape: bf16[32,24], index: 8, kind: input, shape index: {}]
  %s9 = inlined_call_operand.vmem [shape: f32[1,24], index: 9, kind: input, shape index: {}]
  %s10 = inlined_call_operand.vmem [shape: bf16[32,24], index: 10, kind: input, shape index: {}]
  %s11 = inlined_call_operand.vmem [shape: f32[1,24], index: 11, kind: input, shape index: {}]
  %s12 = inlined_call_operand.vmem [shape: bf16[32,24], index: 12, kind: input, shape index: {}]
  %s13 = inlined_call_operand.vmem [shape: f32[1,24], index: 13, kind: input, shape index: {}]
  %s14 = inlined_call_operand.vmem [shape: bf16[32,16], index: 14, kind: input, shape index: {}]
  %s15 = inlined_call_operand.vmem [shape: bf16[32,160], index: 15, kind: input, shape index: {}]
  %s16 = inlined_call_operand.vmem [shape: f32[1,160], index: 16, kind: input, shape index: {}]
  %s17 = inlined_call_operand.vmem [shape: f32[5,32], index: 17, kind: input, shape index: {}]
  %s18 = inlined_call_operand.vmem [shape: f32[5,32], index: 18, kind: input, shape index: {}]
  %s19 = inlined_call_operand.vmem [shape: f32[1,8], index: 19, kind: input, shape index: {}]
  %s20 = inlined_call_operand.vmem [shape: f32[1,8], index: 20, kind: input, shape index: {}]
  %s21 = inlined_call_operand.hbm [shape: f32[2,16], index: 21, kind: output, shape index: {}]
  %s22 = sld [smem:[#allocation0]]
  $region94: #{tpu_custom_call.1} parent=0
    _
  %s24 = ssub.s32 1, %s22
  %s25 = scalar_select 0, %s24, %s22
  $region1: #{tpu_custom_call.1} parent=0
    #allocation2 [shape = 'u8[1024]{0}', space=vmem, size = 0x400, scoped, tag = 'output window, operand 0, single buffered']
    #allocation3 [shape = 's32[1]{0}', space=sflag, size = 0x4, scoped, tag = 'scoped memory for tpu_custom_call.1']
    %26 = vsyncpa [#allocation3], 0
    // Predicated region
    $region2: #{tpu_custom_call.1} parent=1 // pred_check
      _
    $region3: #{tpu_custom_call.1} parent=1 // pred_check_branch
      %28 = sbr.rel (0) target = $region5
    $region4: #{tpu_custom_call.1} parent=1 // pred_region
      _
    $region5: #{tpu_custom_call.1} parent=1 // pred_fallthru
      _
    // Predicated region
    $region6: #{tpu_custom_call.1} parent=1 // pred_check
      _
    $region7: #{tpu_custom_call.1} parent=1 // pred_check_branch
      %30 = sbr.rel (0) target = $region9
    $region8: #{tpu_custom_call.1} parent=1 // pred_region
      _
    $region9: #{tpu_custom_call.1} parent=1 // pred_fallthru
      _
    // Predicated region
    $region10: #{tpu_custom_call.1} parent=1 // pred_check
      _
    $region11: #{tpu_custom_call.1} parent=1 // pred_check_branch
      %32 = sbr.rel (0) target = $region13
    $region12: #{tpu_custom_call.1} parent=1 // pred_region
      _
    $region13: #{tpu_custom_call.1} parent=1 // pred_fallthru
      _
    // Predicated region
    $region14: #{tpu_custom_call.1} parent=1 // pred_check
      _
    $region15: #{tpu_custom_call.1} parent=1 // pred_check_branch
      %34 = sbr.rel (0) target = $region17
    $region16: #{tpu_custom_call.1} parent=1 // pred_region
      _
    $region17: #{tpu_custom_call.1} parent=1 // pred_fallthru
      _
    // Predicated region
    $region18: #{tpu_custom_call.1} parent=1 // pred_check
      _
    $region19: #{tpu_custom_call.1} parent=1 // pred_check_branch
      %36 = sbr.rel (0) target = $region21
    $region20: #{tpu_custom_call.1} parent=1 // pred_region
      _
    $region21: #{tpu_custom_call.1} parent=1 // pred_fallthru
      _
    // Predicated region
    $region22: #{tpu_custom_call.1} parent=1 // pred_check
      _
    $region23: #{tpu_custom_call.1} parent=1 // pred_check_branch
      %38 = sbr.rel (0) target = $region25
    $region24: #{tpu_custom_call.1} parent=1 // pred_region
      _
    $region25: #{tpu_custom_call.1} parent=1 // pred_fallthru
      _
    // Predicated region
    $region26: #{tpu_custom_call.1} parent=1 // pred_check
      _
    $region27: #{tpu_custom_call.1} parent=1 // pred_check_branch
      %40 = sbr.rel (0) target = $region29
    $region28: #{tpu_custom_call.1} parent=1 // pred_region
      _
    $region29: #{tpu_custom_call.1} parent=1 // pred_fallthru
      _
    // Predicated region
    $region30: #{tpu_custom_call.1} parent=1 // pred_check
      _
    $region31: #{tpu_custom_call.1} parent=1 // pred_check_branch
      %42 = sbr.rel (0) target = $region33
    $region32: #{tpu_custom_call.1} parent=1 // pred_region
      _
    $region33: #{tpu_custom_call.1} parent=1 // pred_fallthru
      _
    // Predicated region
    $region34: #{tpu_custom_call.1} parent=1 // pred_check
      _
    $region35: #{tpu_custom_call.1} parent=1 // pred_check_branch
      %44 = sbr.rel (0) target = $region37
    $region36: #{tpu_custom_call.1} parent=1 // pred_region
      _
    $region37: #{tpu_custom_call.1} parent=1 // pred_fallthru
      _
    // Predicated region
    $region38: #{tpu_custom_call.1} parent=1 // pred_check
      _
    $region39: #{tpu_custom_call.1} parent=1 // pred_check_branch
      %46 = sbr.rel (0) target = $region41
    $region40: #{tpu_custom_call.1} parent=1 // pred_region
      _
    $region41: #{tpu_custom_call.1} parent=1 // pred_fallthru
      _
    // Predicated region
    $region42: #{tpu_custom_call.1} parent=1 // pred_check
      _
    $region43: #{tpu_custom_call.1} parent=1 // pred_check_branch
      %48 = sbr.rel (0) target = $region45
    $region44: #{tpu_custom_call.1} parent=1 // pred_region
      _
    $region45: #{tpu_custom_call.1} parent=1 // pred_fallthru
      _
    // Predicated region
    $region46: #{tpu_custom_call.1} parent=1 // pred_check
      _
    $region47: #{tpu_custom_call.1} parent=1 // pred_check_branch
      %50 = sbr.rel (0) target = $region49
    $region48: #{tpu_custom_call.1} parent=1 // pred_region
      _
    $region49: #{tpu_custom_call.1} parent=1 // pred_fallthru
      _
    // Predicated region
    $region50: #{tpu_custom_call.1} parent=1 // pred_check
      _
    $region51: #{tpu_custom_call.1} parent=1 // pred_check_branch
      %52 = sbr.rel (0) target = $region53
    $region52: #{tpu_custom_call.1} parent=1 // pred_region
      _
    $region53: #{tpu_custom_call.1} parent=1 // pred_fallthru
      _
    // Predicated region
    $region54: #{tpu_custom_call.1} parent=1 // pred_check
      _
    $region55: #{tpu_custom_call.1} parent=1 // pred_check_branch
      %54 = sbr.rel (0) target = $region57
    $region56: #{tpu_custom_call.1} parent=1 // pred_region
      _
    $region57: #{tpu_custom_call.1} parent=1 // pred_fallthru
      _
    // Predicated region
    $region58: #{tpu_custom_call.1} parent=1 // pred_check
      _
    $region59: #{tpu_custom_call.1} parent=1 // pred_check_branch
      %56 = sbr.rel (0) target = $region61
    $region60: #{tpu_custom_call.1} parent=1 // pred_region
      _
    $region61: #{tpu_custom_call.1} parent=1 // pred_fallthru
      _
    // Predicated region
    $region62: #{tpu_custom_call.1} parent=1 // pred_check
      _
    $region63: #{tpu_custom_call.1} parent=1 // pred_check_branch
      %58 = sbr.rel (0) target = $region65
    $region64: #{tpu_custom_call.1} parent=1 // pred_region
      _
    $region65: #{tpu_custom_call.1} parent=1 // pred_fallthru
      _
    // Predicated region
    $region66: #{tpu_custom_call.1} parent=1 // pred_check
      _
    $region67: #{tpu_custom_call.1} parent=1 // pred_check_branch
      %60 = sbr.rel (0) target = $region69
    $region68: #{tpu_custom_call.1} parent=1 // pred_region
      _
    $region69: #{tpu_custom_call.1} parent=1 // pred_fallthru
      _
    // Predicated region
    $region70: #{tpu_custom_call.1} parent=1 // pred_check
      _
    $region71: #{tpu_custom_call.1} parent=1 // pred_check_branch
      %62 = sbr.rel (0) target = $region73
    $region72: #{tpu_custom_call.1} parent=1 // pred_region
      _
    $region73: #{tpu_custom_call.1} parent=1 // pred_fallthru
      _
    // Predicated region
    $region74: #{tpu_custom_call.1} parent=1 // pred_check
      _
    $region75: #{tpu_custom_call.1} parent=1 // pred_check_branch
      %64 = sbr.rel (0) target = $region77
    $region76: #{tpu_custom_call.1} parent=1 // pred_region
      _
    $region77: #{tpu_custom_call.1} parent=1 // pred_fallthru
      _
    // Predicated region
    $region78: #{tpu_custom_call.1} parent=1 // pred_check
      _
    $region79: #{tpu_custom_call.1} parent=1 // pred_check_branch
      %66 = sbr.rel (0) target = $region81
    $region80: #{tpu_custom_call.1} parent=1 // pred_region
      _
    $region81: #{tpu_custom_call.1} parent=1 // pred_fallthru
      _
    // Predicated region
    $region82: #{tpu_custom_call.1} parent=1 // pred_check
      _
    $region83: #{tpu_custom_call.1} parent=1 // pred_check_branch
      %68 = sbr.rel (0) target = $region85
    $region84: #{tpu_custom_call.1} parent=1 // pred_region
      _
    $region85: #{tpu_custom_call.1} parent=1 // pred_fallthru
      _
    %v70 = vld [vmem:[%s0] sm:$0xff]
    %v71 = vld [vmem:[%s0 + $0x8] sm:$0xff]
    %v72 = vld [vmem:[%s0 + $0x10] sm:$0xff]
    %v73 = vld [vmem:[%s0 + $0x18] sm:$0xff]
    %v74 = vld [vmem:[%s0 + $0x20] sm:$0xff]
    %v75 = vld [vmem:[%s0 + $0x28] sm:$0xff]
    %v76 = vld [vmem:[%s0 + $0x30] sm:$0xff]
    %v77 = vld [vmem:[%s0 + $0x38] sm:$0xff]
    %v78 = vld [vmem:[%s0 + $0x40] sm:$0xff]
    %v79 = vld [vmem:[%s0 + $0x48] sm:$0xff]
    %v80 = vld [vmem:[%s0 + $0x50] sm:$0xff]
    %v81 = vld [vmem:[%s0 + $0x58] sm:$0xff]
    %v82 = vpack.c.bf16 %v76, %v70
    %v83 = vpack.c.bf16 %v77, %v71
    %v84 = vpack.c.bf16 %v78, %v72
    %v85 = vpack.c.bf16 %v79, %v73
    %v86 = vpack.c.bf16 %v80, %v74
    %v87 = vpack.c.bf16 %v81, %v75
    %v88 = vld [vmem:[%s6] sm:$0xf]
    %v89 = vld [vmem:[%s6 + $0x4] sm:$0xf]
    %v90 = vld [vmem:[%s6 + $0x8] sm:$0xf]
    %v91 = vld [vmem:[%s6 + $0xc] sm:$0xf]
    %v92 = vld [vmem:[%s6 + $0x10] sm:$0xf]
    %v93 = vld [vmem:[%s6 + $0x14] sm:$0xf]
    %v94 = vld [vmem:[%s6 + $0x18] sm:$0xf]
    %v95 = vld [vmem:[%s6 + $0x1c] sm:$0xf]
    %v96 = vld [vmem:[%s6 + $0x20] sm:$0xf]
    %v97 = vld [vmem:[%s6 + $0x24] sm:$0xf]
    %v98 = vld [vmem:[%s6 + $0x28] sm:$0xf]
    %v99 = vld [vmem:[%s6 + $0x2c] sm:$0xf]
    %v100 = vld [vmem:[%s6 + $0x30] sm:$0xf]
    %v101 = vld [vmem:[%s6 + $0x34] sm:$0xf]
    %v102 = vld [vmem:[%s6 + $0x38] sm:$0xf]
    %v103 = vld [vmem:[%s6 + $0x3c] sm:$0xf]
    %v104 = vld [vmem:[%s6 + $0x40] sm:$0xf]
    %v105 = vld [vmem:[%s6 + $0x44] sm:$0xf]
    %v106 = vld [vmem:[%s6 + $0x48] sm:$0xf]
    %v107 = vld [vmem:[%s6 + $0x4c] sm:$0xf]
    %v108 = vld [vmem:[%s6 + $0x50] sm:$0xf]
    %v109 = vld [vmem:[%s6 + $0x54] sm:$0xf]
    %v110 = vld [vmem:[%s6 + $0x58] sm:$0xf]
    %v111 = vld [vmem:[%s6 + $0x5c] sm:$0xf]
    %v112 = vld [vmem:[%s6 + $0x60] sm:$0xf]
    %v113 = vld [vmem:[%s6 + $0x64] sm:$0xf]
    %v114 = vld [vmem:[%s6 + $0x68] sm:$0xf]
    %v115 = vld [vmem:[%s6 + $0x6c] sm:$0xf]
    %v116 = vld [vmem:[%s6 + $0x70] sm:$0xf]
    %v117 = vld [vmem:[%s6 + $0x74] sm:$0xf]
    %v118 = vld [vmem:[%s6 + $0x78] sm:$0xf]
    %v119 = vld [vmem:[%s6 + $0x7c] sm:$0xf]
    %v120 = vld [vmem:[%s6 + $0x80] sm:$0xf]
    %v121 = vld [vmem:[%s6 + $0x84] sm:$0xf]
    %v122 = vld [vmem:[%s6 + $0x88] sm:$0xf]
    %v123 = vld [vmem:[%s6 + $0x8c] sm:$0xf]
    %v124 = vld [vmem:[%s6 + $0x90] sm:$0xf]
    %v125 = vld [vmem:[%s6 + $0x94] sm:$0xf]
    %v126 = vld [vmem:[%s6 + $0x98] sm:$0xf]
    %v127 = vld [vmem:[%s6 + $0x9c] sm:$0xf]
    %v128 = vld [vmem:[%s6 + $0xa0] sm:$0xf]
    %v129 = vld [vmem:[%s6 + $0xa4] sm:$0xf]
    %v130 = vld [vmem:[%s6 + $0xa8] sm:$0xf]
    %v131 = vld [vmem:[%s6 + $0xac] sm:$0xf]
    %v132 = vld [vmem:[%s6 + $0xb0] sm:$0xf]
    %v133 = vld [vmem:[%s6 + $0xb4] sm:$0xf]
    %v134 = vld [vmem:[%s6 + $0xb8] sm:$0xf]
    %v135 = vld [vmem:[%s6 + $0xbc] sm:$0xf]
    %v136 = vld [vmem:[%s6 + $0xc0] sm:$0xf]
    %v137 = vld [vmem:[%s6 + $0xc4] sm:$0xf]
    %v138 = vld [vmem:[%s6 + $0xc8] sm:$0xf]
    %v139 = vld [vmem:[%s6 + $0xcc] sm:$0xf]
    %v140 = vld [vmem:[%s6 + $0xd0] sm:$0xf]
    %v141 = vld [vmem:[%s6 + $0xd4] sm:$0xf]
    %v142 = vld [vmem:[%s6 + $0xd8] sm:$0xf]
    %v143 = vld [vmem:[%s6 + $0xdc] sm:$0xf]
    %v144 = vld [vmem:[%s6 + $0xe0] sm:$0xf]
    %v145 = vld [vmem:[%s6 + $0xe4] sm:$0xf]
    %v146 = vld [vmem:[%s6 + $0xe8] sm:$0xf]
    %v147 = vld [vmem:[%s6 + $0xec] sm:$0xf]
    %v148 = vld [vmem:[%s6 + $0xf0] sm:$0xf]
    %v149 = vld [vmem:[%s6 + $0xf4] sm:$0xf]
    %v150 = vld [vmem:[%s6 + $0xf8] sm:$0xf]
    %v151 = vld [vmem:[%s6 + $0xfc] sm:$0xf]
    %v152 = vld [vmem:[%s6 + $0x100] sm:$0xf]
    %v153 = vld [vmem:[%s6 + $0x104] sm:$0xf]
    %v154 = vld [vmem:[%s6 + $0x108] sm:$0xf]
    %v155 = vld [vmem:[%s6 + $0x10c] sm:$0xf]
    %v156 = vld [vmem:[%s6 + $0x110] sm:$0xf]
    %v157 = vld [vmem:[%s6 + $0x114] sm:$0xf]
    %v158 = vld [vmem:[%s6 + $0x118] sm:$0xf]
    %v159 = vld [vmem:[%s6 + $0x11c] sm:$0xf]
    %v160 = vld [vmem:[%s6 + $0x120] sm:$0xf]
    %v161 = vld [vmem:[%s6 + $0x124] sm:$0xf]
    %v162 = vld [vmem:[%s6 + $0x128] sm:$0xf]
    %v163 = vld [vmem:[%s6 + $0x12c] sm:$0xf]
    %v164 = vld [vmem:[%s6 + $0x130] sm:$0xf]
    %v165 = vld [vmem:[%s6 + $0x134] sm:$0xf]
    %v166 = vld [vmem:[%s6 + $0x138] sm:$0xf]
    %v167 = vld [vmem:[%s6 + $0x13c] sm:$0xf]
    %v168 = vld [vmem:[%s6 + $0x140] sm:$0xf]
    %v169 = vld [vmem:[%s6 + $0x144] sm:$0xf]
    %v170 = vld [vmem:[%s6 + $0x148] sm:$0xf]
    %v171 = vld [vmem:[%s6 + $0x14c] sm:$0xf]
    %v172 = vld [vmem:[%s6 + $0x150] sm:$0xf]
    %v173 = vld [vmem:[%s6 + $0x154] sm:$0xf]
    %v174 = vld [vmem:[%s6 + $0x158] sm:$0xf]
    %v175 = vld [vmem:[%s6 + $0x15c] sm:$0xf]
    %v176 = vld [vmem:[%s6 + $0x160] sm:$0xf]
    %v177 = vld [vmem:[%s6 + $0x164] sm:$0xf]
    %v178 = vld [vmem:[%s6 + $0x168] sm:$0xf]
    %v179 = vld [vmem:[%s6 + $0x16c] sm:$0xf]
    %v180 = vld [vmem:[%s6 + $0x170] sm:$0xf]
    %v181 = vld [vmem:[%s6 + $0x174] sm:$0xf]
    %v182 = vld [vmem:[%s6 + $0x178] sm:$0xf]
    %v183 = vld [vmem:[%s6 + $0x17c] sm:$0xf]
    %v184 = vld [vmem:[%s7] sm:$0x1]
    %v186 = vperm.slane %v184, 0
    %v284 = vunpack.c.l.b16 %v88
    %v285 = vunpack.c.l.b16 %v89
    %v286 = vunpack.c.l.b16 %v90
    %v287 = vunpack.c.l.b16 %v91
    %v288 = vunpack.c.l.b16 %v92
    %v289 = vunpack.c.l.b16 %v93
    %v290 = vunpack.c.l.b16 %v94
    %v291 = vunpack.c.l.b16 %v95
    %v292 = vunpack.c.l.b16 %v96
    %v293 = vunpack.c.l.b16 %v97
    %v294 = vunpack.c.l.b16 %v98
    %v295 = vunpack.c.l.b16 %v99
    %v296 = vunpack.c.l.b16 %v100
    %v297 = vunpack.c.l.b16 %v101
    %v298 = vunpack.c.l.b16 %v102
    %v299 = vunpack.c.l.b16 %v103
    %v300 = vunpack.c.l.b16 %v104
    %v301 = vunpack.c.l.b16 %v105
    %v302 = vunpack.c.l.b16 %v106
    %v303 = vunpack.c.l.b16 %v107
    %v304 = vunpack.c.l.b16 %v108
    %v305 = vunpack.c.l.b16 %v109
    %v306 = vunpack.c.l.b16 %v110
    %v307 = vunpack.c.l.b16 %v111
    %v308 = vunpack.c.l.b16 %v112
    %v309 = vunpack.c.l.b16 %v113
    %v310 = vunpack.c.l.b16 %v114
    %v311 = vunpack.c.l.b16 %v115
    %v312 = vunpack.c.l.b16 %v116
    %v313 = vunpack.c.l.b16 %v117
    %v314 = vunpack.c.l.b16 %v118
    %v315 = vunpack.c.l.b16 %v119
    %v316 = vunpack.c.l.b16 %v120
    %v317 = vunpack.c.l.b16 %v121
    %v318 = vunpack.c.l.b16 %v122
    %v319 = vunpack.c.l.b16 %v123
    %v320 = vunpack.c.l.b16 %v124
    %v321 = vunpack.c.l.b16 %v125
    %v322 = vunpack.c.l.b16 %v126
    %v323 = vunpack.c.l.b16 %v127
    %v324 = vunpack.c.l.b16 %v128
    %v325 = vunpack.c.l.b16 %v129
    %v326 = vunpack.c.l.b16 %v130
    %v327 = vunpack.c.l.b16 %v131
    %v328 = vunpack.c.l.b16 %v132
    %v329 = vunpack.c.l.b16 %v133
    %v330 = vunpack.c.l.b16 %v134
    %v331 = vunpack.c.l.b16 %v135
    %v332 = vunpack.c.l.b16 %v136
    %v333 = vunpack.c.l.b16 %v137
    %v334 = vunpack.c.l.b16 %v138
    %v335 = vunpack.c.l.b16 %v139
    %v336 = vunpack.c.l.b16 %v140
    %v337 = vunpack.c.l.b16 %v141
    %v338 = vunpack.c.l.b16 %v142
    %v339 = vunpack.c.l.b16 %v143
    %v340 = vunpack.c.l.b16 %v144
    %v341 = vunpack.c.l.b16 %v145
    %v342 = vunpack.c.l.b16 %v146
    %v343 = vunpack.c.l.b16 %v147
    %v344 = vunpack.c.l.b16 %v148
    %v345 = vunpack.c.l.b16 %v149
    %v346 = vunpack.c.l.b16 %v150
    %v347 = vunpack.c.l.b16 %v151
    %v348 = vunpack.c.l.b16 %v152
    %v349 = vunpack.c.l.b16 %v153
    %v350 = vunpack.c.l.b16 %v154
    %v351 = vunpack.c.l.b16 %v155
    %v352 = vunpack.c.l.b16 %v156
    %v353 = vunpack.c.l.b16 %v157
    %v354 = vunpack.c.l.b16 %v158
    %v355 = vunpack.c.l.b16 %v159
    %v356 = vunpack.c.l.b16 %v160
    %v357 = vunpack.c.l.b16 %v161
    %v358 = vunpack.c.l.b16 %v162
    %v359 = vunpack.c.l.b16 %v163
    %v360 = vunpack.c.l.b16 %v164
    %v361 = vunpack.c.l.b16 %v165
    %v362 = vunpack.c.l.b16 %v166
    %v363 = vunpack.c.l.b16 %v167
    %v364 = vunpack.c.l.b16 %v168
    %v365 = vunpack.c.l.b16 %v169
    %v366 = vunpack.c.l.b16 %v170
    %v367 = vunpack.c.l.b16 %v171
    %v368 = vunpack.c.l.b16 %v172
    %v369 = vunpack.c.l.b16 %v173
    %v370 = vunpack.c.l.b16 %v174
    %v371 = vunpack.c.l.b16 %v175
    %v372 = vunpack.c.l.b16 %v176
    %v373 = vunpack.c.l.b16 %v177
    %v374 = vunpack.c.l.b16 %v178
    %v375 = vunpack.c.l.b16 %v179
    %v376 = vunpack.c.l.b16 %v180
    %v377 = vunpack.c.l.b16 %v181
    %v378 = vunpack.c.l.b16 %v182
    %v379 = vunpack.c.l.b16 %v183
    %v380 = vpack.c.b16 %v285, %v284
    %v381 = vpack.c.b16 %v287, %v286
    %v382 = vpack.c.b16 %v289, %v288
    %v383 = vpack.c.b16 %v291, %v290
    %v384 = vpack.c.b16 %v293, %v292
    %v385 = vpack.c.b16 %v295, %v294
    %v386 = vpack.c.b16 %v297, %v296
    %v387 = vpack.c.b16 %v299, %v298
    %v388 = vpack.c.b16 %v301, %v300
    %v389 = vpack.c.b16 %v303, %v302
    %v390 = vpack.c.b16 %v305, %v304
    %v391 = vpack.c.b16 %v307, %v306
    %v392 = vpack.c.b16 %v309, %v308
    %v393 = vpack.c.b16 %v311, %v310
    %v394 = vpack.c.b16 %v313, %v312
    %v395 = vpack.c.b16 %v315, %v314
    %v396 = vpack.c.b16 %v317, %v316
    %v397 = vpack.c.b16 %v319, %v318
    %v398 = vpack.c.b16 %v321, %v320
    %v399 = vpack.c.b16 %v323, %v322
    %v400 = vpack.c.b16 %v325, %v324
    %v401 = vpack.c.b16 %v327, %v326
    %v402 = vpack.c.b16 %v329, %v328
    %v403 = vpack.c.b16 %v331, %v330
    %v404 = vpack.c.b16 %v333, %v332
    %v405 = vpack.c.b16 %v335, %v334
    %v406 = vpack.c.b16 %v337, %v336
    %v407 = vpack.c.b16 %v339, %v338
    %v408 = vpack.c.b16 %v341, %v340
    %v409 = vpack.c.b16 %v343, %v342
    %v410 = vpack.c.b16 %v345, %v344
    %v411 = vpack.c.b16 %v347, %v346
    %v412 = vpack.c.b16 %v349, %v348
    %v413 = vpack.c.b16 %v351, %v350
    %v414 = vpack.c.b16 %v353, %v352
    %v415 = vpack.c.b16 %v355, %v354
    %v416 = vpack.c.b16 %v357, %v356
    %v417 = vpack.c.b16 %v359, %v358
    %v418 = vpack.c.b16 %v361, %v360
    %v419 = vpack.c.b16 %v363, %v362
    %v420 = vpack.c.b16 %v365, %v364
    %v421 = vpack.c.b16 %v367, %v366
    %v422 = vpack.c.b16 %v369, %v368
    %v423 = vpack.c.b16 %v371, %v370
    %v424 = vpack.c.b16 %v373, %v372
    %v425 = vpack.c.b16 %v375, %v374
    %v426 = vpack.c.b16 %v377, %v376
    %v427 = vpack.c.b16 %v379, %v378
    %476 = vmatpush.bf16.msra.mxu0 %v387
    %477 = vmatpush.bf16.msra.mxu0 %v386
    %478 = vmatpush.bf16.msra.mxu0 %v385
    %479 = vmatpush.bf16.msra.mxu0 %v384
    %480 = vmatpush.bf16.msra.mxu0 %v383
    %481 = vmatpush.bf16.msra.mxu0 %v382
    %482 = vmatpush.bf16.msra.mxu0 %v381
    %483 = vmatpush.bf16.msra.mxu0 %v380
    %484 = vmatmul.bf16.gmra.mxu0 %v82
    %v485 = vpop.f32.mrf.mxu0
    %v486 = vadd.f32 %v186, %v485
    %v487 = vpop.f32.mrf.mxu0
    %v488 = vadd.f32 %v186, %v487
    %489 = vdwg.mxu0
    %490 = vmatpush.bf16.msra.mxu0 %v395
    %491 = vmatpush.bf16.msra.mxu0 %v394
    %492 = vmatpush.bf16.msra.mxu0 %v393
    %493 = vmatpush.bf16.msra.mxu0 %v392
    %494 = vmatpush.bf16.msra.mxu0 %v391
    %495 = vmatpush.bf16.msra.mxu0 %v390
    %496 = vmatpush.bf16.msra.mxu0 %v389
    %497 = vmatpush.bf16.msra.mxu0 %v388
    %498 = vmatmul.bf16.gmra.mxu0 %v83
    %v499 = vpop.f32.mrf.mxu0
    %v500 = vadd.f32 %v486, %v499
    %v501 = vpop.f32.mrf.mxu0
    %v502 = vadd.f32 %v488, %v501
    %503 = vdwg.mxu0
    %504 = vmatpush.bf16.msra.mxu0 %v403
    %505 = vmatpush.bf16.msra.mxu0 %v402
    %506 = vmatpush.bf16.msra.mxu0 %v401
    %507 = vmatpush.bf16.msra.mxu0 %v400
    %508 = vmatpush.bf16.msra.mxu0 %v399
    %509 = vmatpush.bf16.msra.mxu0 %v398
    %510 = vmatpush.bf16.msra.mxu0 %v397
    %511 = vmatpush.bf16.msra.mxu0 %v396
    %512 = vmatmul.bf16.gmra.mxu0 %v84
    %v513 = vpop.f32.mrf.mxu0
    %v514 = vadd.f32 %v500, %v513
    %v515 = vpop.f32.mrf.mxu0
    %v516 = vadd.f32 %v502, %v515
    %517 = vdwg.mxu0
    %518 = vmatpush.bf16.msra.mxu0 %v411
    %519 = vmatpush.bf16.msra.mxu0 %v410
    %520 = vmatpush.bf16.msra.mxu0 %v409
    %521 = vmatpush.bf16.msra.mxu0 %v408
    %522 = vmatpush.bf16.msra.mxu0 %v407
    %523 = vmatpush.bf16.msra.mxu0 %v406
    %524 = vmatpush.bf16.msra.mxu0 %v405
    %525 = vmatpush.bf16.msra.mxu0 %v404
    %526 = vmatmul.bf16.gmra.mxu0 %v85
    %v527 = vpop.f32.mrf.mxu0
    %v528 = vadd.f32 %v514, %v527
    %v529 = vpop.f32.mrf.mxu0
    %v530 = vadd.f32 %v516, %v529
    %531 = vdwg.mxu0
    %532 = vmatpush.bf16.msra.mxu0 %v419
    %533 = vmatpush.bf16.msra.mxu0 %v418
    %534 = vmatpush.bf16.msra.mxu0 %v417
    %535 = vmatpush.bf16.msra.mxu0 %v416
    %536 = vmatpush.bf16.msra.mxu0 %v415
    %537 = vmatpush.bf16.msra.mxu0 %v414
    %538 = vmatpush.bf16.msra.mxu0 %v413
    %539 = vmatpush.bf16.msra.mxu0 %v412
    %540 = vmatmul.bf16.gmra.mxu0 %v86
    %v541 = vpop.f32.mrf.mxu0
    %v542 = vadd.f32 %v528, %v541
    %v543 = vpop.f32.mrf.mxu0
    %v544 = vadd.f32 %v530, %v543
    %545 = vdwg.mxu0
    %546 = vmatpush.bf16.msra.mxu0 %v427
    %547 = vmatpush.bf16.msra.mxu0 %v426
    %548 = vmatpush.bf16.msra.mxu0 %v425
    %549 = vmatpush.bf16.msra.mxu0 %v424
    %550 = vmatpush.bf16.msra.mxu0 %v423
    %551 = vmatpush.bf16.msra.mxu0 %v422
    %552 = vmatpush.bf16.msra.mxu0 %v421
    %553 = vmatpush.bf16.msra.mxu0 %v420
    %554 = vmatmul.bf16.gmra.mxu0 %v87
    %v555 = vpop.f32.mrf.mxu0
    %v556 = vadd.f32 %v542, %v555
    %v557 = vpop.f32.mrf.mxu0
    %v558 = vadd.f32 %v544, %v557
    %559 = vdwg.mxu0
    %v560 = vpack.c.bf16 %v558, %v556
    %v561 = vld [vmem:[%s8] sm:$0xf]
    %v562 = vld [vmem:[%s8 + $0x4] sm:$0xf]
    %v563 = vld [vmem:[%s8 + $0x8] sm:$0xf]
    %v564 = vld [vmem:[%s8 + $0xc] sm:$0xf]
    %v565 = vld [vmem:[%s9] sm:$0x1]
    %v567 = vperm.slane %v565, 0
    %v573 = vunpack.c.l.b16 %v561
    %v574 = vunpack.c.l.b16 %v562
    %v575 = vunpack.c.l.b16 %v563
    %v576 = vunpack.c.l.b16 %v564
    %v577 = vpack.c.b16 %v574, %v573
    %v578 = vpack.c.b16 %v576, %v575
    %vm581 = vcmask 261120
    %v583 = vsel %vm581, %v560, 0
    %585 = vmatpush.bf16.msra.mxu0 0
    %586 = vmatpush.bf16.msra.mxu0 0
    %587 = vmatpush.bf16.msra.mxu0 0
    %588 = vmatpush.bf16.msra.mxu0 0
    %589 = vmatpush.bf16.msra.mxu0 0
    %590 = vmatpush.bf16.msra.mxu0 0
    %591 = vmatpush.bf16.msra.mxu0 %v578
    %592 = vmatpush.bf16.msra.mxu0 %v577
    %593 = vmatmul.bf16.gmra.mxu0 %v583
    %v594 = vpop.f32.mrf.mxu0
    %v595 = vadd.f32 %v567, %v594
    %v596 = vpop.f32.mrf.mxu0
    %v597 = vadd.f32 %v567, %v596
    %598 = vdwg.mxu0
    %v599 = vxor.u32 %v595, 2147483648
    %v600 = vxor.u32 %v597, 2147483648
    %v601 = vmul.f32 %v599, 1.442695
    %v602 = vpow.pop %v601
    %v603 = vmul.f32 %v600, 1.442695
    %v604 = vpow.pop %v603
    %v605 = vadd.f32 %v602, 1.0
    %v606 = vadd.f32 %v604, 1.0
    %v607 = vrcp.pop %v605
    %v608 = vmul.f32 %v605, %v607
    %v609 = vsub.f32 1.0, %v608
    %v610 = vmul.f32 %v607, %v609
    %v611 = vadd.f32 %v607, %v610
    %vm612 = vweird.f32 %v605
    %vm613 = vweird.f32 %v607
    %vm614 = vmor %vm612, %vm613
    %v615 = vsel %vm614, %v607, %v611
    %v616 = vand.u32 2147483647, %v605
    %vm617 = vcmp.eq.f32.partialorder %v616, 8.507059e+37
    %v618 = vand.u32 %v605, 2147483648
    %v619 = vor.u32 1.1754944e-38, %v618
    %v620 = vsel %vm617, %v619, %v615
    %v621 = vmul.f32 1.0, %v620
    %v622 = vrcp.pop %v606
    %v623 = vmul.f32 %v606, %v622
    %v624 = vsub.f32 1.0, %v623
    %v625 = vmul.f32 %v622, %v624
    %v626 = vadd.f32 %v622, %v625
    %vm627 = vweird.f32 %v606
    %vm628 = vweird.f32 %v622
    %vm629 = vmor %vm627, %vm628
    %v630 = vsel %vm629, %v622, %v626
    %v631 = vand.u32 2147483647, %v606
    %vm632 = vcmp.eq.f32.partialorder %v631, 8.507059e+37
    %v633 = vand.u32 %v606, 2147483648
    %v634 = vor.u32 1.1754944e-38, %v633
    %v635 = vsel %vm632, %v634, %v630
    %v636 = vmul.f32 1.0, %v635
    %639 = vrot.lane.b32.xlu0 %v595, 120
    %v640 = vpop.permute.xlu0 %639
    %641 = vrot.lane.b32.xlu0 %v597, 120
    %v642 = vpop.permute.xlu0 %641
    %v645 = vmul.f32 %v621, %v640
    %v646 = vmul.f32 %v636, %v642
    %vm647 = vcmask 64512
    %v648 = vsel %vm647, %v645, 0.0
    %v649 = vrot.slane %v648, 4
    %v650 = vadd.f32 %v648, %v649
    %v651 = vrot.slane %v650, 2
    %v652 = vadd.f32 %v650, %v651
    %v653 = vrot.slane %v652, 1
    %v654 = vadd.f32 %v652, %v653
    %v655 = vsel %vm647, %v646, 0.0
    %v656 = vrot.slane %v655, 4
    %v657 = vadd.f32 %v655, %v656
    %v658 = vrot.slane %v657, 2
    %v659 = vadd.f32 %v657, %v658
    %v660 = vrot.slane %v659, 1
    %v661 = vadd.f32 %v659, %v660
    %v662 = vrcp.pop 8.0
    %v663 = vmul.f32 8.0, %v662
    %v664 = vsub.f32 1.0, %v663
    %v665 = vmul.f32 %v662, %v664
    %v666 = vadd.f32 %v662, %v665
    %vm667 = vweird.f32 %v662
    %v668 = vsel %vm667, %v662, %v666
    %v669 = vmul.f32 %v654, %v668
    %v670 = vmul.f32 %v661, %v668
    %671 = vrot.lane.b32.xlu0 %v595, 112
    %v672 = vpop.permute.xlu0 %671
    %673 = vrot.lane.b32.xlu0 %v597, 112
    %v674 = vpop.permute.xlu0 %673
    %v677 = vmul.f32 %v621, %v672
    %v678 = vmul.f32 %v636, %v674
    %v679 = vsel %vm647, %v677, 0.0
    %v680 = vrot.slane %v679, 4
    %v681 = vadd.f32 %v679, %v680
    %v682 = vrot.slane %v681, 2
    %v683 = vadd.f32 %v681, %v682
    %v684 = vrot.slane %v683, 1
    %v685 = vadd.f32 %v683, %v684
    %v686 = vsel %vm647, %v678, 0.0
    %v687 = vrot.slane %v686, 4
    %v688 = vadd.f32 %v686, %v687
    %v689 = vrot.slane %v688, 2
    %v690 = vadd.f32 %v688, %v689
    %v691 = vrot.slane %v690, 1
    %v692 = vadd.f32 %v690, %v691
    %v693 = vmul.f32 %v685, %v668
    %v694 = vmul.f32 %v692, %v668
    %v695 = vsel %vm581, %v556, 0.0
    %v696 = vrot.slane %v695, 4
    %v697 = vadd.f32 %v695, %v696
    %v698 = vrot.slane %v697, 2
    %v699 = vadd.f32 %v697, %v698
    %v700 = vrot.slane %v699, 1
    %v701 = vadd.f32 %v699, %v700
    %v702 = vsel %vm581, %v558, 0.0
    %v703 = vrot.slane %v702, 4
    %v704 = vadd.f32 %v702, %v703
    %v705 = vrot.slane %v704, 2
    %v706 = vadd.f32 %v704, %v705
    %v707 = vrot.slane %v706, 1
    %v708 = vadd.f32 %v706, %v707
    %v709 = vmul.f32 %v701, %v668
    %v710 = vmul.f32 %v708, %v668
    %v711 = vld [vmem:[%s1] sm:$0xff]
    %v712 = vld [vmem:[%s1 + $0x8] sm:$0xff]
    %v713 = vpack.c.bf16 %v712, %v711
    %v714 = vld [vmem:[%s10] sm:$0xf]
    %v715 = vld [vmem:[%s10 + $0x4] sm:$0xf]
    %v716 = vld [vmem:[%s10 + $0x8] sm:$0xf]
    %v717 = vld [vmem:[%s10 + $0xc] sm:$0xf]
    %v718 = vld [vmem:[%s11] sm:$0x1]
    %v720 = vperm.slane %v718, 0
    %v726 = vunpack.c.l.b16 %v714
    %v727 = vunpack.c.l.b16 %v715
    %v728 = vunpack.c.l.b16 %v716
    %v729 = vunpack.c.l.b16 %v717
    %v730 = vpack.c.b16 %v727, %v726
    %v731 = vpack.c.b16 %v729, %v728
    %v735 = vsel %vm581, %v713, 0
    %737 = vmatpush.bf16.msra.mxu0 0
    %738 = vmatpush.bf16.msra.mxu0 0
    %739 = vmatpush.bf16.msra.mxu0 0
    %740 = vmatpush.bf16.msra.mxu0 0
    %741 = vmatpush.bf16.msra.mxu0 0
    %742 = vmatpush.bf16.msra.mxu0 0
    %743 = vmatpush.bf16.msra.mxu0 %v731
    %744 = vmatpush.bf16.msra.mxu0 %v730
    %745 = vmatmul.bf16.gmra.mxu0 %v735
    %v746 = vpop.f32.mrf.mxu0
    %v747 = vadd.f32 %v720, %v746
    %v748 = vpop.f32.mrf.mxu0
    %v749 = vadd.f32 %v720, %v748
    %750 = vdwg.mxu0
    %v751 = vxor.u32 %v747, 2147483648
    %v752 = vxor.u32 %v749, 2147483648
    %v753 = vmul.f32 %v751, 1.442695
    %v754 = vpow.pop %v753
    %v755 = vmul.f32 %v752, 1.442695
    %v756 = vpow.pop %v755
    %v757 = vadd.f32 %v754, 1.0
    %v758 = vadd.f32 %v756, 1.0
    %v759 = vrcp.pop %v757
    %v760 = vmul.f32 %v757, %v759
    %v761 = vsub.f32 1.0, %v760
    %v762 = vmul.f32 %v759, %v761
    %v763 = vadd.f32 %v759, %v762
    %vm764 = vweird.f32 %v757
    %vm765 = vweird.f32 %v759
    %vm766 = vmor %vm764, %vm765
    %v767 = vsel %vm766, %v759, %v763
    %v768 = vand.u32 2147483647, %v757
    %vm769 = vcmp.eq.f32.partialorder %v768, 8.507059e+37
    %v770 = vand.u32 %v757, 2147483648
    %v771 = vor.u32 1.1754944e-38, %v770
    %v772 = vsel %vm769, %v771, %v767
    %v773 = vmul.f32 1.0, %v772
    %v774 = vrcp.pop %v758
    %v775 = vmul.f32 %v758, %v774
    %v776 = vsub.f32 1.0, %v775
    %v777 = vmul.f32 %v774, %v776
    %v778 = vadd.f32 %v774, %v777
    %vm779 = vweird.f32 %v758
    %vm780 = vweird.f32 %v774
    %vm781 = vmor %vm779, %vm780
    %v782 = vsel %vm781, %v774, %v778
    %v783 = vand.u32 2147483647, %v758
    %vm784 = vcmp.eq.f32.partialorder %v783, 8.507059e+37
    %v785 = vand.u32 %v758, 2147483648
    %v786 = vor.u32 1.1754944e-38, %v785
    %v787 = vsel %vm784, %v786, %v782
    %v788 = vmul.f32 1.0, %v787
    %791 = vrot.lane.b32.xlu0 %v747, 120
    %v792 = vpop.permute.xlu0 %791
    %793 = vrot.lane.b32.xlu0 %v749, 120
    %v794 = vpop.permute.xlu0 %793
    %v797 = vmul.f32 %v773, %v792
    %v798 = vmul.f32 %v788, %v794
    %v799 = vsel %vm647, %v797, 0.0
    %v800 = vrot.slane %v799, 4
    %v801 = vadd.f32 %v799, %v800
    %v802 = vrot.slane %v801, 2
    %v803 = vadd.f32 %v801, %v802
    %v804 = vrot.slane %v803, 1
    %v805 = vadd.f32 %v803, %v804
    %v806 = vsel %vm647, %v798, 0.0
    %v807 = vrot.slane %v806, 4
    %v808 = vadd.f32 %v806, %v807
    %v809 = vrot.slane %v808, 2
    %v810 = vadd.f32 %v808, %v809
    %v811 = vrot.slane %v810, 1
    %v812 = vadd.f32 %v810, %v811
    %v813 = vmul.f32 %v805, %v668
    %v814 = vmul.f32 %v812, %v668
    %815 = vrot.lane.b32.xlu0 %v747, 112
    %v816 = vpop.permute.xlu0 %815
    %817 = vrot.lane.b32.xlu0 %v749, 112
    %v818 = vpop.permute.xlu0 %817
    %v821 = vmul.f32 %v773, %v816
    %v822 = vmul.f32 %v788, %v818
    %v823 = vsel %vm647, %v821, 0.0
    %v824 = vrot.slane %v823, 4
    %v825 = vadd.f32 %v823, %v824
    %v826 = vrot.slane %v825, 2
    %v827 = vadd.f32 %v825, %v826
    %v828 = vrot.slane %v827, 1
    %v829 = vadd.f32 %v827, %v828
    %v830 = vsel %vm647, %v822, 0.0
    %v831 = vrot.slane %v830, 4
    %v832 = vadd.f32 %v830, %v831
    %v833 = vrot.slane %v832, 2
    %v834 = vadd.f32 %v832, %v833
    %v835 = vrot.slane %v834, 1
    %v836 = vadd.f32 %v834, %v835
    %v837 = vmul.f32 %v829, %v668
    %v838 = vmul.f32 %v836, %v668
    %v839 = vsel %vm581, %v711, 0.0
    %v840 = vrot.slane %v839, 4
    %v841 = vadd.f32 %v839, %v840
    %v842 = vrot.slane %v841, 2
    %v843 = vadd.f32 %v841, %v842
    %v844 = vrot.slane %v843, 1
    %v845 = vadd.f32 %v843, %v844
    %v846 = vsel %vm581, %v712, 0.0
    %v847 = vrot.slane %v846, 4
    %v848 = vadd.f32 %v846, %v847
    %v849 = vrot.slane %v848, 2
    %v850 = vadd.f32 %v848, %v849
    %v851 = vrot.slane %v850, 1
    %v852 = vadd.f32 %v850, %v851
    %v853 = vmul.f32 %v845, %v668
    %v854 = vmul.f32 %v852, %v668
    %v855 = vld [vmem:[%s2] sm:$0x3]
    %v856 = vmax.f32 %v855, 0.0
    %v857 = vld [vmem:[%s4] sm:$0x1]
    %v859 = vperm.slane %v857, 0
    %v861 = vmul.f32 %v856, %v859
    %v862 = vld [vmem:[%s5] sm:$0x1]
    %v864 = vperm.slane %v862, 0
    %v866 = vadd.f32 %v861, %v864
    %v867 = vpack.c.bf16 %v866, %v866
    %v868 = vld [vmem:[%s15] sm:$0xff]
    %v869 = vld [vmem:[%s15 + $0x8] sm:$0xff]
    %v870 = vld [vmem:[%s15 + $0x10] sm:$0xff]
    %v871 = vld [vmem:[%s15 + $0x18] sm:$0xff]
    %v872 = vld [vmem:[%s16] sm:$0x3]
    %v874 = vperm.slane %v872, 0
    %v875 = vperm.slane %v872, 1
    %v882 = vunpack.c.l.b16 %v868
    %v883 = vunpack.c.h.b16 %v868
    %v884 = vunpack.c.l.b16 %v869
    %v885 = vunpack.c.h.b16 %v869
    %v886 = vunpack.c.l.b16 %v870
    %v887 = vunpack.c.h.b16 %v870
    %v888 = vunpack.c.l.b16 %v871
    %v889 = vunpack.c.h.b16 %v871
    %v890 = vpack.c.b16 %v884, %v882
    %v891 = vpack.c.b16 %v885, %v883
    %v892 = vpack.c.b16 %v888, %v886
    %v893 = vpack.c.b16 %v889, %v887
    %v899 = vsel %vm581, %v867, 0
    %901 = vmatpush.bf16.msra.mxu0 0
    %902 = vmatpush.bf16.msra.mxu0 0
    %903 = vmatpush.bf16.msra.mxu0 0
    %904 = vmatpush.bf16.msra.mxu0 0
    %905 = vmatpush.bf16.msra.mxu0 0
    %906 = vmatpush.bf16.msra.mxu0 0
    %907 = vmatpush.bf16.msra.mxu0 %v892
    %908 = vmatpush.bf16.msra.mxu0 %v890
    %909 = vmatmul.bf16.gmra.mxu0 %v899
    %v910 = vpop.f32.mrf.mxu0
    %v911 = vadd.f32 %v874, %v910
    %v912 = vpop.f32.mrf.mxu0
    %913 = vdwg.mxu0
    %914 = vmatpush.bf16.msra.mxu0 0
    %915 = vmatpush.bf16.msra.mxu0 0
    %916 = vmatpush.bf16.msra.mxu0 0
    %917 = vmatpush.bf16.msra.mxu0 0
    %918 = vmatpush.bf16.msra.mxu0 0
    %919 = vmatpush.bf16.msra.mxu0 0
    %920 = vmatpush.bf16.msra.mxu0 %v893
    %921 = vmatpush.bf16.msra.mxu0 %v891
    %922 = vmatmul.bf16.gmra.mxu0 %v899
    %v923 = vpop.f32.mrf.mxu0
    %v924 = vadd.f32 %v875, %v923
    %v925 = vpop.f32.mrf.mxu0
    %926 = vdwg.mxu0
    %v927 = vxor.u32 %v911, 2147483648
    %v928 = vxor.u32 %v924, 2147483648
    %v929 = vmul.f32 %v927, 1.442695
    %v930 = vpow.pop %v929
    %v931 = vmul.f32 %v928, 1.442695
    %v932 = vpow.pop %v931
    %v933 = vadd.f32 %v930, 1.0
    %v934 = vadd.f32 %v932, 1.0
    %v935 = vrcp.pop %v933
    %v936 = vmul.f32 %v933, %v935
    %v937 = vsub.f32 1.0, %v936
    %v938 = vmul.f32 %v935, %v937
    %v939 = vadd.f32 %v935, %v938
    %vm940 = vweird.f32 %v933
    %vm941 = vweird.f32 %v935
    %vm942 = vmor %vm940, %vm941
    %v943 = vsel %vm942, %v935, %v939
    %v944 = vand.u32 2147483647, %v933
    %vm945 = vcmp.eq.f32.partialorder %v944, 8.507059e+37
    %v946 = vand.u32 %v933, 2147483648
    %v947 = vor.u32 1.1754944e-38, %v946
    %v948 = vsel %vm945, %v947, %v943
    %v949 = vmul.f32 1.0, %v948
    %951 = vrot.lane.b32.xlu0 %v949, 96
    %v952 = vpop.permute.xlu0 %951
    %954 = vrot.lane.b32.xlu0 %v949, 64
    %v955 = vpop.permute.xlu0 %954
    %957 = vrot.lane.b32.xlu0 %v949, 32
    %v958 = vpop.permute.xlu0 %957
    %v960 = vrot.slane %v955, 4
    %vm961 = vcmask 1047556
    %v962 = vsel %vm961, %v960, %v949
    %v964 = vunpack.c.l.s4 1983009808
    %v965 = vunpack.c.0.s8 %v964
    %v966 = vperm.slane %v962, %v965
    %v967 = vrot.slane %v958, 4
    %v968 = vsel %vm961, %v967, %v952
    %v970 = vunpack.c.l.s4 1983009808
    %v971 = vunpack.c.0.s8 %v970
    %v972 = vperm.slane %v968, %v971
    %v973 = vrot.slane %v972, 4
    %v974 = vsel %vm961, %v973, %v966
    %v976 = vunpack.c.l.s4 1934713408
    %v977 = vunpack.c.0.s8 %v976
    %v978 = vperm.slane %v974, %v977
    %v979 = vrcp.pop %v934
    %v980 = vmul.f32 %v934, %v979
    %v981 = vsub.f32 1.0, %v980
    %v982 = vmul.f32 %v979, %v981
    %v983 = vadd.f32 %v979, %v982
    %vm984 = vweird.f32 %v934
    %vm985 = vweird.f32 %v979
    %vm986 = vmor %vm984, %vm985
    %v987 = vsel %vm986, %v979, %v983
    %v988 = vand.u32 2147483647, %v934
    %vm989 = vcmp.eq.f32.partialorder %v988, 8.507059e+37
    %v990 = vand.u32 %v934, 2147483648
    %v991 = vor.u32 1.1754944e-38, %v990
    %v992 = vsel %vm989, %v991, %v987
    %v993 = vmul.f32 1.0, %v992
    %v995 = vunpack.c.l.s4 1934713408
    %v996 = vunpack.c.0.s8 %v995
    %v997 = vperm.slane %v993, %v996
    %v998 = vrot.slane %v997, 4
    %v999 = vsel %vm961, %v998, %v978
    %v1000 = vrot.slane %v978, 4
    %v1001 = vsel %vm961, %v997, %v1000
    %v1003 = vrot.slane %v866, 1
    %v1004 = vperm.slane %v866, 0
    %v1005 = vperm.slane %v1003, 0
    %v1008 = vmul.f32 %v999, %v1004
    %v1009 = vmul.f32 %v1001, %v1005
    %v1010 = vld [vmem:[%s17] sm:$0x1f]
    %v1011 = vmul.f32 %v1008, %v1010
    %v1012 = vmul.f32 %v1009, %v1010
    %vm1013 = vcmask 258048
    %v1014 = vsel %vm1013, %v1011, 0.0
    %1015 = vadd.xlane.f32.xlu0 %v1014
    %v1016 = vpop.xlane.xlu0 %1015
    %v1017 = vsel %vm1013, %v1012, 0.0
    %1018 = vadd.xlane.f32.xlu0 %v1017
    %v1019 = vpop.xlane.xlu0 %1018
    %v1020 = vld [vmem:[%s18] sm:$0x1f]
    %v1021 = vmul.f32 %v1008, %v1020
    %v1022 = vmul.f32 %v1009, %v1020
    %v1023 = vsel %vm1013, %v1021, 0.0
    %1024 = vadd.xlane.f32.xlu0 %v1023
    %v1025 = vpop.xlane.xlu0 %1024
    %v1026 = vsel %vm1013, %v1022, 0.0
    %1027 = vadd.xlane.f32.xlu0 %v1026
    %v1028 = vpop.xlane.xlu0 %1027
    %v1031 = vlaneseq
    %v1032 = vand.u32 %v1031, 127
    %v1033 = vperm.slane %v1016, %v1032
    %v1034 = vperm.slane %v1019, %v1032
    %vm1035 = vcmask 1041409
    %v1036 = vsel %vm1035, %v1034, %v1033
    %vm1038 = vcmask 39936
    %v1039 = vsel %vm1038, %v1036, 0.0
    %v1042 = vperm.slane %v1025, %v1032
    %v1043 = vperm.slane %v1028, %v1032
    %v1044 = vsel %vm1035, %v1043, %v1042
    %v1046 = vsel %vm1038, %v1044, 0.0
    %v1047 = vld [vmem:[%s3] sm:$0x3]
    %v1048 = vpack.c.bf16 %v1047, %v1047
    %v1049 = vld [vmem:[%s12] sm:$0xf]
    %v1050 = vld [vmem:[%s12 + $0x4] sm:$0xf]
    %v1051 = vld [vmem:[%s12 + $0x8] sm:$0xf]
    %v1052 = vld [vmem:[%s12 + $0xc] sm:$0xf]
    %v1053 = vld [vmem:[%s13] sm:$0x1]
    %v1055 = vperm.slane %v1053, 0
    %v1061 = vunpack.c.l.b16 %v1049
    %v1062 = vunpack.c.l.b16 %v1050
    %v1063 = vunpack.c.l.b16 %v1051
    %v1064 = vunpack.c.l.b16 %v1052
    %v1065 = vpack.c.b16 %v1062, %v1061
    %v1066 = vpack.c.b16 %v1064, %v1063
    %v1070 = vsel %vm581, %v1048, 0
    %1072 = vmatpush.bf16.msra.mxu0 0
    %1073 = vmatpush.bf16.msra.mxu0 0
    %1074 = vmatpush.bf16.msra.mxu0 0
    %1075 = vmatpush.bf16.msra.mxu0 0
    %1076 = vmatpush.bf16.msra.mxu0 0
    %1077 = vmatpush.bf16.msra.mxu0 0
    %1078 = vmatpush.bf16.msra.mxu0 %v1066
    %1079 = vmatpush.bf16.msra.mxu0 %v1065
    %1080 = vmatmul.bf16.gmra.mxu0 %v1070
    %v1081 = vpop.f32.mrf.mxu0
    %v1082 = vadd.f32 %v1055, %v1081
    %v1083 = vpop.f32.mrf.mxu0
    %1084 = vdwg.mxu0
    %v1085 = vxor.u32 %v1082, 2147483648
    %v1086 = vmul.f32 %v1085, 1.442695
    %v1087 = vpow.pop %v1086
    %v1088 = vadd.f32 %v1087, 1.0
    %v1089 = vrcp.pop %v1088
    %v1090 = vmul.f32 %v1088, %v1089
    %v1091 = vsub.f32 1.0, %v1090
    %v1092 = vmul.f32 %v1089, %v1091
    %v1093 = vadd.f32 %v1089, %v1092
    %vm1094 = vweird.f32 %v1088
    %vm1095 = vweird.f32 %v1089
    %vm1096 = vmor %vm1094, %vm1095
    %v1097 = vsel %vm1096, %v1089, %v1093
    %v1098 = vand.u32 2147483647, %v1088
    %vm1099 = vcmp.eq.f32.partialorder %v1098, 8.507059e+37
    %v1100 = vand.u32 %v1088, 2147483648
    %v1101 = vor.u32 1.1754944e-38, %v1100
    %v1102 = vsel %vm1099, %v1101, %v1097
    %v1103 = vmul.f32 1.0, %v1102
    %1105 = vrot.lane.b32.xlu0 %v1082, 120
    %v1106 = vpop.permute.xlu0 %1105
    %v1108 = vmul.f32 %v1103, %v1106
    %1109 = vrot.lane.b32.xlu0 %v1082, 112
    %v1110 = vpop.permute.xlu0 %1109
    %v1112 = vmul.f32 %v1103, %v1110
    %v1113 = vadd.f32 %v709, %v853
    %v1114 = vadd.f32 %v710, %v854
    %v1117 = vadd.f32 %v1113, %v866
    %v1118 = vadd.f32 %v1114, %v1003
    %v1120 = vrot.slane %v1047, 1
    %v1123 = vadd.f32 %v1117, %v1047
    %v1124 = vadd.f32 %v1118, %v1120
    %v1125 = vmul.f32 %v1123, 0.25
    %v1126 = vmul.f32 %v1124, 0.25
    %v1127 = vpack.c.bf16 %v1125, %v1125
    %v1128 = vpack.c.bf16 %v1126, %v1126
    %v1129 = vld [vmem:[%s14] sm:$0xf]
    %v1130 = vld [vmem:[%s14 + $0x4] sm:$0xf]
    %v1131 = vld [vmem:[%s14 + $0x8] sm:$0xf]
    %v1132 = vld [vmem:[%s14 + $0xc] sm:$0xf]
    %v1135 = vunpack.c.l.b16 %v1127
    %v1136 = vunpack.c.l.b16 %v1128
    %v1137 = vrot.slane %v1136, 7
    %v1138 = vsel %vm1035, %v1137, %v1135
    %v1139 = vpack.c.b16 %v1138, %v1138
    %v1144 = vunpack.c.l.b16 %v1129
    %v1145 = vunpack.c.l.b16 %v1130
    %v1146 = vunpack.c.l.b16 %v1131
    %v1147 = vunpack.c.l.b16 %v1132
    %v1148 = vpack.c.b16 %v1145, %v1144
    %v1149 = vpack.c.b16 %v1147, %v1146
    %v1153 = vsel %vm581, %v1139, 0
    %1155 = vmatpush.bf16.msra.mxu0 0
    %1156 = vmatpush.bf16.msra.mxu0 0
    %1157 = vmatpush.bf16.msra.mxu0 0
    %1158 = vmatpush.bf16.msra.mxu0 0
    %1159 = vmatpush.bf16.msra.mxu0 0
    %1160 = vmatpush.bf16.msra.mxu0 0
    %1161 = vmatpush.bf16.msra.mxu0 %v1149
    %1162 = vmatpush.bf16.msra.mxu0 %v1148
    %1163 = vmatmul.bf16.gmra.mxu0 %v1153
    %v1164 = vpop.f32.mrf.mxu0
    %v1165 = vadd.f32 0.0, %v1164
    %v1166 = vpop.f32.mrf.mxu0
    %1167 = vdwg.mxu0
    %v1168 = vadd.f32 %v669, %v813
    %v1169 = vadd.f32 %v670, %v814
    %v1171 = vrot.slane %v1039, 1
    %v1174 = vadd.f32 %v1168, %v1039
    %v1175 = vadd.f32 %v1169, %v1171
    %v1177 = vrot.slane %v1108, 1
    %v1180 = vadd.f32 %v1174, %v1108
    %v1181 = vadd.f32 %v1175, %v1177
    %v1182 = vmul.f32 %v1180, 0.25
    %v1183 = vmul.f32 %v1181, 0.25
    %v1186 = vrot.slane %v1183, 7
    %v1187 = vsel %vm1035, %v1186, %v1182
    %v1189 = vadd.f32 %v1165, %v1187
    %v1190 = vld [vmem:[%s19] sm:$0x1]
    %v1192 = vperm.slane %v1190, 0
    %v1194 = vadd.f32 %v1189, %v1192
    %v1195 = vxor.u32 %v1194, 2147483648
    %v1196 = vmul.f32 %v1195, 1.442695
    %v1197 = vpow.pop %v1196
    %v1198 = vadd.f32 %v1197, 1.0
    %v1199 = vrcp.pop %v1198
    %v1200 = vmul.f32 %v1198, %v1199
    %v1201 = vsub.f32 1.0, %v1200
    %v1202 = vmul.f32 %v1199, %v1201
    %v1203 = vadd.f32 %v1199, %v1202
    %vm1204 = vweird.f32 %v1198
    %vm1205 = vweird.f32 %v1199
    %vm1206 = vmor %vm1204, %vm1205
    %v1207 = vsel %vm1206, %v1199, %v1203
    %v1208 = vand.u32 2147483647, %v1198
    %vm1209 = vcmp.eq.f32.partialorder %v1208, 8.507059e+37
    %v1210 = vand.u32 %v1198, 2147483648
    %v1211 = vor.u32 1.1754944e-38, %v1210
    %v1212 = vsel %vm1209, %v1211, %v1207
    %v1213 = vmul.f32 1.0, %v1212
    %v1214 = vadd.f32 %v693, %v837
    %v1215 = vadd.f32 %v694, %v838
    %v1217 = vrot.slane %v1046, 1
    %v1220 = vadd.f32 %v1214, %v1046
    %v1221 = vadd.f32 %v1215, %v1217
    %v1223 = vrot.slane %v1112, 1
    %v1226 = vadd.f32 %v1220, %v1112
    %v1227 = vadd.f32 %v1221, %v1223
    %v1228 = vmul.f32 %v1226, 0.25
    %v1229 = vmul.f32 %v1227, 0.25
    %v1232 = vrot.slane %v1229, 7
    %v1233 = vsel %vm1035, %v1232, %v1228
    %1234 = vrot.lane.b32.xlu0 %v1233, 8
    %v1235 = vpop.permute.xlu0 %1234
    %v1237 = vadd.f32 %v1165, %v1235
    %v1238 = vld [vmem:[%s20] sm:$0x1]
    %v1240 = vperm.slane %v1238, 0
    %1241 = vrot.lane.b32.xlu0 %v1240, 8
    %v1242 = vpop.permute.xlu0 %1241
    %v1244 = vadd.f32 %v1237, %v1242
    %v1245 = vsel %vm647, %v1213, %v1244
    %vm1246 = vcmask 123904
    %1247 = vst.msk [vmem:[#allocation2] sm:$0x3] %vm1246, %v1245
    // Predicated region
    $region86: #{tpu_custom_call.1} parent=1 // pred_check
      _
    $region87: #{tpu_custom_call.1} parent=1 // pred_check_branch
      %1249 = sbr.rel (0) target = $region89
    $region88: #{tpu_custom_call.1} parent=1 // pred_region
      %1251 = vsyncadd [#allocation3], 0
      %s1253 = sshll.u32 [#allocation2], 4
      %s1254 = int_to_ptr.vmem [resolvable:$true] %s1253
      %s1255 = sshll.u32 %s21, 4
      %s1256 = int_to_ptr.hbm [resolvable:$true] %s1255
      %1258 = dma.vmem_to_hbm [thread:$0]  %s1254, 32, %s1256, [#allocation3]
    $region89: #{tpu_custom_call.1} parent=1 // pred_fallthru
      _
    // Predicated region
    $region90: #{tpu_custom_call.1} parent=1 // pred_check
      _
    $region91: #{tpu_custom_call.1} parent=1 // pred_check_branch
      %1260 = sbr.rel (0) target = $region93
    $region92: #{tpu_custom_call.1} parent=1 // pred_region
      %1262 = dma.done [#allocation3], 32
    $region93: #{tpu_custom_call.1} parent=1 // pred_fallthru
      _
    %1263 = vsyncpa [#allocation3], 1

// kernel: tpu_custom_call.1
$region0: #{tpu_custom_call.1}
  #allocation0 [shape = 'u32[]', space=smem, size = 0x4, offset = 0x4, fixed_abs, tag = 'smem constant byte address 0x4 - core index']
  #allocation1 [shape = 'u32[72,128]{1,0:T(1,128)}', space=vmem, size = 0x9000, scoped, tag = 'internal scratch']
  %s0 = inlined_call_operand.vmem [shape: f32[2,8,768], index: 0, kind: input, shape index: {}]
  %s1 = inlined_call_operand.vmem [shape: f32[2,8,32], index: 1, kind: input, shape index: {}]
  %s2 = inlined_call_operand.vmem [shape: f32[2,32], index: 2, kind: input, shape index: {}]
  %s3 = inlined_call_operand.vmem [shape: f32[2,32], index: 3, kind: input, shape index: {}]
  %s4 = inlined_call_operand.vmem [shape: f32[1,32], index: 4, kind: input, shape index: {}]
  %s5 = inlined_call_operand.vmem [shape: f32[1,32], index: 5, kind: input, shape index: {}]
  %s6 = inlined_call_operand.vmem [shape: bf16[768,32], index: 6, kind: input, shape index: {}]
  %s7 = inlined_call_operand.vmem [shape: f32[1,32], index: 7, kind: input, shape index: {}]
  %s8 = inlined_call_operand.vmem [shape: bf16[32,24], index: 8, kind: input, shape index: {}]
  %s9 = inlined_call_operand.vmem [shape: f32[1,24], index: 9, kind: input, shape index: {}]
  %s10 = inlined_call_operand.vmem [shape: bf16[32,24], index: 10, kind: input, shape index: {}]
  %s11 = inlined_call_operand.vmem [shape: f32[1,24], index: 11, kind: input, shape index: {}]
  %s12 = inlined_call_operand.vmem [shape: bf16[32,24], index: 12, kind: input, shape index: {}]
  %s13 = inlined_call_operand.vmem [shape: f32[1,24], index: 13, kind: input, shape index: {}]
  %s14 = inlined_call_operand.vmem [shape: bf16[32,16], index: 14, kind: input, shape index: {}]
  %s15 = inlined_call_operand.vmem [shape: bf16[32,160], index: 15, kind: input, shape index: {}]
  %s16 = inlined_call_operand.vmem [shape: f32[1,160], index: 16, kind: input, shape index: {}]
  %s17 = inlined_call_operand.vmem [shape: f32[5,32], index: 17, kind: input, shape index: {}]
  %s18 = inlined_call_operand.vmem [shape: f32[5,32], index: 18, kind: input, shape index: {}]
  %s19 = inlined_call_operand.vmem [shape: f32[1,8], index: 19, kind: input, shape index: {}]
  %s20 = inlined_call_operand.vmem [shape: f32[1,8], index: 20, kind: input, shape index: {}]
  %s21 = inlined_call_operand.hbm [shape: f32[2,16], index: 21, kind: output, shape index: {}]
  %s22 = sld [smem:[#allocation0]]
  $region94: #{tpu_custom_call.1} parent=0
    _
  %s24 = ssub.s32 1, %s22
  %s25 = scalar_select 0, %s24, %s22
  $region1: #{tpu_custom_call.1} parent=0
    #allocation2 [shape = 'u8[1024]{0}', space=vmem, size = 0x400, scoped, tag = 'output window, operand 0, single buffered']
    #allocation3 [shape = 's32[1]{0}', space=sflag, size = 0x4, scoped, tag = 'scoped memory for tpu_custom_call.1']
    %26 = vsyncpa [#allocation3], 0
    // Predicated region
    $region2: #{tpu_custom_call.1} parent=1 // pred_check
      _
    $region3: #{tpu_custom_call.1} parent=1 // pred_check_branch
      %28 = sbr.rel (0) target = $region5
    $region4: #{tpu_custom_call.1} parent=1 // pred_region
      _
    $region5: #{tpu_custom_call.1} parent=1 // pred_fallthru
      _
    // Predicated region
    $region6: #{tpu_custom_call.1} parent=1 // pred_check
      _
    $region7: #{tpu_custom_call.1} parent=1 // pred_check_branch
      %30 = sbr.rel (0) target = $region9
    $region8: #{tpu_custom_call.1} parent=1 // pred_region
      _
    $region9: #{tpu_custom_call.1} parent=1 // pred_fallthru
      _
    // Predicated region
    $region10: #{tpu_custom_call.1} parent=1 // pred_check
      _
    $region11: #{tpu_custom_call.1} parent=1 // pred_check_branch
      %32 = sbr.rel (0) target = $region13
    $region12: #{tpu_custom_call.1} parent=1 // pred_region
      _
    $region13: #{tpu_custom_call.1} parent=1 // pred_fallthru
      _
    // Predicated region
    $region14: #{tpu_custom_call.1} parent=1 // pred_check
      _
    $region15: #{tpu_custom_call.1} parent=1 // pred_check_branch
      %34 = sbr.rel (0) target = $region17
    $region16: #{tpu_custom_call.1} parent=1 // pred_region
      _
    $region17: #{tpu_custom_call.1} parent=1 // pred_fallthru
      _
    // Predicated region
    $region18: #{tpu_custom_call.1} parent=1 // pred_check
      _
    $region19: #{tpu_custom_call.1} parent=1 // pred_check_branch
      %36 = sbr.rel (0) target = $region21
    $region20: #{tpu_custom_call.1} parent=1 // pred_region
      _
    $region21: #{tpu_custom_call.1} parent=1 // pred_fallthru
      _
    // Predicated region
    $region22: #{tpu_custom_call.1} parent=1 // pred_check
      _
    $region23: #{tpu_custom_call.1} parent=1 // pred_check_branch
      %38 = sbr.rel (0) target = $region25
    $region24: #{tpu_custom_call.1} parent=1 // pred_region
      _
    $region25: #{tpu_custom_call.1} parent=1 // pred_fallthru
      _
    // Predicated region
    $region26: #{tpu_custom_call.1} parent=1 // pred_check
      _
    $region27: #{tpu_custom_call.1} parent=1 // pred_check_branch
      %40 = sbr.rel (0) target = $region29
    $region28: #{tpu_custom_call.1} parent=1 // pred_region
      _
    $region29: #{tpu_custom_call.1} parent=1 // pred_fallthru
      _
    // Predicated region
    $region30: #{tpu_custom_call.1} parent=1 // pred_check
      _
    $region31: #{tpu_custom_call.1} parent=1 // pred_check_branch
      %42 = sbr.rel (0) target = $region33
    $region32: #{tpu_custom_call.1} parent=1 // pred_region
      _
    $region33: #{tpu_custom_call.1} parent=1 // pred_fallthru
      _
    // Predicated region
    $region34: #{tpu_custom_call.1} parent=1 // pred_check
      _
    $region35: #{tpu_custom_call.1} parent=1 // pred_check_branch
      %44 = sbr.rel (0) target = $region37
    $region36: #{tpu_custom_call.1} parent=1 // pred_region
      _
    $region37: #{tpu_custom_call.1} parent=1 // pred_fallthru
      _
    // Predicated region
    $region38: #{tpu_custom_call.1} parent=1 // pred_check
      _
    $region39: #{tpu_custom_call.1} parent=1 // pred_check_branch
      %46 = sbr.rel (0) target = $region41
    $region40: #{tpu_custom_call.1} parent=1 // pred_region
      _
    $region41: #{tpu_custom_call.1} parent=1 // pred_fallthru
      _
    // Predicated region
    $region42: #{tpu_custom_call.1} parent=1 // pred_check
      _
    $region43: #{tpu_custom_call.1} parent=1 // pred_check_branch
      %48 = sbr.rel (0) target = $region45
    $region44: #{tpu_custom_call.1} parent=1 // pred_region
      _
    $region45: #{tpu_custom_call.1} parent=1 // pred_fallthru
      _
    // Predicated region
    $region46: #{tpu_custom_call.1} parent=1 // pred_check
      _
    $region47: #{tpu_custom_call.1} parent=1 // pred_check_branch
      %50 = sbr.rel (0) target = $region49
    $region48: #{tpu_custom_call.1} parent=1 // pred_region
      _
    $region49: #{tpu_custom_call.1} parent=1 // pred_fallthru
      _
    // Predicated region
    $region50: #{tpu_custom_call.1} parent=1 // pred_check
      _
    $region51: #{tpu_custom_call.1} parent=1 // pred_check_branch
      %52 = sbr.rel (0) target = $region53
    $region52: #{tpu_custom_call.1} parent=1 // pred_region
      _
    $region53: #{tpu_custom_call.1} parent=1 // pred_fallthru
      _
    // Predicated region
    $region54: #{tpu_custom_call.1} parent=1 // pred_check
      _
    $region55: #{tpu_custom_call.1} parent=1 // pred_check_branch
      %54 = sbr.rel (0) target = $region57
    $region56: #{tpu_custom_call.1} parent=1 // pred_region
      _
    $region57: #{tpu_custom_call.1} parent=1 // pred_fallthru
      _
    // Predicated region
    $region58: #{tpu_custom_call.1} parent=1 // pred_check
      _
    $region59: #{tpu_custom_call.1} parent=1 // pred_check_branch
      %56 = sbr.rel (0) target = $region61
    $region60: #{tpu_custom_call.1} parent=1 // pred_region
      _
    $region61: #{tpu_custom_call.1} parent=1 // pred_fallthru
      _
    // Predicated region
    $region62: #{tpu_custom_call.1} parent=1 // pred_check
      _
    $region63: #{tpu_custom_call.1} parent=1 // pred_check_branch
      %58 = sbr.rel (0) target = $region65
    $region64: #{tpu_custom_call.1} parent=1 // pred_region
      _
    $region65: #{tpu_custom_call.1} parent=1 // pred_fallthru
      _
    // Predicated region
    $region66: #{tpu_custom_call.1} parent=1 // pred_check
      _
    $region67: #{tpu_custom_call.1} parent=1 // pred_check_branch
      %60 = sbr.rel (0) target = $region69
    $region68: #{tpu_custom_call.1} parent=1 // pred_region
      _
    $region69: #{tpu_custom_call.1} parent=1 // pred_fallthru
      _
    // Predicated region
    $region70: #{tpu_custom_call.1} parent=1 // pred_check
      _
    $region71: #{tpu_custom_call.1} parent=1 // pred_check_branch
      %62 = sbr.rel (0) target = $region73
    $region72: #{tpu_custom_call.1} parent=1 // pred_region
      _
    $region73: #{tpu_custom_call.1} parent=1 // pred_fallthru
      _
    // Predicated region
    $region74: #{tpu_custom_call.1} parent=1 // pred_check
      _
    $region75: #{tpu_custom_call.1} parent=1 // pred_check_branch
      %64 = sbr.rel (0) target = $region77
    $region76: #{tpu_custom_call.1} parent=1 // pred_region
      _
    $region77: #{tpu_custom_call.1} parent=1 // pred_fallthru
      _
    // Predicated region
    $region78: #{tpu_custom_call.1} parent=1 // pred_check
      _
    $region79: #{tpu_custom_call.1} parent=1 // pred_check_branch
      %66 = sbr.rel (0) target = $region81
    $region80: #{tpu_custom_call.1} parent=1 // pred_region
      _
    $region81: #{tpu_custom_call.1} parent=1 // pred_fallthru
      _
    // Predicated region
    $region82: #{tpu_custom_call.1} parent=1 // pred_check
      _
    $region83: #{tpu_custom_call.1} parent=1 // pred_check_branch
      %68 = sbr.rel (0) target = $region85
    $region84: #{tpu_custom_call.1} parent=1 // pred_region
      _
    $region85: #{tpu_custom_call.1} parent=1 // pred_fallthru
      _
    %v70 = vld [vmem:[%s0] sm:$0xff]
    %v71 = vld [vmem:[%s0 + $0x8] sm:$0xff]
    %v72 = vld [vmem:[%s0 + $0x10] sm:$0xff]
    %v73 = vld [vmem:[%s0 + $0x18] sm:$0xff]
    %v74 = vld [vmem:[%s0 + $0x20] sm:$0xff]
    %v75 = vld [vmem:[%s0 + $0x28] sm:$0xff]
    %v76 = vld [vmem:[%s0 + $0x30] sm:$0xff]
    %v77 = vld [vmem:[%s0 + $0x38] sm:$0xff]
    %v78 = vld [vmem:[%s0 + $0x40] sm:$0xff]
    %v79 = vld [vmem:[%s0 + $0x48] sm:$0xff]
    %v80 = vld [vmem:[%s0 + $0x50] sm:$0xff]
    %v81 = vld [vmem:[%s0 + $0x58] sm:$0xff]
    %v82 = vpack.c.bf16 %v76, %v70
    %v83 = vpack.c.bf16 %v77, %v71
    %v84 = vpack.c.bf16 %v78, %v72
    %v85 = vpack.c.bf16 %v79, %v73
    %v86 = vpack.c.bf16 %v80, %v74
    %v87 = vpack.c.bf16 %v81, %v75
    %v88 = vld [vmem:[%s6] sm:$0xf]
    %v89 = vld [vmem:[%s6 + $0x4] sm:$0xf]
    %v90 = vld [vmem:[%s6 + $0x8] sm:$0xf]
    %v91 = vld [vmem:[%s6 + $0xc] sm:$0xf]
    %v92 = vld [vmem:[%s6 + $0x10] sm:$0xf]
    %v93 = vld [vmem:[%s6 + $0x14] sm:$0xf]
    %v94 = vld [vmem:[%s6 + $0x18] sm:$0xf]
    %v95 = vld [vmem:[%s6 + $0x1c] sm:$0xf]
    %v96 = vld [vmem:[%s6 + $0x20] sm:$0xf]
    %v97 = vld [vmem:[%s6 + $0x24] sm:$0xf]
    %v98 = vld [vmem:[%s6 + $0x28] sm:$0xf]
    %v99 = vld [vmem:[%s6 + $0x2c] sm:$0xf]
    %v100 = vld [vmem:[%s6 + $0x30] sm:$0xf]
    %v101 = vld [vmem:[%s6 + $0x34] sm:$0xf]
    %v102 = vld [vmem:[%s6 + $0x38] sm:$0xf]
    %v103 = vld [vmem:[%s6 + $0x3c] sm:$0xf]
    %v104 = vld [vmem:[%s6 + $0x40] sm:$0xf]
    %v105 = vld [vmem:[%s6 + $0x44] sm:$0xf]
    %v106 = vld [vmem:[%s6 + $0x48] sm:$0xf]
    %v107 = vld [vmem:[%s6 + $0x4c] sm:$0xf]
    %v108 = vld [vmem:[%s6 + $0x50] sm:$0xf]
    %v109 = vld [vmem:[%s6 + $0x54] sm:$0xf]
    %v110 = vld [vmem:[%s6 + $0x58] sm:$0xf]
    %v111 = vld [vmem:[%s6 + $0x5c] sm:$0xf]
    %v112 = vld [vmem:[%s6 + $0x60] sm:$0xf]
    %v113 = vld [vmem:[%s6 + $0x64] sm:$0xf]
    %v114 = vld [vmem:[%s6 + $0x68] sm:$0xf]
    %v115 = vld [vmem:[%s6 + $0x6c] sm:$0xf]
    %v116 = vld [vmem:[%s6 + $0x70] sm:$0xf]
    %v117 = vld [vmem:[%s6 + $0x74] sm:$0xf]
    %v118 = vld [vmem:[%s6 + $0x78] sm:$0xf]
    %v119 = vld [vmem:[%s6 + $0x7c] sm:$0xf]
    %v120 = vld [vmem:[%s6 + $0x80] sm:$0xf]
    %v121 = vld [vmem:[%s6 + $0x84] sm:$0xf]
    %v122 = vld [vmem:[%s6 + $0x88] sm:$0xf]
    %v123 = vld [vmem:[%s6 + $0x8c] sm:$0xf]
    %v124 = vld [vmem:[%s6 + $0x90] sm:$0xf]
    %v125 = vld [vmem:[%s6 + $0x94] sm:$0xf]
    %v126 = vld [vmem:[%s6 + $0x98] sm:$0xf]
    %v127 = vld [vmem:[%s6 + $0x9c] sm:$0xf]
    %v128 = vld [vmem:[%s6 + $0xa0] sm:$0xf]
    %v129 = vld [vmem:[%s6 + $0xa4] sm:$0xf]
    %v130 = vld [vmem:[%s6 + $0xa8] sm:$0xf]
    %v131 = vld [vmem:[%s6 + $0xac] sm:$0xf]
    %v132 = vld [vmem:[%s6 + $0xb0] sm:$0xf]
    %v133 = vld [vmem:[%s6 + $0xb4] sm:$0xf]
    %v134 = vld [vmem:[%s6 + $0xb8] sm:$0xf]
    %v135 = vld [vmem:[%s6 + $0xbc] sm:$0xf]
    %v136 = vld [vmem:[%s6 + $0xc0] sm:$0xf]
    %v137 = vld [vmem:[%s6 + $0xc4] sm:$0xf]
    %v138 = vld [vmem:[%s6 + $0xc8] sm:$0xf]
    %v139 = vld [vmem:[%s6 + $0xcc] sm:$0xf]
    %v140 = vld [vmem:[%s6 + $0xd0] sm:$0xf]
    %v141 = vld [vmem:[%s6 + $0xd4] sm:$0xf]
    %v142 = vld [vmem:[%s6 + $0xd8] sm:$0xf]
    %v143 = vld [vmem:[%s6 + $0xdc] sm:$0xf]
    %v144 = vld [vmem:[%s6 + $0xe0] sm:$0xf]
    %v145 = vld [vmem:[%s6 + $0xe4] sm:$0xf]
    %v146 = vld [vmem:[%s6 + $0xe8] sm:$0xf]
    %v147 = vld [vmem:[%s6 + $0xec] sm:$0xf]
    %v148 = vld [vmem:[%s6 + $0xf0] sm:$0xf]
    %v149 = vld [vmem:[%s6 + $0xf4] sm:$0xf]
    %v150 = vld [vmem:[%s6 + $0xf8] sm:$0xf]
    %v151 = vld [vmem:[%s6 + $0xfc] sm:$0xf]
    %v152 = vld [vmem:[%s6 + $0x100] sm:$0xf]
    %v153 = vld [vmem:[%s6 + $0x104] sm:$0xf]
    %v154 = vld [vmem:[%s6 + $0x108] sm:$0xf]
    %v155 = vld [vmem:[%s6 + $0x10c] sm:$0xf]
    %v156 = vld [vmem:[%s6 + $0x110] sm:$0xf]
    %v157 = vld [vmem:[%s6 + $0x114] sm:$0xf]
    %v158 = vld [vmem:[%s6 + $0x118] sm:$0xf]
    %v159 = vld [vmem:[%s6 + $0x11c] sm:$0xf]
    %v160 = vld [vmem:[%s6 + $0x120] sm:$0xf]
    %v161 = vld [vmem:[%s6 + $0x124] sm:$0xf]
    %v162 = vld [vmem:[%s6 + $0x128] sm:$0xf]
    %v163 = vld [vmem:[%s6 + $0x12c] sm:$0xf]
    %v164 = vld [vmem:[%s6 + $0x130] sm:$0xf]
    %v165 = vld [vmem:[%s6 + $0x134] sm:$0xf]
    %v166 = vld [vmem:[%s6 + $0x138] sm:$0xf]
    %v167 = vld [vmem:[%s6 + $0x13c] sm:$0xf]
    %v168 = vld [vmem:[%s6 + $0x140] sm:$0xf]
    %v169 = vld [vmem:[%s6 + $0x144] sm:$0xf]
    %v170 = vld [vmem:[%s6 + $0x148] sm:$0xf]
    %v171 = vld [vmem:[%s6 + $0x14c] sm:$0xf]
    %v172 = vld [vmem:[%s6 + $0x150] sm:$0xf]
    %v173 = vld [vmem:[%s6 + $0x154] sm:$0xf]
    %v174 = vld [vmem:[%s6 + $0x158] sm:$0xf]
    %v175 = vld [vmem:[%s6 + $0x15c] sm:$0xf]
    %v176 = vld [vmem:[%s6 + $0x160] sm:$0xf]
    %v177 = vld [vmem:[%s6 + $0x164] sm:$0xf]
    %v178 = vld [vmem:[%s6 + $0x168] sm:$0xf]
    %v179 = vld [vmem:[%s6 + $0x16c] sm:$0xf]
    %v180 = vld [vmem:[%s6 + $0x170] sm:$0xf]
    %v181 = vld [vmem:[%s6 + $0x174] sm:$0xf]
    %v182 = vld [vmem:[%s6 + $0x178] sm:$0xf]
    %v183 = vld [vmem:[%s6 + $0x17c] sm:$0xf]
    %v184 = vld [vmem:[%s7] sm:$0x1]
    %v186 = vperm.slane %v184, 0
    %v284 = vunpack.c.l.b16 %v88
    %v285 = vunpack.c.l.b16 %v89
    %v286 = vunpack.c.l.b16 %v90
    %v287 = vunpack.c.l.b16 %v91
    %v288 = vunpack.c.l.b16 %v92
    %v289 = vunpack.c.l.b16 %v93
    %v290 = vunpack.c.l.b16 %v94
    %v291 = vunpack.c.l.b16 %v95
    %v292 = vunpack.c.l.b16 %v96
    %v293 = vunpack.c.l.b16 %v97
    %v294 = vunpack.c.l.b16 %v98
    %v295 = vunpack.c.l.b16 %v99
    %v296 = vunpack.c.l.b16 %v100
    %v297 = vunpack.c.l.b16 %v101
    %v298 = vunpack.c.l.b16 %v102
    %v299 = vunpack.c.l.b16 %v103
    %v300 = vunpack.c.l.b16 %v104
    %v301 = vunpack.c.l.b16 %v105
    %v302 = vunpack.c.l.b16 %v106
    %v303 = vunpack.c.l.b16 %v107
    %v304 = vunpack.c.l.b16 %v108
    %v305 = vunpack.c.l.b16 %v109
    %v306 = vunpack.c.l.b16 %v110
    %v307 = vunpack.c.l.b16 %v111
    %v308 = vunpack.c.l.b16 %v112
    %v309 = vunpack.c.l.b16 %v113
    %v310 = vunpack.c.l.b16 %v114
    %v311 = vunpack.c.l.b16 %v115
    %v312 = vunpack.c.l.b16 %v116
    %v313 = vunpack.c.l.b16 %v117
    %v314 = vunpack.c.l.b16 %v118
    %v315 = vunpack.c.l.b16 %v119
    %v316 = vunpack.c.l.b16 %v120
    %v317 = vunpack.c.l.b16 %v121
    %v318 = vunpack.c.l.b16 %v122
    %v319 = vunpack.c.l.b16 %v123
    %v320 = vunpack.c.l.b16 %v124
    %v321 = vunpack.c.l.b16 %v125
    %v322 = vunpack.c.l.b16 %v126
    %v323 = vunpack.c.l.b16 %v127
    %v324 = vunpack.c.l.b16 %v128
    %v325 = vunpack.c.l.b16 %v129
    %v326 = vunpack.c.l.b16 %v130
    %v327 = vunpack.c.l.b16 %v131
    %v328 = vunpack.c.l.b16 %v132
    %v329 = vunpack.c.l.b16 %v133
    %v330 = vunpack.c.l.b16 %v134
    %v331 = vunpack.c.l.b16 %v135
    %v332 = vunpack.c.l.b16 %v136
    %v333 = vunpack.c.l.b16 %v137
    %v334 = vunpack.c.l.b16 %v138
    %v335 = vunpack.c.l.b16 %v139
    %v336 = vunpack.c.l.b16 %v140
    %v337 = vunpack.c.l.b16 %v141
    %v338 = vunpack.c.l.b16 %v142
    %v339 = vunpack.c.l.b16 %v143
    %v340 = vunpack.c.l.b16 %v144
    %v341 = vunpack.c.l.b16 %v145
    %v342 = vunpack.c.l.b16 %v146
    %v343 = vunpack.c.l.b16 %v147
    %v344 = vunpack.c.l.b16 %v148
    %v345 = vunpack.c.l.b16 %v149
    %v346 = vunpack.c.l.b16 %v150
    %v347 = vunpack.c.l.b16 %v151
    %v348 = vunpack.c.l.b16 %v152
    %v349 = vunpack.c.l.b16 %v153
    %v350 = vunpack.c.l.b16 %v154
    %v351 = vunpack.c.l.b16 %v155
    %v352 = vunpack.c.l.b16 %v156
    %v353 = vunpack.c.l.b16 %v157
    %v354 = vunpack.c.l.b16 %v158
    %v355 = vunpack.c.l.b16 %v159
    %v356 = vunpack.c.l.b16 %v160
    %v357 = vunpack.c.l.b16 %v161
    %v358 = vunpack.c.l.b16 %v162
    %v359 = vunpack.c.l.b16 %v163
    %v360 = vunpack.c.l.b16 %v164
    %v361 = vunpack.c.l.b16 %v165
    %v362 = vunpack.c.l.b16 %v166
    %v363 = vunpack.c.l.b16 %v167
    %v364 = vunpack.c.l.b16 %v168
    %v365 = vunpack.c.l.b16 %v169
    %v366 = vunpack.c.l.b16 %v170
    %v367 = vunpack.c.l.b16 %v171
    %v368 = vunpack.c.l.b16 %v172
    %v369 = vunpack.c.l.b16 %v173
    %v370 = vunpack.c.l.b16 %v174
    %v371 = vunpack.c.l.b16 %v175
    %v372 = vunpack.c.l.b16 %v176
    %v373 = vunpack.c.l.b16 %v177
    %v374 = vunpack.c.l.b16 %v178
    %v375 = vunpack.c.l.b16 %v179
    %v376 = vunpack.c.l.b16 %v180
    %v377 = vunpack.c.l.b16 %v181
    %v378 = vunpack.c.l.b16 %v182
    %v379 = vunpack.c.l.b16 %v183
    %v380 = vpack.c.b16 %v285, %v284
    %v381 = vpack.c.b16 %v287, %v286
    %v382 = vpack.c.b16 %v289, %v288
    %v383 = vpack.c.b16 %v291, %v290
    %v384 = vpack.c.b16 %v293, %v292
    %v385 = vpack.c.b16 %v295, %v294
    %v386 = vpack.c.b16 %v297, %v296
    %v387 = vpack.c.b16 %v299, %v298
    %v388 = vpack.c.b16 %v301, %v300
    %v389 = vpack.c.b16 %v303, %v302
    %v390 = vpack.c.b16 %v305, %v304
    %v391 = vpack.c.b16 %v307, %v306
    %v392 = vpack.c.b16 %v309, %v308
    %v393 = vpack.c.b16 %v311, %v310
    %v394 = vpack.c.b16 %v313, %v312
    %v395 = vpack.c.b16 %v315, %v314
    %v396 = vpack.c.b16 %v317, %v316
    %v397 = vpack.c.b16 %v319, %v318
    %v398 = vpack.c.b16 %v321, %v320
    %v399 = vpack.c.b16 %v323, %v322
    %v400 = vpack.c.b16 %v325, %v324
    %v401 = vpack.c.b16 %v327, %v326
    %v402 = vpack.c.b16 %v329, %v328
    %v403 = vpack.c.b16 %v331, %v330
    %v404 = vpack.c.b16 %v333, %v332
    %v405 = vpack.c.b16 %v335, %v334
    %v406 = vpack.c.b16 %v337, %v336
    %v407 = vpack.c.b16 %v339, %v338
    %v408 = vpack.c.b16 %v341, %v340
    %v409 = vpack.c.b16 %v343, %v342
    %v410 = vpack.c.b16 %v345, %v344
    %v411 = vpack.c.b16 %v347, %v346
    %v412 = vpack.c.b16 %v349, %v348
    %v413 = vpack.c.b16 %v351, %v350
    %v414 = vpack.c.b16 %v353, %v352
    %v415 = vpack.c.b16 %v355, %v354
    %v416 = vpack.c.b16 %v357, %v356
    %v417 = vpack.c.b16 %v359, %v358
    %v418 = vpack.c.b16 %v361, %v360
    %v419 = vpack.c.b16 %v363, %v362
    %v420 = vpack.c.b16 %v365, %v364
    %v421 = vpack.c.b16 %v367, %v366
    %v422 = vpack.c.b16 %v369, %v368
    %v423 = vpack.c.b16 %v371, %v370
    %v424 = vpack.c.b16 %v373, %v372
    %v425 = vpack.c.b16 %v375, %v374
    %v426 = vpack.c.b16 %v377, %v376
    %v427 = vpack.c.b16 %v379, %v378
    %476 = vmatpush.bf16.msra.mxu0 %v387
    %477 = vmatpush.bf16.msra.mxu0 %v386
    %478 = vmatpush.bf16.msra.mxu0 %v385
    %479 = vmatpush.bf16.msra.mxu0 %v384
    %480 = vmatpush.bf16.msra.mxu0 %v383
    %481 = vmatpush.bf16.msra.mxu0 %v382
    %482 = vmatpush.bf16.msra.mxu0 %v381
    %483 = vmatpush.bf16.msra.mxu0 %v380
    %484 = vmatmul.bf16.gmra.mxu0 %v82
    %v485 = vpop.f32.mrf.mxu0
    %v486 = vadd.f32 %v186, %v485
    %v487 = vpop.f32.mrf.mxu0
    %v488 = vadd.f32 %v186, %v487
    %489 = vdwg.mxu0
    %490 = vmatpush.bf16.msra.mxu0 %v395
    %491 = vmatpush.bf16.msra.mxu0 %v394
    %492 = vmatpush.bf16.msra.mxu0 %v393
    %493 = vmatpush.bf16.msra.mxu0 %v392
    %494 = vmatpush.bf16.msra.mxu0 %v391
    %495 = vmatpush.bf16.msra.mxu0 %v390
    %496 = vmatpush.bf16.msra.mxu0 %v389
    %497 = vmatpush.bf16.msra.mxu0 %v388
    %498 = vmatmul.bf16.gmra.mxu0 %v83
    %v499 = vpop.f32.mrf.mxu0
    %v500 = vadd.f32 %v486, %v499
    %v501 = vpop.f32.mrf.mxu0
    %v502 = vadd.f32 %v488, %v501
    %503 = vdwg.mxu0
    %504 = vmatpush.bf16.msra.mxu0 %v403
    %505 = vmatpush.bf16.msra.mxu0 %v402
    %506 = vmatpush.bf16.msra.mxu0 %v401
    %507 = vmatpush.bf16.msra.mxu0 %v400
    %508 = vmatpush.bf16.msra.mxu0 %v399
    %509 = vmatpush.bf16.msra.mxu0 %v398
    %510 = vmatpush.bf16.msra.mxu0 %v397
    %511 = vmatpush.bf16.msra.mxu0 %v396
    %512 = vmatmul.bf16.gmra.mxu0 %v84
    %v513 = vpop.f32.mrf.mxu0
    %v514 = vadd.f32 %v500, %v513
    %v515 = vpop.f32.mrf.mxu0
    %v516 = vadd.f32 %v502, %v515
    %517 = vdwg.mxu0
    %518 = vmatpush.bf16.msra.mxu0 %v411
    %519 = vmatpush.bf16.msra.mxu0 %v410
    %520 = vmatpush.bf16.msra.mxu0 %v409
    %521 = vmatpush.bf16.msra.mxu0 %v408
    %522 = vmatpush.bf16.msra.mxu0 %v407
    %523 = vmatpush.bf16.msra.mxu0 %v406
    %524 = vmatpush.bf16.msra.mxu0 %v405
    %525 = vmatpush.bf16.msra.mxu0 %v404
    %526 = vmatmul.bf16.gmra.mxu0 %v85
    %v527 = vpop.f32.mrf.mxu0
    %v528 = vadd.f32 %v514, %v527
    %v529 = vpop.f32.mrf.mxu0
    %v530 = vadd.f32 %v516, %v529
    %531 = vdwg.mxu0
    %532 = vmatpush.bf16.msra.mxu0 %v419
    %533 = vmatpush.bf16.msra.mxu0 %v418
    %534 = vmatpush.bf16.msra.mxu0 %v417
    %535 = vmatpush.bf16.msra.mxu0 %v416
    %536 = vmatpush.bf16.msra.mxu0 %v415
    %537 = vmatpush.bf16.msra.mxu0 %v414
    %538 = vmatpush.bf16.msra.mxu0 %v413
    %539 = vmatpush.bf16.msra.mxu0 %v412
    %540 = vmatmul.bf16.gmra.mxu0 %v86
    %v541 = vpop.f32.mrf.mxu0
    %v542 = vadd.f32 %v528, %v541
    %v543 = vpop.f32.mrf.mxu0
    %v544 = vadd.f32 %v530, %v543
    %545 = vdwg.mxu0
    %546 = vmatpush.bf16.msra.mxu0 %v427
    %547 = vmatpush.bf16.msra.mxu0 %v426
    %548 = vmatpush.bf16.msra.mxu0 %v425
    %549 = vmatpush.bf16.msra.mxu0 %v424
    %550 = vmatpush.bf16.msra.mxu0 %v423
    %551 = vmatpush.bf16.msra.mxu0 %v422
    %552 = vmatpush.bf16.msra.mxu0 %v421
    %553 = vmatpush.bf16.msra.mxu0 %v420
    %554 = vmatmul.bf16.gmra.mxu0 %v87
    %v555 = vpop.f32.mrf.mxu0
    %v556 = vadd.f32 %v542, %v555
    %v557 = vpop.f32.mrf.mxu0
    %v558 = vadd.f32 %v544, %v557
    %559 = vdwg.mxu0
    %v560 = vpack.c.bf16 %v558, %v556
    %v561 = vld [vmem:[%s8] sm:$0xf]
    %v562 = vld [vmem:[%s8 + $0x4] sm:$0xf]
    %v563 = vld [vmem:[%s8 + $0x8] sm:$0xf]
    %v564 = vld [vmem:[%s8 + $0xc] sm:$0xf]
    %v565 = vld [vmem:[%s9] sm:$0x1]
    %v567 = vperm.slane %v565, 0
    %v573 = vunpack.c.l.b16 %v561
    %v574 = vunpack.c.l.b16 %v562
    %v575 = vunpack.c.l.b16 %v563
    %v576 = vunpack.c.l.b16 %v564
    %v577 = vpack.c.b16 %v574, %v573
    %v578 = vpack.c.b16 %v576, %v575
    %vm581 = vcmask 261120
    %v583 = vsel %vm581, %v560, 0
    %585 = vmatpush.bf16.msra.mxu0 0
    %586 = vmatpush.bf16.msra.mxu0 0
    %587 = vmatpush.bf16.msra.mxu0 0
    %588 = vmatpush.bf16.msra.mxu0 0
    %589 = vmatpush.bf16.msra.mxu0 0
    %590 = vmatpush.bf16.msra.mxu0 0
    %591 = vmatpush.bf16.msra.mxu0 %v578
    %592 = vmatpush.bf16.msra.mxu0 %v577
    %593 = vmatmul.bf16.gmra.mxu0 %v583
    %v594 = vpop.f32.mrf.mxu0
    %v595 = vadd.f32 %v567, %v594
    %v596 = vpop.f32.mrf.mxu0
    %v597 = vadd.f32 %v567, %v596
    %598 = vdwg.mxu0
    %v599 = vxor.u32 %v595, 2147483648
    %v600 = vxor.u32 %v597, 2147483648
    %v601 = vmul.f32 %v599, 1.442695
    %v602 = vpow.pop %v601
    %v603 = vmul.f32 %v600, 1.442695
    %v604 = vpow.pop %v603
    %v605 = vadd.f32 %v602, 1.0
    %v606 = vadd.f32 %v604, 1.0
    %v607 = vrcp.pop %v605
    %v608 = vmul.f32 %v605, %v607
    %v609 = vsub.f32 1.0, %v608
    %v610 = vmul.f32 %v607, %v609
    %v611 = vadd.f32 %v607, %v610
    %vm612 = vweird.f32 %v605
    %vm613 = vweird.f32 %v607
    %vm614 = vmor %vm612, %vm613
    %v615 = vsel %vm614, %v607, %v611
    %v616 = vand.u32 2147483647, %v605
    %vm617 = vcmp.eq.f32.partialorder %v616, 8.507059e+37
    %v618 = vand.u32 %v605, 2147483648
    %v619 = vor.u32 1.1754944e-38, %v618
    %v620 = vsel %vm617, %v619, %v615
    %v621 = vmul.f32 1.0, %v620
    %v622 = vrcp.pop %v606
    %v623 = vmul.f32 %v606, %v622
    %v624 = vsub.f32 1.0, %v623
    %v625 = vmul.f32 %v622, %v624
    %v626 = vadd.f32 %v622, %v625
    %vm627 = vweird.f32 %v606
    %vm628 = vweird.f32 %v622
    %vm629 = vmor %vm627, %vm628
    %v630 = vsel %vm629, %v622, %v626
    %v631 = vand.u32 2147483647, %v606
    %vm632 = vcmp.eq.f32.partialorder %v631, 8.507059e+37
    %v633 = vand.u32 %v606, 2147483648
    %v634 = vor.u32 1.1754944e-38, %v633
    %v635 = vsel %vm632, %v634, %v630
    %v636 = vmul.f32 1.0, %v635
    %639 = vrot.lane.b32.xlu0 %v595, 120
    %v640 = vpop.permute.xlu0 %639
    %641 = vrot.lane.b32.xlu0 %v597, 120
    %v642 = vpop.permute.xlu0 %641
    %v645 = vmul.f32 %v621, %v640
    %v646 = vmul.f32 %v636, %v642
    %vm647 = vcmask 64512
    %v648 = vsel %vm647, %v645, 0.0
    %v649 = vrot.slane %v648, 4
    %v650 = vadd.f32 %v648, %v649
    %v651 = vrot.slane %v650, 2
    %v652 = vadd.f32 %v650, %v651
    %v653 = vrot.slane %v652, 1
    %v654 = vadd.f32 %v652, %v653
    %v655 = vsel %vm647, %v646, 0.0
    %v656 = vrot.slane %v655, 4
    %v657 = vadd.f32 %v655, %v656
    %v658 = vrot.slane %v657, 2
    %v659 = vadd.f32 %v657, %v658
    %v660 = vrot.slane %v659, 1
    %v661 = vadd.f32 %v659, %v660
    %v662 = vrcp.pop 8.0
    %v663 = vmul.f32 8.0, %v662
    %v664 = vsub.f32 1.0, %v663
    %v665 = vmul.f32 %v662, %v664
    %v666 = vadd.f32 %v662, %v665
    %vm667 = vweird.f32 %v662
    %v668 = vsel %vm667, %v662, %v666
    %v669 = vmul.f32 %v654, %v668
    %v670 = vmul.f32 %v661, %v668
    %671 = vrot.lane.b32.xlu0 %v595, 112
    %v672 = vpop.permute.xlu0 %671
    %673 = vrot.lane.b32.xlu0 %v597, 112
    %v674 = vpop.permute.xlu0 %673
    %v677 = vmul.f32 %v621, %v672
    %v678 = vmul.f32 %v636, %v674
    %v679 = vsel %vm647, %v677, 0.0
    %v680 = vrot.slane %v679, 4
    %v681 = vadd.f32 %v679, %v680
    %v682 = vrot.slane %v681, 2
    %v683 = vadd.f32 %v681, %v682
    %v684 = vrot.slane %v683, 1
    %v685 = vadd.f32 %v683, %v684
    %v686 = vsel %vm647, %v678, 0.0
    %v687 = vrot.slane %v686, 4
    %v688 = vadd.f32 %v686, %v687
    %v689 = vrot.slane %v688, 2
    %v690 = vadd.f32 %v688, %v689
    %v691 = vrot.slane %v690, 1
    %v692 = vadd.f32 %v690, %v691
    %v693 = vmul.f32 %v685, %v668
    %v694 = vmul.f32 %v692, %v668
    %v695 = vsel %vm581, %v556, 0.0
    %v696 = vrot.slane %v695, 4
    %v697 = vadd.f32 %v695, %v696
    %v698 = vrot.slane %v697, 2
    %v699 = vadd.f32 %v697, %v698
    %v700 = vrot.slane %v699, 1
    %v701 = vadd.f32 %v699, %v700
    %v702 = vsel %vm581, %v558, 0.0
    %v703 = vrot.slane %v702, 4
    %v704 = vadd.f32 %v702, %v703
    %v705 = vrot.slane %v704, 2
    %v706 = vadd.f32 %v704, %v705
    %v707 = vrot.slane %v706, 1
    %v708 = vadd.f32 %v706, %v707
    %v709 = vmul.f32 %v701, %v668
    %v710 = vmul.f32 %v708, %v668
    %v711 = vld [vmem:[%s1] sm:$0xff]
    %v712 = vld [vmem:[%s1 + $0x8] sm:$0xff]
    %v713 = vpack.c.bf16 %v712, %v711
    %v714 = vld [vmem:[%s10] sm:$0xf]
    %v715 = vld [vmem:[%s10 + $0x4] sm:$0xf]
    %v716 = vld [vmem:[%s10 + $0x8] sm:$0xf]
    %v717 = vld [vmem:[%s10 + $0xc] sm:$0xf]
    %v718 = vld [vmem:[%s11] sm:$0x1]
    %v720 = vperm.slane %v718, 0
    %v726 = vunpack.c.l.b16 %v714
    %v727 = vunpack.c.l.b16 %v715
    %v728 = vunpack.c.l.b16 %v716
    %v729 = vunpack.c.l.b16 %v717
    %v730 = vpack.c.b16 %v727, %v726
    %v731 = vpack.c.b16 %v729, %v728
    %v735 = vsel %vm581, %v713, 0
    %737 = vmatpush.bf16.msra.mxu0 0
    %738 = vmatpush.bf16.msra.mxu0 0
    %739 = vmatpush.bf16.msra.mxu0 0
    %740 = vmatpush.bf16.msra.mxu0 0
    %741 = vmatpush.bf16.msra.mxu0 0
    %742 = vmatpush.bf16.msra.mxu0 0
    %743 = vmatpush.bf16.msra.mxu0 %v731
    %744 = vmatpush.bf16.msra.mxu0 %v730
    %745 = vmatmul.bf16.gmra.mxu0 %v735
    %v746 = vpop.f32.mrf.mxu0
    %v747 = vadd.f32 %v720, %v746
    %v748 = vpop.f32.mrf.mxu0
    %v749 = vadd.f32 %v720, %v748
    %750 = vdwg.mxu0
    %v751 = vxor.u32 %v747, 2147483648
    %v752 = vxor.u32 %v749, 2147483648
    %v753 = vmul.f32 %v751, 1.442695
    %v754 = vpow.pop %v753
    %v755 = vmul.f32 %v752, 1.442695
    %v756 = vpow.pop %v755
    %v757 = vadd.f32 %v754, 1.0
    %v758 = vadd.f32 %v756, 1.0
    %v759 = vrcp.pop %v757
    %v760 = vmul.f32 %v757, %v759
    %v761 = vsub.f32 1.0, %v760
    %v762 = vmul.f32 %v759, %v761
    %v763 = vadd.f32 %v759, %v762
    %vm764 = vweird.f32 %v757
    %vm765 = vweird.f32 %v759
    %vm766 = vmor %vm764, %vm765
    %v767 = vsel %vm766, %v759, %v763
    %v768 = vand.u32 2147483647, %v757
    %vm769 = vcmp.eq.f32.partialorder %v768, 8.507059e+37
    %v770 = vand.u32 %v757, 2147483648
    %v771 = vor.u32 1.1754944e-38, %v770
    %v772 = vsel %vm769, %v771, %v767
    %v773 = vmul.f32 1.0, %v772
    %v774 = vrcp.pop %v758
    %v775 = vmul.f32 %v758, %v774
    %v776 = vsub.f32 1.0, %v775
    %v777 = vmul.f32 %v774, %v776
    %v778 = vadd.f32 %v774, %v777
    %vm779 = vweird.f32 %v758
    %vm780 = vweird.f32 %v774
    %vm781 = vmor %vm779, %vm780
    %v782 = vsel %vm781, %v774, %v778
    %v783 = vand.u32 2147483647, %v758
    %vm784 = vcmp.eq.f32.partialorder %v783, 8.507059e+37
    %v785 = vand.u32 %v758, 2147483648
    %v786 = vor.u32 1.1754944e-38, %v785
    %v787 = vsel %vm784, %v786, %v782
    %v788 = vmul.f32 1.0, %v787
    %791 = vrot.lane.b32.xlu0 %v747, 120
    %v792 = vpop.permute.xlu0 %791
    %793 = vrot.lane.b32.xlu0 %v749, 120
    %v794 = vpop.permute.xlu0 %793
    %v797 = vmul.f32 %v773, %v792
    %v798 = vmul.f32 %v788, %v794
    %v799 = vsel %vm647, %v797, 0.0
    %v800 = vrot.slane %v799, 4
    %v801 = vadd.f32 %v799, %v800
    %v802 = vrot.slane %v801, 2
    %v803 = vadd.f32 %v801, %v802
    %v804 = vrot.slane %v803, 1
    %v805 = vadd.f32 %v803, %v804
    %v806 = vsel %vm647, %v798, 0.0
    %v807 = vrot.slane %v806, 4
    %v808 = vadd.f32 %v806, %v807
    %v809 = vrot.slane %v808, 2
    %v810 = vadd.f32 %v808, %v809
    %v811 = vrot.slane %v810, 1
    %v812 = vadd.f32 %v810, %v811
    %v813 = vmul.f32 %v805, %v668
    %v814 = vmul.f32 %v812, %v668
    %815 = vrot.lane.b32.xlu0 %v747, 112
    %v816 = vpop.permute.xlu0 %815
    %817 = vrot.lane.b32.xlu0 %v749, 112
    %v818 = vpop.permute.xlu0 %817
    %v821 = vmul.f32 %v773, %v816
    %v822 = vmul.f32 %v788, %v818
    %v823 = vsel %vm647, %v821, 0.0
    %v824 = vrot.slane %v823, 4
    %v825 = vadd.f32 %v823, %v824
    %v826 = vrot.slane %v825, 2
    %v827 = vadd.f32 %v825, %v826
    %v828 = vrot.slane %v827, 1
    %v829 = vadd.f32 %v827, %v828
    %v830 = vsel %vm647, %v822, 0.0
    %v831 = vrot.slane %v830, 4
    %v832 = vadd.f32 %v830, %v831
    %v833 = vrot.slane %v832, 2
    %v834 = vadd.f32 %v832, %v833
    %v835 = vrot.slane %v834, 1
    %v836 = vadd.f32 %v834, %v835
    %v837 = vmul.f32 %v829, %v668
    %v838 = vmul.f32 %v836, %v668
    %v839 = vsel %vm581, %v711, 0.0
    %v840 = vrot.slane %v839, 4
    %v841 = vadd.f32 %v839, %v840
    %v842 = vrot.slane %v841, 2
    %v843 = vadd.f32 %v841, %v842
    %v844 = vrot.slane %v843, 1
    %v845 = vadd.f32 %v843, %v844
    %v846 = vsel %vm581, %v712, 0.0
    %v847 = vrot.slane %v846, 4
    %v848 = vadd.f32 %v846, %v847
    %v849 = vrot.slane %v848, 2
    %v850 = vadd.f32 %v848, %v849
    %v851 = vrot.slane %v850, 1
    %v852 = vadd.f32 %v850, %v851
    %v853 = vmul.f32 %v845, %v668
    %v854 = vmul.f32 %v852, %v668
    %v855 = vld [vmem:[%s2] sm:$0x3]
    %v856 = vmax.f32 %v855, 0.0
    %v857 = vld [vmem:[%s4] sm:$0x1]
    %v859 = vperm.slane %v857, 0
    %v861 = vmul.f32 %v856, %v859
    %v862 = vld [vmem:[%s5] sm:$0x1]
    %v864 = vperm.slane %v862, 0
    %v866 = vadd.f32 %v861, %v864
    %v867 = vpack.c.bf16 %v866, %v866
    %v868 = vld [vmem:[%s15] sm:$0xff]
    %v869 = vld [vmem:[%s15 + $0x8] sm:$0xff]
    %v870 = vld [vmem:[%s15 + $0x10] sm:$0xff]
    %v871 = vld [vmem:[%s15 + $0x18] sm:$0xff]
    %v872 = vld [vmem:[%s16] sm:$0x3]
    %v874 = vperm.slane %v872, 0
    %v875 = vperm.slane %v872, 1
    %v882 = vunpack.c.l.b16 %v868
    %v883 = vunpack.c.h.b16 %v868
    %v884 = vunpack.c.l.b16 %v869
    %v885 = vunpack.c.h.b16 %v869
    %v886 = vunpack.c.l.b16 %v870
    %v887 = vunpack.c.h.b16 %v870
    %v888 = vunpack.c.l.b16 %v871
    %v889 = vunpack.c.h.b16 %v871
    %v890 = vpack.c.b16 %v884, %v882
    %v891 = vpack.c.b16 %v885, %v883
    %v892 = vpack.c.b16 %v888, %v886
    %v893 = vpack.c.b16 %v889, %v887
    %v899 = vsel %vm581, %v867, 0
    %901 = vmatpush.bf16.msra.mxu0 0
    %902 = vmatpush.bf16.msra.mxu0 0
    %903 = vmatpush.bf16.msra.mxu0 0
    %904 = vmatpush.bf16.msra.mxu0 0
    %905 = vmatpush.bf16.msra.mxu0 0
    %906 = vmatpush.bf16.msra.mxu0 0
    %907 = vmatpush.bf16.msra.mxu0 %v892
    %908 = vmatpush.bf16.msra.mxu0 %v890
    %909 = vmatmul.bf16.gmra.mxu0 %v899
    %v910 = vpop.f32.mrf.mxu0
    %v911 = vadd.f32 %v874, %v910
    %v912 = vpop.f32.mrf.mxu0
    %913 = vdwg.mxu0
    %914 = vmatpush.bf16.msra.mxu0 0
    %915 = vmatpush.bf16.msra.mxu0 0
    %916 = vmatpush.bf16.msra.mxu0 0
    %917 = vmatpush.bf16.msra.mxu0 0
    %918 = vmatpush.bf16.msra.mxu0 0
    %919 = vmatpush.bf16.msra.mxu0 0
    %920 = vmatpush.bf16.msra.mxu0 %v893
    %921 = vmatpush.bf16.msra.mxu0 %v891
    %922 = vmatmul.bf16.gmra.mxu0 %v899
    %v923 = vpop.f32.mrf.mxu0
    %v924 = vadd.f32 %v875, %v923
    %v925 = vpop.f32.mrf.mxu0
    %926 = vdwg.mxu0
    %v927 = vxor.u32 %v911, 2147483648
    %v928 = vxor.u32 %v924, 2147483648
    %v929 = vmul.f32 %v927, 1.442695
    %v930 = vpow.pop %v929
    %v931 = vmul.f32 %v928, 1.442695
    %v932 = vpow.pop %v931
    %v933 = vadd.f32 %v930, 1.0
    %v934 = vadd.f32 %v932, 1.0
    %v935 = vrcp.pop %v933
    %v936 = vmul.f32 %v933, %v935
    %v937 = vsub.f32 1.0, %v936
    %v938 = vmul.f32 %v935, %v937
    %v939 = vadd.f32 %v935, %v938
    %vm940 = vweird.f32 %v933
    %vm941 = vweird.f32 %v935
    %vm942 = vmor %vm940, %vm941
    %v943 = vsel %vm942, %v935, %v939
    %v944 = vand.u32 2147483647, %v933
    %vm945 = vcmp.eq.f32.partialorder %v944, 8.507059e+37
    %v946 = vand.u32 %v933, 2147483648
    %v947 = vor.u32 1.1754944e-38, %v946
    %v948 = vsel %vm945, %v947, %v943
    %v949 = vmul.f32 1.0, %v948
    %951 = vrot.lane.b32.xlu0 %v949, 96
    %v952 = vpop.permute.xlu0 %951
    %954 = vrot.lane.b32.xlu0 %v949, 64
    %v955 = vpop.permute.xlu0 %954
    %957 = vrot.lane.b32.xlu0 %v949, 32
    %v958 = vpop.permute.xlu0 %957
    %v960 = vrot.slane %v955, 4
    %vm961 = vcmask 1047556
    %v962 = vsel %vm961, %v960, %v949
    %v964 = vunpack.c.l.s4 1983009808
    %v965 = vunpack.c.0.s8 %v964
    %v966 = vperm.slane %v962, %v965
    %v967 = vrot.slane %v958, 4
    %v968 = vsel %vm961, %v967, %v952
    %v970 = vunpack.c.l.s4 1983009808
    %v971 = vunpack.c.0.s8 %v970
    %v972 = vperm.slane %v968, %v971
    %v973 = vrot.slane %v972, 4
    %v974 = vsel %vm961, %v973, %v966
    %v976 = vunpack.c.l.s4 1934713408
    %v977 = vunpack.c.0.s8 %v976
    %v978 = vperm.slane %v974, %v977
    %v979 = vrcp.pop %v934
    %v980 = vmul.f32 %v934, %v979
    %v981 = vsub.f32 1.0, %v980
    %v982 = vmul.f32 %v979, %v981
    %v983 = vadd.f32 %v979, %v982
    %vm984 = vweird.f32 %v934
    %vm985 = vweird.f32 %v979
    %vm986 = vmor %vm984, %vm985
    %v987 = vsel %vm986, %v979, %v983
    %v988 = vand.u32 2147483647, %v934
    %vm989 = vcmp.eq.f32.partialorder %v988, 8.507059e+37
    %v990 = vand.u32 %v934, 2147483648
    %v991 = vor.u32 1.1754944e-38, %v990
    %v992 = vsel %vm989, %v991, %v987
    %v993 = vmul.f32 1.0, %v992
    %v995 = vunpack.c.l.s4 1934713408
    %v996 = vunpack.c.0.s8 %v995
    %v997 = vperm.slane %v993, %v996
    %v998 = vrot.slane %v997, 4
    %v999 = vsel %vm961, %v998, %v978
    %v1000 = vrot.slane %v978, 4
    %v1001 = vsel %vm961, %v997, %v1000
    %v1003 = vrot.slane %v866, 1
    %v1004 = vperm.slane %v866, 0
    %v1005 = vperm.slane %v1003, 0
    %v1008 = vmul.f32 %v999, %v1004
    %v1009 = vmul.f32 %v1001, %v1005
    %v1010 = vld [vmem:[%s17] sm:$0x1f]
    %v1011 = vmul.f32 %v1008, %v1010
    %v1012 = vmul.f32 %v1009, %v1010
    %vm1013 = vcmask 258048
    %v1014 = vsel %vm1013, %v1011, 0.0
    %1015 = vadd.xlane.f32.xlu0 %v1014
    %v1016 = vpop.xlane.xlu0 %1015
    %v1017 = vsel %vm1013, %v1012, 0.0
    %1018 = vadd.xlane.f32.xlu0 %v1017
    %v1019 = vpop.xlane.xlu0 %1018
    %v1020 = vld [vmem:[%s18] sm:$0x1f]
    %v1021 = vmul.f32 %v1008, %v1020
    %v1022 = vmul.f32 %v1009, %v1020
    %v1023 = vsel %vm1013, %v1021, 0.0
    %1024 = vadd.xlane.f32.xlu0 %v1023
    %v1025 = vpop.xlane.xlu0 %1024
    %v1026 = vsel %vm1013, %v1022, 0.0
    %1027 = vadd.xlane.f32.xlu0 %v1026
    %v1028 = vpop.xlane.xlu0 %1027
    %v1031 = vlaneseq
    %v1032 = vand.u32 %v1031, 127
    %v1033 = vperm.slane %v1016, %v1032
    %v1034 = vperm.slane %v1019, %v1032
    %vm1035 = vcmask 1041409
    %v1036 = vsel %vm1035, %v1034, %v1033
    %vm1038 = vcmask 39936
    %v1039 = vsel %vm1038, %v1036, 0.0
    %v1042 = vperm.slane %v1025, %v1032
    %v1043 = vperm.slane %v1028, %v1032
    %v1044 = vsel %vm1035, %v1043, %v1042
    %v1046 = vsel %vm1038, %v1044, 0.0
    %v1047 = vld [vmem:[%s3] sm:$0x3]
    %v1048 = vpack.c.bf16 %v1047, %v1047
    %v1049 = vld [vmem:[%s12] sm:$0xf]
    %v1050 = vld [vmem:[%s12 + $0x4] sm:$0xf]
    %v1051 = vld [vmem:[%s12 + $0x8] sm:$0xf]
    %v1052 = vld [vmem:[%s12 + $0xc] sm:$0xf]
    %v1053 = vld [vmem:[%s13] sm:$0x1]
    %v1055 = vperm.slane %v1053, 0
    %v1061 = vunpack.c.l.b16 %v1049
    %v1062 = vunpack.c.l.b16 %v1050
    %v1063 = vunpack.c.l.b16 %v1051
    %v1064 = vunpack.c.l.b16 %v1052
    %v1065 = vpack.c.b16 %v1062, %v1061
    %v1066 = vpack.c.b16 %v1064, %v1063
    %v1070 = vsel %vm581, %v1048, 0
    %1072 = vmatpush.bf16.msra.mxu0 0
    %1073 = vmatpush.bf16.msra.mxu0 0
    %1074 = vmatpush.bf16.msra.mxu0 0
    %1075 = vmatpush.bf16.msra.mxu0 0
    %1076 = vmatpush.bf16.msra.mxu0 0
    %1077 = vmatpush.bf16.msra.mxu0 0
    %1078 = vmatpush.bf16.msra.mxu0 %v1066
    %1079 = vmatpush.bf16.msra.mxu0 %v1065
    %1080 = vmatmul.bf16.gmra.mxu0 %v1070
    %v1081 = vpop.f32.mrf.mxu0
    %v1082 = vadd.f32 %v1055, %v1081
    %v1083 = vpop.f32.mrf.mxu0
    %1084 = vdwg.mxu0
    %v1085 = vxor.u32 %v1082, 2147483648
    %v1086 = vmul.f32 %v1085, 1.442695
    %v1087 = vpow.pop %v1086
    %v1088 = vadd.f32 %v1087, 1.0
    %v1089 = vrcp.pop %v1088
    %v1090 = vmul.f32 %v1088, %v1089
    %v1091 = vsub.f32 1.0, %v1090
    %v1092 = vmul.f32 %v1089, %v1091
    %v1093 = vadd.f32 %v1089, %v1092
    %vm1094 = vweird.f32 %v1088
    %vm1095 = vweird.f32 %v1089
    %vm1096 = vmor %vm1094, %vm1095
    %v1097 = vsel %vm1096, %v1089, %v1093
    %v1098 = vand.u32 2147483647, %v1088
    %vm1099 = vcmp.eq.f32.partialorder %v1098, 8.507059e+37
    %v1100 = vand.u32 %v1088, 2147483648
    %v1101 = vor.u32 1.1754944e-38, %v1100
    %v1102 = vsel %vm1099, %v1101, %v1097
    %v1103 = vmul.f32 1.0, %v1102
    %1105 = vrot.lane.b32.xlu0 %v1082, 120
    %v1106 = vpop.permute.xlu0 %1105
    %v1108 = vmul.f32 %v1103, %v1106
    %1109 = vrot.lane.b32.xlu0 %v1082, 112
    %v1110 = vpop.permute.xlu0 %1109
    %v1112 = vmul.f32 %v1103, %v1110
    %v1113 = vadd.f32 %v709, %v853
    %v1114 = vadd.f32 %v710, %v854
    %v1117 = vadd.f32 %v1113, %v866
    %v1118 = vadd.f32 %v1114, %v1003
    %v1120 = vrot.slane %v1047, 1
    %v1123 = vadd.f32 %v1117, %v1047
    %v1124 = vadd.f32 %v1118, %v1120
    %v1125 = vmul.f32 %v1123, 0.25
    %v1126 = vmul.f32 %v1124, 0.25
    %v1127 = vpack.c.bf16 %v1125, %v1125
    %v1128 = vpack.c.bf16 %v1126, %v1126
    %v1129 = vld [vmem:[%s14] sm:$0xf]
    %v1130 = vld [vmem:[%s14 + $0x4] sm:$0xf]
    %v1131 = vld [vmem:[%s14 + $0x8] sm:$0xf]
    %v1132 = vld [vmem:[%s14 + $0xc] sm:$0xf]
    %v1135 = vunpack.c.l.b16 %v1127
    %v1136 = vunpack.c.l.b16 %v1128
    %v1137 = vrot.slane %v1136, 7
    %v1138 = vsel %vm1035, %v1137, %v1135
    %v1139 = vpack.c.b16 %v1138, %v1138
    %v1144 = vunpack.c.l.b16 %v1129
    %v1145 = vunpack.c.l.b16 %v1130
    %v1146 = vunpack.c.l.b16 %v1131
    %v1147 = vunpack.c.l.b16 %v1132
    %v1148 = vpack.c.b16 %v1145, %v1144
    %v1149 = vpack.c.b16 %v1147, %v1146
    %v1153 = vsel %vm581, %v1139, 0
    %1155 = vmatpush.bf16.msra.mxu0 0
    %1156 = vmatpush.bf16.msra.mxu0 0
    %1157 = vmatpush.bf16.msra.mxu0 0
    %1158 = vmatpush.bf16.msra.mxu0 0
    %1159 = vmatpush.bf16.msra.mxu0 0
    %1160 = vmatpush.bf16.msra.mxu0 0
    %1161 = vmatpush.bf16.msra.mxu0 %v1149
    %1162 = vmatpush.bf16.msra.mxu0 %v1148
    %1163 = vmatmul.bf16.gmra.mxu0 %v1153
    %v1164 = vpop.f32.mrf.mxu0
    %v1165 = vadd.f32 0.0, %v1164
    %v1166 = vpop.f32.mrf.mxu0
    %1167 = vdwg.mxu0
    %v1168 = vadd.f32 %v669, %v813
    %v1169 = vadd.f32 %v670, %v814
    %v1171 = vrot.slane %v1039, 1
    %v1174 = vadd.f32 %v1168, %v1039
    %v1175 = vadd.f32 %v1169, %v1171
    %v1177 = vrot.slane %v1108, 1
    %v1180 = vadd.f32 %v1174, %v1108
    %v1181 = vadd.f32 %v1175, %v1177
    %v1182 = vmul.f32 %v1180, 0.25
    %v1183 = vmul.f32 %v1181, 0.25
    %v1186 = vrot.slane %v1183, 7
    %v1187 = vsel %vm1035, %v1186, %v1182
    %v1189 = vadd.f32 %v1165, %v1187
    %v1190 = vld [vmem:[%s19] sm:$0x1]
    %v1192 = vperm.slane %v1190, 0
    %v1194 = vadd.f32 %v1189, %v1192
    %v1195 = vxor.u32 %v1194, 2147483648
    %v1196 = vmul.f32 %v1195, 1.442695
    %v1197 = vpow.pop %v1196
    %v1198 = vadd.f32 %v1197, 1.0
    %v1199 = vrcp.pop %v1198
    %v1200 = vmul.f32 %v1198, %v1199
    %v1201 = vsub.f32 1.0, %v1200
    %v1202 = vmul.f32 %v1199, %v1201
    %v1203 = vadd.f32 %v1199, %v1202
    %vm1204 = vweird.f32 %v1198
    %vm1205 = vweird.f32 %v1199
    %vm1206 = vmor %vm1204, %vm1205
    %v1207 = vsel %vm1206, %v1199, %v1203
    %v1208 = vand.u32 2147483647, %v1198
    %vm1209 = vcmp.eq.f32.partialorder %v1208, 8.507059e+37
    %v1210 = vand.u32 %v1198, 2147483648
    %v1211 = vor.u32 1.1754944e-38, %v1210
    %v1212 = vsel %vm1209, %v1211, %v1207
    %v1213 = vmul.f32 1.0, %v1212
    %v1214 = vadd.f32 %v693, %v837
    %v1215 = vadd.f32 %v694, %v838
    %v1217 = vrot.slane %v1046, 1
    %v1220 = vadd.f32 %v1214, %v1046
    %v1221 = vadd.f32 %v1215, %v1217
    %v1223 = vrot.slane %v1112, 1
    %v1226 = vadd.f32 %v1220, %v1112
    %v1227 = vadd.f32 %v1221, %v1223
    %v1228 = vmul.f32 %v1226, 0.25
    %v1229 = vmul.f32 %v1227, 0.25
    %v1232 = vrot.slane %v1229, 7
    %v1233 = vsel %vm1035, %v1232, %v1228
    %1234 = vrot.lane.b32.xlu0 %v1233, 8
    %v1235 = vpop.permute.xlu0 %1234
    %v1237 = vadd.f32 %v1165, %v1235
    %v1238 = vld [vmem:[%s20] sm:$0x1]
    %v1240 = vperm.slane %v1238, 0
    %1241 = vrot.lane.b32.xlu0 %v1240, 8
    %v1242 = vpop.permute.xlu0 %1241
    %v1244 = vadd.f32 %v1237, %v1242
    %v1245 = vsel %vm647, %v1213, %v1244
    %vm1246 = vcmask 123904
    %1247 = vst.msk [vmem:[#allocation2] sm:$0x3] %vm1246, %v1245
    // Predicated region
    $region86: #{tpu_custom_call.1} parent=1 // pred_check
      _
    $region87: #{tpu_custom_call.1} parent=1 // pred_check_branch
      %1249 = sbr.rel (0) target = $region89
    $region88: #{tpu_custom_call.1} parent=1 // pred_region
      %1251 = vsyncadd [#allocation3], 0
      %s1253 = sshll.u32 [#allocation2], 4
      %s1254 = int_to_ptr.vmem [resolvable:$true] %s1253
      %s1255 = sshll.u32 %s21, 4
      %s1256 = int_to_ptr.hbm [resolvable:$true] %s1255
      %1258 = dma.vmem_to_hbm [thread:$0]  %s1254, 32, %s1256, [#allocation3]
    $region89: #{tpu_custom_call.1} parent=1 // pred_fallthru
      _
    // Predicated region
    $region90: #{tpu_custom_call.1} parent=1 // pred_check
      _
    $region91: #{tpu_custom_call.1} parent=1 // pred_check_branch
      %1260 = sbr.rel (0) target = $region93
    $region92: #{tpu_custom_call.1} parent=1 // pred_region
      %1262 = dma.done [#allocation3], 32
    $region93: #{tpu_custom_call.1} parent=1 // pred_fallthru
      _
    %1263 = vsyncpa [#allocation3], 1

</llo_original>
